<compile_context>
chip_gen: v7x
topology: tpu7x:2x2x1
jax: 0.10.0
libtpu: 0.0.40
codegen_flags: <defaults>
</compile_context>

<pallas_src>
import jax
import jax.numpy as jnp
from jax.experimental import pallas as pl
from jax.experimental.pallas import tpu as pltpu


HEAD_NAMES = ("b1_pool", "b2_pool", "b3_pool",
              "b21_pool", "b22_pool", "b31_pool", "b32_pool", "b33_pool")
HEAD_BRANCH = (0, 1, 2, 1, 1, 2, 2, 2)   # which branch (b1/b2/b3) feeds each head


def _head_segments(h, nseg):
    """H-segment indices covered by head h (nseg must be a multiple of 6)."""
    if h < 3:
        return range(nseg)                                # b1/b2/b3 global pool
    if h == 3:
        return range(0, nseg // 2)                        # b21: top half of H
    if h == 4:
        return range(nseg // 2, nseg)                     # b22: bottom half of H
    if h == 5:
        return range(0, nseg // 3)                        # b31: first third
    if h == 6:
        return range(nseg // 3, 2 * nseg // 3)            # b32: middle third
    return range(2 * nseg // 3, nseg)                     # b33: last third


# ----------------------------- Pallas kernel -----------------------------

def _mgn_fused_kernel(x_ref, sel_ref, wb_ref, wc_ref, m_ref, bn_ref, o_ref):
    bblk, nseg, seg_rows, c_in = x_ref.shape
    c_feat = wb_ref.shape[1]
    c3 = wc_ref.shape[1]
    n_out = o_ref.shape[1]

    # Packed BN / affine constants: one resident slab, static (free) row/col slices.
    sb, tb = bn_ref[0:1, :c_feat], bn_ref[1:2, :c_feat]        # backbone BN (folded)
    sc, tc = bn_ref[2:3, :c3], bn_ref[3:4, :c3]                # branch BN
    s8, t8 = bn_ref[4:5, :n_out], bn_ref[5:6, :n_out]          # 8x reduce-conv BN
    hs8, ht8 = bn_ref[6:7, :n_out], bn_ref[7:8, :n_out]        # 8x head BN-neck (eval)

    sel = sel_ref[...]                                          # (bblk, bblk*seg_rows) 0/1

    acc = jnp.zeros((bblk, n_out), jnp.float32)
    for s in range(nseg):                                       # static unroll, nseg small
        # Per-segment activation tile loaded inside the loop (bounds live VMEM/vregs).
        xs = x_ref[:, s].reshape(bblk * seg_rows, c_in)         # (rows, C_IN) f32

        # Backbone stand-in 1x1-conv (pixel normalization pre-folded into wb/tb).
        # bf16 MXU matmul, f32 accumulation + f32 epilogue.
        feat = jnp.dot(xs.astype(jnp.bfloat16), wb_ref[...],
                       preferred_element_type=jnp.float32)      # (rows, C_FEAT)
        feat = jnp.maximum(feat * sb + tb, 0.0)

        # b1/b2/b3 branch 1x1-convs fused into one lane-dense matmul (Cout = 3*C_BRANCH).
        y = jnp.dot(feat.astype(jnp.bfloat16), wc_ref[...],
                    preferred_element_type=jnp.float32)         # (rows, 3*CB)
        y = jnp.maximum(y * sc + tc, 0.0)

        # Per-(batch, segment) spatial sum routed through the MXU (0/1 selection matmul).
        seg_sum = jnp.dot(sel, y, preferred_element_type=jnp.float32)   # (bblk, 3*CB)

        # Project straight into the concatenated 8-head reduce-conv space.  Segment
        # membership, branch selection and the 1/S pooling mean are folded into m_ref[s].
        acc = acc + jnp.dot(seg_sum.astype(jnp.bfloat16), m_ref[s],
                            preferred_element_type=jnp.float32)         # (bblk, 8*IN_FEAT)

    yh = jnp.maximum(acc * s8 + t8, 0.0)        # reduce-conv BN + ReLU
    o_ref[...] = yh * hs8 + ht8                 # head BN-neck (eval) -> dense (BBLK,128) store


# ----------------------------- parameter setup (glue) -----------------------------

def _fold_bn(gamma, beta, rmean, rvar, eps=1e-5):
    scale = gamma / jnp.sqrt(rvar + eps)
    shift = beta - rmean * scale
    return scale, shift


def init_params(key, c_in, c_feat, c_branch, in_feat):
    keys = iter(jax.random.split(key, 96))

    def conv_bn(cin, cout):
        w = 0.1 * jax.random.normal(next(keys), (cin, cout), jnp.float32)
        gamma = 1.0 + 0.05 * jax.random.normal(next(keys), (cout,), jnp.float32)
        beta = 0.05 * jax.random.normal(next(keys), (cout,), jnp.float32)
        rmean = 0.05 * jax.random.normal(next(keys), (cout,), jnp.float32)
        rvar = jnp.ones((cout,), jnp.float32)
        scale, shift = _fold_bn(gamma, beta, rmean, rvar)
        return w, scale, shift

    def pool_module(cin, rdim):
        w, scale, shift = conv_bn(cin, rdim)
        hgamma = 1.0 + 0.05 * jax.random.normal(next(keys), (rdim,), jnp.float32)
        hbeta = jnp.zeros((rdim,), jnp.float32)          # BN-neck bias typically frozen
        hmean = 0.05 * jax.random.normal(next(keys), (rdim,), jnp.float32)
        hvar = jnp.ones((rdim,), jnp.float32)
        hscale, hshift = _fold_bn(hgamma, hbeta, hmean, hvar)
        return w, scale, shift, hscale, hshift

    params = {
        "pixel_mean": 0.5 * jnp.ones((c_in,), jnp.float32),
        "pixel_std": 0.25 * jnp.ones((c_in,), jnp.float32),
        # TODO(synk): the ResNet-50 backbone (conv1/bn1/relu/maxpool/layer1-3[0]) and the
        # Bottleneck stacks of res_conv4 / res_g_conv5 / res_p_conv5 are stood in by single
        # 1x1-conv + BN + ReLU stages; the strided 3x3 convs have no clean small Pallas form.
        "backbone": conv_bn(c_in, c_feat),
        "b1": conv_bn(c_feat, c_branch),
        "b2": conv_bn(c_feat, c_branch),
        "b3": conv_bn(c_feat, c_branch),
    }
    for name in HEAD_NAMES:
        params[name] = pool_module(c_branch, in_feat)
    return params


def prepare_fused(params, H, w_img, nseg=6):
    """Fold / concat / pack parameters into the layout the fused kernel consumes."""
    assert nseg % 6 == 0 and H % nseg == 0, "nseg must be a multiple of 6 dividing H"
    wb, sb, tb = params["backbone"]
    c_feat = wb.shape[1]
    cb = params["b1"][0].shape[1]
    in_feat = params["b1_pool"][0].shape[1]
    n_heads = len(HEAD_NAMES)
    n_out = n_heads * in_feat

    # Fold pixel normalization into the backbone conv + BN shift.
    inv_std = 1.0 / params["pixel_std"]
    wb_eff = wb * inv_std[:, None]
    tb_eff = tb - ((params["pixel_mean"] * inv_std) @ wb) * sb

    # Concatenate the three branch convs along Cout (one lane-dense MXU matmul).
    wc = jnp.concatenate([params[n][0] for n in ("b1", "b2", "b3")], axis=1)
    sc = jnp.concatenate([params[n][1] for n in ("b1", "b2", "b3")])
    tc = jnp.concatenate([params[n][2] for n in ("b1", "b2", "b3")])

    # Per-segment projection matrix: maps a segment's (3*CB) pooled sums directly into the
    # concatenated 8-head reduce-conv output, with segment membership and 1/S folded in.
    m3 = jnp.zeros((nseg, 3 * cb, n_out), jnp.float32)
    seg_rows = (H // nseg) * w_img
    for h, name in enumerate(HEAD_NAMES):
        segs = list(_head_segments(h, nseg))
        s_h = len(segs) * seg_rows                       # spatial size of this MGN part
        w_scaled = params[name][0] / s_h                 # fold pooling mean (1/S)
        br = HEAD_BRANCH[h]
        for s in segs:
            m3 = m3.at[s, br * cb:(br + 1) * cb,
                       h * in_feat:(h + 1) * in_feat].set(w_scaled)

    s8 = jnp.concatenate([params[n][1] for n in HEAD_NAMES])
    t8 = jnp.concatenate([params[n][2] for n in HEAD_NAMES])
    hs8 = jnp.concatenate([params[n][3] for n in HEAD_NAMES])
    ht8 = jnp.concatenate([params[n][4] for n in HEAD_NAMES])

    # Pack the eight per-channel BN/affine vectors into ONE (8, maxw) f32 slab
    # (one DMA / one VMEM buffer instead of eight sublane-padded (1,N) inputs).
    maxw = max(c_feat, 3 * cb, n_out)
    def _row(v):
        return jnp.pad(v, (0, maxw - v.shape[0]))[None, :]
    bn = jnp.concatenate([_row(sb), _row(tb_eff), _row(sc), _row(tc),
                          _row(s8), _row(t8), _row(hs8), _row(ht8)], axis=0)

    return {
        "wb": wb_eff.astype(jnp.bfloat16),     # bf16 MXU path, f32 accumulation
        "wc": wc.astype(jnp.bfloat16),
        "m3": m3.astype(jnp.bfloat16),         # resident in VMEM; bf16 halves footprint
        "bn": bn,                              # f32 epilogue constants
    }


# ----------------------------- MGN forward (inference path) -----------------------------

def mgn_inference(images, fused, bblk=8):
    B, H, w_img, C = images.shape
    nseg, _, n_out = fused["m3"].shape
    seg_rows = (H // nseg) * w_img

    # Batch block: >=8 gives an unmasked (8,128) output store and M=8 MXU matmuls;
    # keep the grid extent >=2 so both v7x TensorCores get work.
    bblk = min(bblk, B)
    while B % bblk:
        bblk -= 1

    x4 = images.reshape(B, nseg, seg_rows, C)            # contiguous H segments (pure view)

    # 0/1 per-batch pooling-selection matrix: spatial reduction runs on the MXU.
    sel = (jnp.arange(bblk * seg_rows, dtype=jnp.int32)[None, :] // seg_rows
           == jnp.arange(bblk, dtype=jnp.int32)[:, None]).astype(jnp.float32)

    def const_spec(a):
        # Full-array block with a constant index map -> DMA'd into VMEM once, never
        # re-streamed across grid steps.  (At production shapes, additionally single-
        # buffer these with pipeline_mode=pl.Buffered(1) to halve their VMEM footprint
        # for v7x's 64 MiB budget; at these sizes <0.7 MiB total it is irrelevant.)
        nd = a.ndim
        return pl.BlockSpec(a.shape, lambda i, _nd=nd: (0,) * _nd)

    out = pl.pallas_call(
        _mgn_fused_kernel,
        out_shape=jax.ShapeDtypeStruct((B, n_out), jnp.float32),
        grid_spec=pltpu.PrefetchScalarGridSpec(
            num_scalar_prefetch=0,
            grid=(B // bblk,),                            # batch-block axis only
            in_specs=[
                pl.BlockSpec((bblk, nseg, seg_rows, C), lambda i: (i, 0, 0, 0)),
                const_spec(sel),
                const_spec(fused["wb"]), const_spec(fused["wc"]),
                const_spec(fused["m3"]), const_spec(fused["bn"]),
            ],
            out_specs=pl.BlockSpec((bblk, n_out), lambda i: (i, 0)),
        ),
        compiler_params=pltpu.CompilerParams(
            dimension_semantics=("parallel",),            # megacore sharding on v7x
            vmem_limit_bytes=32 * 1024 * 1024,            # ample here; re-budget (<=56 MiB) on v7x
        ),
    )(x4, sel, fused["wb"], fused["wc"], fused["m3"], fused["bn"])

    return out


# ----------------------------- pure-JAX reference (verification only) -----------------------------

def mgn_reference(images, params):
    B, H, w_img, C = images.shape
    x = (images - params["pixel_mean"]) / params["pixel_std"]
    x2 = x.reshape(B * H * w_img, C)

    def conv_bn_relu(a, p):
        w, sc, sh = p
        return jnp.maximum(a @ w * sc + sh, 0.0)

    feat = conv_bn_relu(x2, params["backbone"])

    def branch(p):
        return conv_bn_relu(feat, p).reshape(B, H, w_img, -1)

    b1, b2, b3 = branch(params["b1"]), branch(params["b2"]), branch(params["b3"])

    def pool_head(f, p):
        w, sc, sh, hsc, hsh = p
        pooled = f.reshape(f.shape[0], -1, f.shape[-1]).mean(axis=1)
        y = jnp.maximum(pooled @ w * sc + sh, 0.0)
        return y * hsc + hsh

    b21, b22 = jnp.split(b2, 2, axis=1)                   # torch.chunk(b2_feat, 2, dim=2)
    b31, b32, b33 = jnp.split(b3, 3, axis=1)              # torch.chunk(b3_feat, 3, dim=2)
    outs = [pool_head(b1, params["b1_pool"]),
            pool_head(b2, params["b2_pool"]),
            pool_head(b3, params["b3_pool"]),
            pool_head(b21, params["b21_pool"]),
            pool_head(b22, params["b22_pool"]),
            pool_head(b31, params["b31_pool"]),
            pool_head(b32, params["b32_pool"]),
            pool_head(b33, params["b33_pool"])]
    return jnp.concatenate(outs, axis=1)


if __name__ == "__main__":
    # H divisible by 6 (MGN halves + thirds); B=16 -> 2 batch blocks of 8 (v7x megacore).
    B, C_IN, H, W_IMG = 16, 4, 12, 8
    C_FEAT, C_BRANCH, IN_FEAT = 32, 64, 16    # 3*C_BRANCH = 192, 8*IN_FEAT = 128 lanes

    key = jax.random.PRNGKey(0)
    k_img, k_par = jax.random.split(key)
    images = jax.random.uniform(k_img, (B, H, W_IMG, C_IN), jnp.float32)
    params = init_params(k_par, C_IN, C_FEAT, C_BRANCH, IN_FEAT)
    fused = prepare_fused(params, H, W_IMG, nseg=6)

    out = jax.jit(mgn_inference)(images, fused)
    out = jax.block_until_ready(out)

    assert out.shape == (B, 8 * IN_FEAT), out.shape
    assert bool(jnp.all(jnp.isfinite(out)))

    ref = mgn_reference(images, params)
    max_diff = float(jnp.max(jnp.abs(out - ref)))
    # bf16 MXU paths (backbone/branch/projection weights + activation casts) contribute
    # ~1e-3-level absolute error vs. the pure-f32 reference; documented per review.
    assert max_diff < 2e-2, f"max abs diff vs reference too large: {max_diff}"

    print("KERNEL_OK")
</pallas_src>

<mosaic_0001>
module attributes {stable_mosaic.version = 11 : i64} {
  func.func @_mgn_fused_kernel(%arg0: i32, %arg1: memref<8x6x16x4xf32, #tpu.memory_space<vmem>>, %arg2: memref<8x128xf32, #tpu.memory_space<vmem>>, %arg3: memref<4x32xbf16, #tpu.memory_space<vmem>>, %arg4: memref<32x192xbf16, #tpu.memory_space<vmem>>, %arg5: memref<6x192x128xbf16, #tpu.memory_space<vmem>>, %arg6: memref<8x192xf32, #tpu.memory_space<vmem>>, %arg7: memref<8x128xf32, #tpu.memory_space<vmem>>) attributes {dimension_semantics = [#tpu.dimension_semantics<parallel>], iteration_bounds = array<i64: 2>, scalar_prefetch = 0 : i64, scratch_operands = 0 : i64, tpu.core_type = #tpu.core_type<tc>, window_params = [{transform_indices = @transform_0, window_bounds = array<i64: 8, 6, 16, 4>}, {pipeline_mode = #tpu.pipeline_mode<synchronous>, transform_indices = @transform_1, window_bounds = array<i64: 8, 128>}, {pipeline_mode = #tpu.pipeline_mode<synchronous>, transform_indices = @transform_2, window_bounds = array<i64: 4, 32>}, {pipeline_mode = #tpu.pipeline_mode<synchronous>, transform_indices = @transform_3, window_bounds = array<i64: 32, 192>}, {pipeline_mode = #tpu.pipeline_mode<synchronous>, transform_indices = @transform_4, window_bounds = array<i64: 6, 192, 128>}, {pipeline_mode = #tpu.pipeline_mode<synchronous>, transform_indices = @transform_5, window_bounds = array<i64: 8, 192>}, {transform_indices = @transform_6, window_bounds = array<i64: 8, 128>}]} {
    %c0 = arith.constant 0 : index
    %c0_0 = arith.constant 0 : index
    %0 = vector.load %arg6[%c0, %c0_0] : memref<8x192xf32, #tpu.memory_space<vmem>>, vector<1x32xf32>
    %c1 = arith.constant 1 : index
    %c0_1 = arith.constant 0 : index
    %1 = vector.load %arg6[%c1, %c0_1] : memref<8x192xf32, #tpu.memory_space<vmem>>, vector<1x32xf32>
    %c2 = arith.constant 2 : index
    %c0_2 = arith.constant 0 : index
    %2 = vector.load %arg6[%c2, %c0_2] : memref<8x192xf32, #tpu.memory_space<vmem>>, vector<1x192xf32>
    %c3 = arith.constant 3 : index
    %c0_3 = arith.constant 0 : index
    %3 = vector.load %arg6[%c3, %c0_3] : memref<8x192xf32, #tpu.memory_space<vmem>>, vector<1x192xf32>
    %c4 = arith.constant 4 : index
    %c0_4 = arith.constant 0 : index
    %4 = vector.load %arg6[%c4, %c0_4] : memref<8x192xf32, #tpu.memory_space<vmem>>, vector<1x128xf32>
    %c5 = arith.constant 5 : index
    %c0_5 = arith.constant 0 : index
    %5 = vector.load %arg6[%c5, %c0_5] : memref<8x192xf32, #tpu.memory_space<vmem>>, vector<1x128xf32>
    %c6 = arith.constant 6 : index
    %c0_6 = arith.constant 0 : index
    %6 = vector.load %arg6[%c6, %c0_6] : memref<8x192xf32, #tpu.memory_space<vmem>>, vector<1x128xf32>
    %c7 = arith.constant 7 : index
    %c0_7 = arith.constant 0 : index
    %7 = vector.load %arg6[%c7, %c0_7] : memref<8x192xf32, #tpu.memory_space<vmem>>, vector<1x128xf32>
    %c0_8 = arith.constant 0 : index
    %c0_9 = arith.constant 0 : index
    %8 = vector.load %arg2[%c0_8, %c0_9] : memref<8x128xf32, #tpu.memory_space<vmem>>, vector<8x128xf32>
    %cst = arith.constant 0.000000e+00 : f32
    %9 = vector.broadcast %cst : f32 to vector<8x128xf32>
    %c0_10 = arith.constant 0 : index
    %c0_11 = arith.constant 0 : index
    %c0_12 = arith.constant 0 : index
    %c0_13 = arith.constant 0 : index
    %10 = vector.load %arg1[%c0_10, %c0_11, %c0_12, %c0_13] : memref<8x6x16x4xf32, #tpu.memory_space<vmem>>, vector<8x1x16x4xf32>
    %11 = vector.shape_cast %10 : vector<8x1x16x4xf32> to vector<8x16x4xf32>
    %12 = vector.shape_cast %11 : vector<8x16x4xf32> to vector<128x4xf32>
    %13 = arith.truncf %12 : vector<128x4xf32> to vector<128x4xbf16>
    %c0_14 = arith.constant 0 : index
    %c0_15 = arith.constant 0 : index
    %14 = vector.load %arg3[%c0_14, %c0_15] : memref<4x32xbf16, #tpu.memory_space<vmem>>, vector<4x32xbf16>
    %cst_16 = arith.constant dense<0.000000e+00> : vector<128x32xf32>
    %15 = tpu.matmul %13, %14, %cst_16 {dimension_numbers = #tpu.dot_dimension_numbers<[1], [0], [0], [1], [0, 0, 1, 1], [], []>} : vector<128x4xbf16>, vector<4x32xbf16>, vector<128x32xf32> -> vector<128x32xf32>
    %16 = vector.broadcast %0 : vector<1x32xf32> to vector<128x32xf32>
    %17 = arith.mulf %15, %16 : vector<128x32xf32>
    %18 = vector.broadcast %1 : vector<1x32xf32> to vector<128x32xf32>
    %19 = arith.addf %17, %18 : vector<128x32xf32>
    %cst_17 = arith.constant 0.000000e+00 : f32
    %20 = vector.broadcast %cst_17 : f32 to vector<128x32xf32>
    %21 = arith.maximumf %19, %20 : vector<128x32xf32>
    %22 = arith.truncf %21 : vector<128x32xf32> to vector<128x32xbf16>
    %c0_18 = arith.constant 0 : index
    %c0_19 = arith.constant 0 : index
    %23 = vector.load %arg4[%c0_18, %c0_19] : memref<32x192xbf16, #tpu.memory_space<vmem>>, vector<32x192xbf16>
    %cst_20 = arith.constant dense<0.000000e+00> : vector<128x192xf32>
    %24 = tpu.matmul %22, %23, %cst_20 {dimension_numbers = #tpu.dot_dimension_numbers<[1], [0], [0], [1], [0, 0, 1, 1], [], []>} : vector<128x32xbf16>, vector<32x192xbf16>, vector<128x192xf32> -> vector<128x192xf32>
    %25 = vector.broadcast %2 : vector<1x192xf32> to vector<128x192xf32>
    %26 = arith.mulf %24, %25 : vector<128x192xf32>
    %27 = vector.broadcast %3 : vector<1x192xf32> to vector<128x192xf32>
    %28 = arith.addf %26, %27 : vector<128x192xf32>
    %cst_21 = arith.constant 0.000000e+00 : f32
    %29 = vector.broadcast %cst_21 : f32 to vector<128x192xf32>
    %30 = arith.maximumf %28, %29 : vector<128x192xf32>
    %cst_22 = arith.constant dense<0.000000e+00> : vector<8x192xf32>
    %31 = tpu.matmul %8, %30, %cst_22 {dimension_numbers = #tpu.dot_dimension_numbers<[1], [0], [0], [1], [0, 0, 1, 1], [], []>} : vector<8x128xf32>, vector<128x192xf32>, vector<8x192xf32> -> vector<8x192xf32>
    %32 = arith.truncf %31 : vector<8x192xf32> to vector<8x192xbf16>
    %c0_23 = arith.constant 0 : index
    %c0_24 = arith.constant 0 : index
    %c0_25 = arith.constant 0 : index
    %33 = vector.load %arg5[%c0_23, %c0_24, %c0_25] : memref<6x192x128xbf16, #tpu.memory_space<vmem>>, vector<1x192x128xbf16>
    %34 = vector.shape_cast %33 : vector<1x192x128xbf16> to vector<192x128xbf16>
    %cst_26 = arith.constant dense<0.000000e+00> : vector<8x128xf32>
    %35 = tpu.matmul %32, %34, %cst_26 {dimension_numbers = #tpu.dot_dimension_numbers<[1], [0], [0], [1], [0, 0, 1, 1], [], []>} : vector<8x192xbf16>, vector<192x128xbf16>, vector<8x128xf32> -> vector<8x128xf32>
    %36 = arith.addf %9, %35 : vector<8x128xf32>
    %c0_27 = arith.constant 0 : index
    %c1_28 = arith.constant 1 : index
    %c0_29 = arith.constant 0 : index
    %c0_30 = arith.constant 0 : index
    %37 = vector.load %arg1[%c0_27, %c1_28, %c0_29, %c0_30] : memref<8x6x16x4xf32, #tpu.memory_space<vmem>>, vector<8x1x16x4xf32>
    %38 = vector.shape_cast %37 : vector<8x1x16x4xf32> to vector<8x16x4xf32>
    %39 = vector.shape_cast %38 : vector<8x16x4xf32> to vector<128x4xf32>
    %40 = arith.truncf %39 : vector<128x4xf32> to vector<128x4xbf16>
    %c0_31 = arith.constant 0 : index
    %c0_32 = arith.constant 0 : index
    %41 = vector.load %arg3[%c0_31, %c0_32] : memref<4x32xbf16, #tpu.memory_space<vmem>>, vector<4x32xbf16>
    %cst_33 = arith.constant dense<0.000000e+00> : vector<128x32xf32>
    %42 = tpu.matmul %40, %41, %cst_33 {dimension_numbers = #tpu.dot_dimension_numbers<[1], [0], [0], [1], [0, 0, 1, 1], [], []>} : vector<128x4xbf16>, vector<4x32xbf16>, vector<128x32xf32> -> vector<128x32xf32>
    %43 = vector.broadcast %0 : vector<1x32xf32> to vector<128x32xf32>
    %44 = arith.mulf %42, %43 : vector<128x32xf32>
    %45 = vector.broadcast %1 : vector<1x32xf32> to vector<128x32xf32>
    %46 = arith.addf %44, %45 : vector<128x32xf32>
    %cst_34 = arith.constant 0.000000e+00 : f32
    %47 = vector.broadcast %cst_34 : f32 to vector<128x32xf32>
    %48 = arith.maximumf %46, %47 : vector<128x32xf32>
    %49 = arith.truncf %48 : vector<128x32xf32> to vector<128x32xbf16>
    %c0_35 = arith.constant 0 : index
    %c0_36 = arith.constant 0 : index
    %50 = vector.load %arg4[%c0_35, %c0_36] : memref<32x192xbf16, #tpu.memory_space<vmem>>, vector<32x192xbf16>
    %cst_37 = arith.constant dense<0.000000e+00> : vector<128x192xf32>
    %51 = tpu.matmul %49, %50, %cst_37 {dimension_numbers = #tpu.dot_dimension_numbers<[1], [0], [0], [1], [0, 0, 1, 1], [], []>} : vector<128x32xbf16>, vector<32x192xbf16>, vector<128x192xf32> -> vector<128x192xf32>
    %52 = vector.broadcast %2 : vector<1x192xf32> to vector<128x192xf32>
    %53 = arith.mulf %51, %52 : vector<128x192xf32>
    %54 = vector.broadcast %3 : vector<1x192xf32> to vector<128x192xf32>
    %55 = arith.addf %53, %54 : vector<128x192xf32>
    %cst_38 = arith.constant 0.000000e+00 : f32
    %56 = vector.broadcast %cst_38 : f32 to vector<128x192xf32>
    %57 = arith.maximumf %55, %56 : vector<128x192xf32>
    %cst_39 = arith.constant dense<0.000000e+00> : vector<8x192xf32>
    %58 = tpu.matmul %8, %57, %cst_39 {dimension_numbers = #tpu.dot_dimension_numbers<[1], [0], [0], [1], [0, 0, 1, 1], [], []>} : vector<8x128xf32>, vector<128x192xf32>, vector<8x192xf32> -> vector<8x192xf32>
    %59 = arith.truncf %58 : vector<8x192xf32> to vector<8x192xbf16>
    %c1_40 = arith.constant 1 : index
    %c0_41 = arith.constant 0 : index
    %c0_42 = arith.constant 0 : index
    %60 = vector.load %arg5[%c1_40, %c0_41, %c0_42] : memref<6x192x128xbf16, #tpu.memory_space<vmem>>, vector<1x192x128xbf16>
    %61 = vector.shape_cast %60 : vector<1x192x128xbf16> to vector<192x128xbf16>
    %cst_43 = arith.constant dense<0.000000e+00> : vector<8x128xf32>
    %62 = tpu.matmul %59, %61, %cst_43 {dimension_numbers = #tpu.dot_dimension_numbers<[1], [0], [0], [1], [0, 0, 1, 1], [], []>} : vector<8x192xbf16>, vector<192x128xbf16>, vector<8x128xf32> -> vector<8x128xf32>
    %63 = arith.addf %36, %62 : vector<8x128xf32>
    %c0_44 = arith.constant 0 : index
    %c2_45 = arith.constant 2 : index
    %c0_46 = arith.constant 0 : index
    %c0_47 = arith.constant 0 : index
    %64 = vector.load %arg1[%c0_44, %c2_45, %c0_46, %c0_47] : memref<8x6x16x4xf32, #tpu.memory_space<vmem>>, vector<8x1x16x4xf32>
    %65 = vector.shape_cast %64 : vector<8x1x16x4xf32> to vector<8x16x4xf32>
    %66 = vector.shape_cast %65 : vector<8x16x4xf32> to vector<128x4xf32>
    %67 = arith.truncf %66 : vector<128x4xf32> to vector<128x4xbf16>
    %c0_48 = arith.constant 0 : index
    %c0_49 = arith.constant 0 : index
    %68 = vector.load %arg3[%c0_48, %c0_49] : memref<4x32xbf16, #tpu.memory_space<vmem>>, vector<4x32xbf16>
    %cst_50 = arith.constant dense<0.000000e+00> : vector<128x32xf32>
    %69 = tpu.matmul %67, %68, %cst_50 {dimension_numbers = #tpu.dot_dimension_numbers<[1], [0], [0], [1], [0, 0, 1, 1], [], []>} : vector<128x4xbf16>, vector<4x32xbf16>, vector<128x32xf32> -> vector<128x32xf32>
    %70 = vector.broadcast %0 : vector<1x32xf32> to vector<128x32xf32>
    %71 = arith.mulf %69, %70 : vector<128x32xf32>
    %72 = vector.broadcast %1 : vector<1x32xf32> to vector<128x32xf32>
    %73 = arith.addf %71, %72 : vector<128x32xf32>
    %cst_51 = arith.constant 0.000000e+00 : f32
    %74 = vector.broadcast %cst_51 : f32 to vector<128x32xf32>
    %75 = arith.maximumf %73, %74 : vector<128x32xf32>
    %76 = arith.truncf %75 : vector<128x32xf32> to vector<128x32xbf16>
    %c0_52 = arith.constant 0 : index
    %c0_53 = arith.constant 0 : index
    %77 = vector.load %arg4[%c0_52, %c0_53] : memref<32x192xbf16, #tpu.memory_space<vmem>>, vector<32x192xbf16>
    %cst_54 = arith.constant dense<0.000000e+00> : vector<128x192xf32>
    %78 = tpu.matmul %76, %77, %cst_54 {dimension_numbers = #tpu.dot_dimension_numbers<[1], [0], [0], [1], [0, 0, 1, 1], [], []>} : vector<128x32xbf16>, vector<32x192xbf16>, vector<128x192xf32> -> vector<128x192xf32>
    %79 = vector.broadcast %2 : vector<1x192xf32> to vector<128x192xf32>
    %80 = arith.mulf %78, %79 : vector<128x192xf32>
    %81 = vector.broadcast %3 : vector<1x192xf32> to vector<128x192xf32>
    %82 = arith.addf %80, %81 : vector<128x192xf32>
    %cst_55 = arith.constant 0.000000e+00 : f32
    %83 = vector.broadcast %cst_55 : f32 to vector<128x192xf32>
    %84 = arith.maximumf %82, %83 : vector<128x192xf32>
    %cst_56 = arith.constant dense<0.000000e+00> : vector<8x192xf32>
    %85 = tpu.matmul %8, %84, %cst_56 {dimension_numbers = #tpu.dot_dimension_numbers<[1], [0], [0], [1], [0, 0, 1, 1], [], []>} : vector<8x128xf32>, vector<128x192xf32>, vector<8x192xf32> -> vector<8x192xf32>
    %86 = arith.truncf %85 : vector<8x192xf32> to vector<8x192xbf16>
    %c2_57 = arith.constant 2 : index
    %c0_58 = arith.constant 0 : index
    %c0_59 = arith.constant 0 : index
    %87 = vector.load %arg5[%c2_57, %c0_58, %c0_59] : memref<6x192x128xbf16, #tpu.memory_space<vmem>>, vector<1x192x128xbf16>
    %88 = vector.shape_cast %87 : vector<1x192x128xbf16> to vector<192x128xbf16>
    %cst_60 = arith.constant dense<0.000000e+00> : vector<8x128xf32>
    %89 = tpu.matmul %86, %88, %cst_60 {dimension_numbers = #tpu.dot_dimension_numbers<[1], [0], [0], [1], [0, 0, 1, 1], [], []>} : vector<8x192xbf16>, vector<192x128xbf16>, vector<8x128xf32> -> vector<8x128xf32>
    %90 = arith.addf %63, %89 : vector<8x128xf32>
    %c0_61 = arith.constant 0 : index
    %c3_62 = arith.constant 3 : index
    %c0_63 = arith.constant 0 : index
    %c0_64 = arith.constant 0 : index
    %91 = vector.load %arg1[%c0_61, %c3_62, %c0_63, %c0_64] : memref<8x6x16x4xf32, #tpu.memory_space<vmem>>, vector<8x1x16x4xf32>
    %92 = vector.shape_cast %91 : vector<8x1x16x4xf32> to vector<8x16x4xf32>
    %93 = vector.shape_cast %92 : vector<8x16x4xf32> to vector<128x4xf32>
    %94 = arith.truncf %93 : vector<128x4xf32> to vector<128x4xbf16>
    %c0_65 = arith.constant 0 : index
    %c0_66 = arith.constant 0 : index
    %95 = vector.load %arg3[%c0_65, %c0_66] : memref<4x32xbf16, #tpu.memory_space<vmem>>, vector<4x32xbf16>
    %cst_67 = arith.constant dense<0.000000e+00> : vector<128x32xf32>
    %96 = tpu.matmul %94, %95, %cst_67 {dimension_numbers = #tpu.dot_dimension_numbers<[1], [0], [0], [1], [0, 0, 1, 1], [], []>} : vector<128x4xbf16>, vector<4x32xbf16>, vector<128x32xf32> -> vector<128x32xf32>
    %97 = vector.broadcast %0 : vector<1x32xf32> to vector<128x32xf32>
    %98 = arith.mulf %96, %97 : vector<128x32xf32>
    %99 = vector.broadcast %1 : vector<1x32xf32> to vector<128x32xf32>
    %100 = arith.addf %98, %99 : vector<128x32xf32>
    %cst_68 = arith.constant 0.000000e+00 : f32
    %101 = vector.broadcast %cst_68 : f32 to vector<128x32xf32>
    %102 = arith.maximumf %100, %101 : vector<128x32xf32>
    %103 = arith.truncf %102 : vector<128x32xf32> to vector<128x32xbf16>
    %c0_69 = arith.constant 0 : index
    %c0_70 = arith.constant 0 : index
    %104 = vector.load %arg4[%c0_69, %c0_70] : memref<32x192xbf16, #tpu.memory_space<vmem>>, vector<32x192xbf16>
    %cst_71 = arith.constant dense<0.000000e+00> : vector<128x192xf32>
    %105 = tpu.matmul %103, %104, %cst_71 {dimension_numbers = #tpu.dot_dimension_numbers<[1], [0], [0], [1], [0, 0, 1, 1], [], []>} : vector<128x32xbf16>, vector<32x192xbf16>, vector<128x192xf32> -> vector<128x192xf32>
    %106 = vector.broadcast %2 : vector<1x192xf32> to vector<128x192xf32>
    %107 = arith.mulf %105, %106 : vector<128x192xf32>
    %108 = vector.broadcast %3 : vector<1x192xf32> to vector<128x192xf32>
    %109 = arith.addf %107, %108 : vector<128x192xf32>
    %cst_72 = arith.constant 0.000000e+00 : f32
    %110 = vector.broadcast %cst_72 : f32 to vector<128x192xf32>
    %111 = arith.maximumf %109, %110 : vector<128x192xf32>
    %cst_73 = arith.constant dense<0.000000e+00> : vector<8x192xf32>
    %112 = tpu.matmul %8, %111, %cst_73 {dimension_numbers = #tpu.dot_dimension_numbers<[1], [0], [0], [1], [0, 0, 1, 1], [], []>} : vector<8x128xf32>, vector<128x192xf32>, vector<8x192xf32> -> vector<8x192xf32>
    %113 = arith.truncf %112 : vector<8x192xf32> to vector<8x192xbf16>
    %c3_74 = arith.constant 3 : index
    %c0_75 = arith.constant 0 : index
    %c0_76 = arith.constant 0 : index
    %114 = vector.load %arg5[%c3_74, %c0_75, %c0_76] : memref<6x192x128xbf16, #tpu.memory_space<vmem>>, vector<1x192x128xbf16>
    %115 = vector.shape_cast %114 : vector<1x192x128xbf16> to vector<192x128xbf16>
    %cst_77 = arith.constant dense<0.000000e+00> : vector<8x128xf32>
    %116 = tpu.matmul %113, %115, %cst_77 {dimension_numbers = #tpu.dot_dimension_numbers<[1], [0], [0], [1], [0, 0, 1, 1], [], []>} : vector<8x192xbf16>, vector<192x128xbf16>, vector<8x128xf32> -> vector<8x128xf32>
    %117 = arith.addf %90, %116 : vector<8x128xf32>
    %c0_78 = arith.constant 0 : index
    %c4_79 = arith.constant 4 : index
    %c0_80 = arith.constant 0 : index
    %c0_81 = arith.constant 0 : index
    %118 = vector.load %arg1[%c0_78, %c4_79, %c0_80, %c0_81] : memref<8x6x16x4xf32, #tpu.memory_space<vmem>>, vector<8x1x16x4xf32>
    %119 = vector.shape_cast %118 : vector<8x1x16x4xf32> to vector<8x16x4xf32>
    %120 = vector.shape_cast %119 : vector<8x16x4xf32> to vector<128x4xf32>
    %121 = arith.truncf %120 : vector<128x4xf32> to vector<128x4xbf16>
    %c0_82 = arith.constant 0 : index
    %c0_83 = arith.constant 0 : index
    %122 = vector.load %arg3[%c0_82, %c0_83] : memref<4x32xbf16, #tpu.memory_space<vmem>>, vector<4x32xbf16>
    %cst_84 = arith.constant dense<0.000000e+00> : vector<128x32xf32>
    %123 = tpu.matmul %121, %122, %cst_84 {dimension_numbers = #tpu.dot_dimension_numbers<[1], [0], [0], [1], [0, 0, 1, 1], [], []>} : vector<128x4xbf16>, vector<4x32xbf16>, vector<128x32xf32> -> vector<128x32xf32>
    %124 = vector.broadcast %0 : vector<1x32xf32> to vector<128x32xf32>
    %125 = arith.mulf %123, %124 : vector<128x32xf32>
    %126 = vector.broadcast %1 : vector<1x32xf32> to vector<128x32xf32>
    %127 = arith.addf %125, %126 : vector<128x32xf32>
    %cst_85 = arith.constant 0.000000e+00 : f32
    %128 = vector.broadcast %cst_85 : f32 to vector<128x32xf32>
    %129 = arith.maximumf %127, %128 : vector<128x32xf32>
    %130 = arith.truncf %129 : vector<128x32xf32> to vector<128x32xbf16>
    %c0_86 = arith.constant 0 : index
    %c0_87 = arith.constant 0 : index
    %131 = vector.load %arg4[%c0_86, %c0_87] : memref<32x192xbf16, #tpu.memory_space<vmem>>, vector<32x192xbf16>
    %cst_88 = arith.constant dense<0.000000e+00> : vector<128x192xf32>
    %132 = tpu.matmul %130, %131, %cst_88 {dimension_numbers = #tpu.dot_dimension_numbers<[1], [0], [0], [1], [0, 0, 1, 1], [], []>} : vector<128x32xbf16>, vector<32x192xbf16>, vector<128x192xf32> -> vector<128x192xf32>
    %133 = vector.broadcast %2 : vector<1x192xf32> to vector<128x192xf32>
    %134 = arith.mulf %132, %133 : vector<128x192xf32>
    %135 = vector.broadcast %3 : vector<1x192xf32> to vector<128x192xf32>
    %136 = arith.addf %134, %135 : vector<128x192xf32>
    %cst_89 = arith.constant 0.000000e+00 : f32
    %137 = vector.broadcast %cst_89 : f32 to vector<128x192xf32>
    %138 = arith.maximumf %136, %137 : vector<128x192xf32>
    %cst_90 = arith.constant dense<0.000000e+00> : vector<8x192xf32>
    %139 = tpu.matmul %8, %138, %cst_90 {dimension_numbers = #tpu.dot_dimension_numbers<[1], [0], [0], [1], [0, 0, 1, 1], [], []>} : vector<8x128xf32>, vector<128x192xf32>, vector<8x192xf32> -> vector<8x192xf32>
    %140 = arith.truncf %139 : vector<8x192xf32> to vector<8x192xbf16>
    %c4_91 = arith.constant 4 : index
    %c0_92 = arith.constant 0 : index
    %c0_93 = arith.constant 0 : index
    %141 = vector.load %arg5[%c4_91, %c0_92, %c0_93] : memref<6x192x128xbf16, #tpu.memory_space<vmem>>, vector<1x192x128xbf16>
    %142 = vector.shape_cast %141 : vector<1x192x128xbf16> to vector<192x128xbf16>
    %cst_94 = arith.constant dense<0.000000e+00> : vector<8x128xf32>
    %143 = tpu.matmul %140, %142, %cst_94 {dimension_numbers = #tpu.dot_dimension_numbers<[1], [0], [0], [1], [0, 0, 1, 1], [], []>} : vector<8x192xbf16>, vector<192x128xbf16>, vector<8x128xf32> -> vector<8x128xf32>
    %144 = arith.addf %117, %143 : vector<8x128xf32>
    %c0_95 = arith.constant 0 : index
    %c5_96 = arith.constant 5 : index
    %c0_97 = arith.constant 0 : index
    %c0_98 = arith.constant 0 : index
    %145 = vector.load %arg1[%c0_95, %c5_96, %c0_97, %c0_98] : memref<8x6x16x4xf32, #tpu.memory_space<vmem>>, vector<8x1x16x4xf32>
    %146 = vector.shape_cast %145 : vector<8x1x16x4xf32> to vector<8x16x4xf32>
    %147 = vector.shape_cast %146 : vector<8x16x4xf32> to vector<128x4xf32>
    %148 = arith.truncf %147 : vector<128x4xf32> to vector<128x4xbf16>
    %c0_99 = arith.constant 0 : index
    %c0_100 = arith.constant 0 : index
    %149 = vector.load %arg3[%c0_99, %c0_100] : memref<4x32xbf16, #tpu.memory_space<vmem>>, vector<4x32xbf16>
    %cst_101 = arith.constant dense<0.000000e+00> : vector<128x32xf32>
    %150 = tpu.matmul %148, %149, %cst_101 {dimension_numbers = #tpu.dot_dimension_numbers<[1], [0], [0], [1], [0, 0, 1, 1], [], []>} : vector<128x4xbf16>, vector<4x32xbf16>, vector<128x32xf32> -> vector<128x32xf32>
    %151 = vector.broadcast %0 : vector<1x32xf32> to vector<128x32xf32>
    %152 = arith.mulf %150, %151 : vector<128x32xf32>
    %153 = vector.broadcast %1 : vector<1x32xf32> to vector<128x32xf32>
    %154 = arith.addf %152, %153 : vector<128x32xf32>
    %cst_102 = arith.constant 0.000000e+00 : f32
    %155 = vector.broadcast %cst_102 : f32 to vector<128x32xf32>
    %156 = arith.maximumf %154, %155 : vector<128x32xf32>
    %157 = arith.truncf %156 : vector<128x32xf32> to vector<128x32xbf16>
    %c0_103 = arith.constant 0 : index
    %c0_104 = arith.constant 0 : index
    %158 = vector.load %arg4[%c0_103, %c0_104] : memref<32x192xbf16, #tpu.memory_space<vmem>>, vector<32x192xbf16>
    %cst_105 = arith.constant dense<0.000000e+00> : vector<128x192xf32>
    %159 = tpu.matmul %157, %158, %cst_105 {dimension_numbers = #tpu.dot_dimension_numbers<[1], [0], [0], [1], [0, 0, 1, 1], [], []>} : vector<128x32xbf16>, vector<32x192xbf16>, vector<128x192xf32> -> vector<128x192xf32>
    %160 = vector.broadcast %2 : vector<1x192xf32> to vector<128x192xf32>
    %161 = arith.mulf %159, %160 : vector<128x192xf32>
    %162 = vector.broadcast %3 : vector<1x192xf32> to vector<128x192xf32>
    %163 = arith.addf %161, %162 : vector<128x192xf32>
    %cst_106 = arith.constant 0.000000e+00 : f32
    %164 = vector.broadcast %cst_106 : f32 to vector<128x192xf32>
    %165 = arith.maximumf %163, %164 : vector<128x192xf32>
    %cst_107 = arith.constant dense<0.000000e+00> : vector<8x192xf32>
    %166 = tpu.matmul %8, %165, %cst_107 {dimension_numbers = #tpu.dot_dimension_numbers<[1], [0], [0], [1], [0, 0, 1, 1], [], []>} : vector<8x128xf32>, vector<128x192xf32>, vector<8x192xf32> -> vector<8x192xf32>
    %167 = arith.truncf %166 : vector<8x192xf32> to vector<8x192xbf16>
    %c5_108 = arith.constant 5 : index
    %c0_109 = arith.constant 0 : index
    %c0_110 = arith.constant 0 : index
    %168 = vector.load %arg5[%c5_108, %c0_109, %c0_110] : memref<6x192x128xbf16, #tpu.memory_space<vmem>>, vector<1x192x128xbf16>
    %169 = vector.shape_cast %168 : vector<1x192x128xbf16> to vector<192x128xbf16>
    %cst_111 = arith.constant dense<0.000000e+00> : vector<8x128xf32>
    %170 = tpu.matmul %167, %169, %cst_111 {dimension_numbers = #tpu.dot_dimension_numbers<[1], [0], [0], [1], [0, 0, 1, 1], [], []>} : vector<8x192xbf16>, vector<192x128xbf16>, vector<8x128xf32> -> vector<8x128xf32>
    %171 = arith.addf %144, %170 : vector<8x128xf32>
    %172 = vector.broadcast %4 : vector<1x128xf32> to vector<8x128xf32>
    %173 = arith.mulf %171, %172 : vector<8x128xf32>
    %174 = vector.broadcast %5 : vector<1x128xf32> to vector<8x128xf32>
    %175 = arith.addf %173, %174 : vector<8x128xf32>
    %cst_112 = arith.constant 0.000000e+00 : f32
    %176 = vector.broadcast %cst_112 : f32 to vector<8x128xf32>
    %177 = arith.maximumf %175, %176 : vector<8x128xf32>
    %178 = vector.broadcast %6 : vector<1x128xf32> to vector<8x128xf32>
    %179 = arith.mulf %177, %178 : vector<8x128xf32>
    %180 = vector.broadcast %7 : vector<1x128xf32> to vector<8x128xf32>
    %181 = arith.addf %179, %180 : vector<8x128xf32>
    %c0_113 = arith.constant 0 : index
    %c0_114 = arith.constant 0 : index
    %182 = vector.load %arg7[%c0_113, %c0_114] : memref<8x128xf32, #tpu.memory_space<vmem>>, vector<8x128xf32>
    tpu.vector_store %arg7[%c0_113, %c0_114], %181 {strides = array<i32>} : memref<8x128xf32, #tpu.memory_space<vmem>>, vector<8x128xf32>,
    return
  }
  func.func @transform_0(%arg0: i32) -> (i32, i32, i32, i32) {
    %c0_i32 = arith.constant 0 : i32
    %c0_i32_0 = arith.constant 0 : i32
    %c0_i32_1 = arith.constant 0 : i32
    %c0_i32_2 = arith.constant 0 : i32
    return %arg0, %c0_i32, %c0_i32_0, %c0_i32_1 : i32, i32, i32, i32
  }
  func.func @transform_1(%arg0: i32) -> (i32, i32) {
    %c0_i32 = arith.constant 0 : i32
    %c0_i32_0 = arith.constant 0 : i32
    %c0_i32_1 = arith.constant 0 : i32
    return %c0_i32, %c0_i32_0 : i32, i32
  }
  func.func @transform_2(%arg0: i32) -> (i32, i32) {
    %c0_i32 = arith.constant 0 : i32
    %c0_i32_0 = arith.constant 0 : i32
    %c0_i32_1 = arith.constant 0 : i32
    return %c0_i32, %c0_i32_0 : i32, i32
  }
  func.func @transform_3(%arg0: i32) -> (i32, i32) {
    %c0_i32 = arith.constant 0 : i32
    %c0_i32_0 = arith.constant 0 : i32
    %c0_i32_1 = arith.constant 0 : i32
    return %c0_i32, %c0_i32_0 : i32, i32
  }
  func.func @transform_4(%arg0: i32) -> (i32, i32, i32) {
    %c0_i32 = arith.constant 0 : i32
    %c0_i32_0 = arith.constant 0 : i32
    %c0_i32_1 = arith.constant 0 : i32
    %c0_i32_2 = arith.constant 0 : i32
    return %c0_i32, %c0_i32_0, %c0_i32_1 : i32, i32, i32
  }
  func.func @transform_5(%arg0: i32) -> (i32, i32) {
    %c0_i32 = arith.constant 0 : i32
    %c0_i32_0 = arith.constant 0 : i32
    %c0_i32_1 = arith.constant 0 : i32
    return %c0_i32, %c0_i32_0 : i32, i32
  }
  func.func @transform_6(%arg0: i32) -> (i32, i32) {
    %c0_i32 = arith.constant 0 : i32
    %c0_i32_0 = arith.constant 0 : i32
    return %arg0, %c0_i32 : i32, i32
  }
}

</mosaic_0001>

<llo_original>
// kernel: mgn_inference.1
$region0: #{mgn_inference.1}
  #allocation0 [shape = 'u32[]', space=smem, size = 0x4, offset = 0x4, fixed_abs, tag = 'smem constant byte address 0x4 - core index']
  #allocation1 [shape = 'u32[144,128]{1,0:T(1,128)}', space=vmem, size = 0x12000, scoped, tag = 'internal scratch']
  %s0 = inlined_call_operand.vmem [shape: f32[16,6,16,4], index: 0, kind: input, shape index: {}]
  %s1 = inlined_call_operand.vmem [shape: f32[8,128], index: 1, kind: input, shape index: {}]
  %s2 = inlined_call_operand.vmem [shape: bf16[4,32], index: 2, kind: input, shape index: {}]
  %s3 = inlined_call_operand.vmem [shape: bf16[32,192], index: 3, kind: input, shape index: {}]
  %s4 = inlined_call_operand.vmem [shape: bf16[6,192,128], index: 4, kind: input, shape index: {}]
  %s5 = inlined_call_operand.vmem [shape: f32[8,192], index: 5, kind: input, shape index: {}]
  %s6 = inlined_call_operand.hbm [shape: f32[16,128], index: 6, kind: output, shape index: {}]
  %s7 = sld [smem:[#allocation0]]
  $region57: #{mgn_inference.1} parent=0
    _
  %s9 = ssub.s32 1, %s7
  %s10 = scalar_select 0, %s9, %s7
  $region1: #{mgn_inference.1} parent=0
    #allocation2 [shape = 'u8[8192]{0}', space=vmem, size = 0x2000, scoped, tag = 'output window, operand 0']
    #allocation3 [shape = 's32[2]{0}', space=sflag, size = 0x8, scoped, tag = 'scoped memory for mgn_inference.1']
    %11 = vsyncpa [#allocation3], 0
    %s12 = scalar_lea.sflag [#allocation3], 1
    %13 = vsyncpa %s12, 0
    loop: start=0, step=1, limit=4
    $region2: #{mgn_inference.1} parent=1 // loop_pre_header
      _
    $region3: #{mgn_inference.1} parent=1 // loop_header
      %s15 = sphi 0, %s19
      %p16 = scmp.ge.s32.totalorder %s15, 4
      %s25 = sphi 0, %s27
      %s28 = sphi 0, %s25
      %s29 = sphi 0, %s28
      %s45 = sphi 0, %s29
      %s49 = sphi 0, %s49
      %s51 = sphi 0, %s49
      %s52 = sphi 0, %s51
      %s66 = sphi 0, %s52
      %s70 = sphi 0, %s70
      %s72 = sphi 0, %s70
      %s73 = sphi 0, %s72
      %s87 = sphi 0, %s73
      %s91 = sphi 0, %s91
      %s93 = sphi 0, %s91
      %s94 = sphi 0, %s93
      %s108 = sphi 0, %s94
      %s112 = sphi 0, %s112
      %s114 = sphi 0, %s112
      %s115 = sphi 0, %s114
      %s129 = sphi 0, %s115
      %s133 = sphi 0, %s133
      %s135 = sphi 0, %s133
      %s136 = sphi 0, %s135
      %s150 = sphi 0, %s136
      %s156 = sphi 0, %s158
      %s159 = sphi 0, %s156
      %s160 = sphi 0, %s159
      %s176 = sphi 0, %s160
    $region4: #{mgn_inference.1} parent=1 // loop_header_branch
      %18 = sbr.rel (%p16) target = $region8
    $region5: #{mgn_inference.1} parent=1 // loop_body
      %s20 = ssub.s32 %s15, 1
      %s21 = ssub.s32 %s15, 2
      %s22 = sadd.s32 %s15, 1
      %s23 = ssub.s32 %s15, %s22
      %p24 = scmp.eq.s32.totalorder %s23, 0
      %s26 = sadd.s32 %s25, 1
      %s27 = scalar_select %p24, %s25, %s26
      %p30 = pneg %p24
      %p31 = scmp.eq.s32.totalorder %s15, 1
      %p32 = por %p30, %p31
      %p33 = scmp.ne.s32.totalorder %s25, %s28
      %p34 = scmp.eq.s32.totalorder %s15, 0
      %p35 = por %p33, %p34
      %p36 = scmp.ne.s32.totalorder %s25, %s28
      %p37 = scmp.eq.s32.totalorder %s20, 1
      %p38 = por %p36, %p37
      %p39 = scmp.ne.s32.totalorder %s28, %s29
      %p40 = scmp.eq.s32.totalorder %s20, 0
      %p41 = por %p39, %p40
      %p42 = scmp.ne.s32.totalorder %s28, %s29
      %p43 = scmp.eq.s32.totalorder %s21, 1
      %p44 = por %p42, %p43
      %p46 = scmp.ne.s32.totalorder %s29, %s45
      %p47 = scmp.eq.s32.totalorder %s21, 0
      %p48 = por %p46, %p47
      %s50 = sadd.s32 %s49, 1
      %p53 = scmp.eq.s32.totalorder %s15, 1
      %p54 = scmp.ne.s32.totalorder %s49, %s51
      %p55 = scmp.eq.s32.totalorder %s15, 0
      %p56 = por %p54, %p55
      %p57 = scmp.ne.s32.totalorder %s49, %s51
      %p58 = scmp.eq.s32.totalorder %s20, 1
      %p59 = por %p57, %p58
      %p60 = scmp.ne.s32.totalorder %s51, %s52
      %p61 = scmp.eq.s32.totalorder %s20, 0
      %p62 = por %p60, %p61
      %p63 = scmp.ne.s32.totalorder %s51, %s52
      %p64 = scmp.eq.s32.totalorder %s21, 1
      %p65 = por %p63, %p64
      %p67 = scmp.ne.s32.totalorder %s52, %s66
      %p68 = scmp.eq.s32.totalorder %s21, 0
      %p69 = por %p67, %p68
      %s71 = sadd.s32 %s70, 1
      %p74 = scmp.eq.s32.totalorder %s15, 1
      %p75 = scmp.ne.s32.totalorder %s70, %s72
      %p76 = scmp.eq.s32.totalorder %s15, 0
      %p77 = por %p75, %p76
      %p78 = scmp.ne.s32.totalorder %s70, %s72
      %p79 = scmp.eq.s32.totalorder %s20, 1
      %p80 = por %p78, %p79
      %p81 = scmp.ne.s32.totalorder %s72, %s73
      %p82 = scmp.eq.s32.totalorder %s20, 0
      %p83 = por %p81, %p82
      %p84 = scmp.ne.s32.totalorder %s72, %s73
      %p85 = scmp.eq.s32.totalorder %s21, 1
      %p86 = por %p84, %p85
      %p88 = scmp.ne.s32.totalorder %s73, %s87
      %p89 = scmp.eq.s32.totalorder %s21, 0
      %p90 = por %p88, %p89
      %s92 = sadd.s32 %s91, 1
      %p95 = scmp.eq.s32.totalorder %s15, 1
      %p96 = scmp.ne.s32.totalorder %s91, %s93
      %p97 = scmp.eq.s32.totalorder %s15, 0
      %p98 = por %p96, %p97
      %p99 = scmp.ne.s32.totalorder %s91, %s93
      %p100 = scmp.eq.s32.totalorder %s20, 1
      %p101 = por %p99, %p100
      %p102 = scmp.ne.s32.totalorder %s93, %s94
      %p103 = scmp.eq.s32.totalorder %s20, 0
      %p104 = por %p102, %p103
      %p105 = scmp.ne.s32.totalorder %s93, %s94
      %p106 = scmp.eq.s32.totalorder %s21, 1
      %p107 = por %p105, %p106
      %p109 = scmp.ne.s32.totalorder %s94, %s108
      %p110 = scmp.eq.s32.totalorder %s21, 0
      %p111 = por %p109, %p110
      %s113 = sadd.s32 %s112, 1
      %p116 = scmp.eq.s32.totalorder %s15, 1
      %p117 = scmp.ne.s32.totalorder %s112, %s114
      %p118 = scmp.eq.s32.totalorder %s15, 0
      %p119 = por %p117, %p118
      %p120 = scmp.ne.s32.totalorder %s112, %s114
      %p121 = scmp.eq.s32.totalorder %s20, 1
      %p122 = por %p120, %p121
      %p123 = scmp.ne.s32.totalorder %s114, %s115
      %p124 = scmp.eq.s32.totalorder %s20, 0
      %p125 = por %p123, %p124
      %p126 = scmp.ne.s32.totalorder %s114, %s115
      %p127 = scmp.eq.s32.totalorder %s21, 1
      %p128 = por %p126, %p127
      %p130 = scmp.ne.s32.totalorder %s115, %s129
      %p131 = scmp.eq.s32.totalorder %s21, 0
      %p132 = por %p130, %p131
      %s134 = sadd.s32 %s133, 1
      %p137 = scmp.eq.s32.totalorder %s15, 1
      %p138 = scmp.ne.s32.totalorder %s133, %s135
      %p139 = scmp.eq.s32.totalorder %s15, 0
      %p140 = por %p138, %p139
      %p141 = scmp.ne.s32.totalorder %s133, %s135
      %p142 = scmp.eq.s32.totalorder %s20, 1
      %p143 = por %p141, %p142
      %p144 = scmp.ne.s32.totalorder %s135, %s136
      %p145 = scmp.eq.s32.totalorder %s20, 0
      %p146 = por %p144, %p145
      %p147 = scmp.ne.s32.totalorder %s135, %s136
      %p148 = scmp.eq.s32.totalorder %s21, 1
      %p149 = por %p147, %p148
      %p151 = scmp.ne.s32.totalorder %s136, %s150
      %p152 = scmp.eq.s32.totalorder %s21, 0
      %p153 = por %p151, %p152
      %s154 = ssub.s32 %s15, %s22
      %p155 = scmp.eq.s32.totalorder %s154, 0
      %s157 = sadd.s32 %s156, 1
      %s158 = scalar_select %p155, %s156, %s157
      %p161 = pneg %p155
      %p162 = scmp.eq.s32.totalorder %s15, 1
      %p163 = por %p161, %p162
      %p164 = scmp.ne.s32.totalorder %s156, %s159
      %p165 = scmp.eq.s32.totalorder %s15, 0
      %p166 = por %p164, %p165
      %p167 = scmp.ne.s32.totalorder %s156, %s159
      %p168 = scmp.eq.s32.totalorder %s20, 1
      %p169 = por %p167, %p168
      %p170 = scmp.ne.s32.totalorder %s159, %s160
      %p171 = scmp.eq.s32.totalorder %s20, 0
      %p172 = por %p170, %p171
      %p173 = scmp.ne.s32.totalorder %s159, %s160
      %p174 = scmp.eq.s32.totalorder %s21, 1
      %p175 = por %p173, %p174
      %p177 = scmp.ne.s32.totalorder %s160, %s176
      %p178 = scmp.eq.s32.totalorder %s21, 0
      %p179 = por %p177, %p178
      %p180 = scmp.le.s32.totalorder 1, %s15
      %p181 = scmp.lt.s32.totalorder %s15, 3
      %p182 = pnand %p180, %p181
      %p183 = pneg %p182
      // Predicated region
      $region9: #{mgn_inference.1} parent=5 // pred_check
        _
      $region10: #{mgn_inference.1} parent=5 // pred_check_branch
        %185 = sbr.rel (%p182) target = $region12
      $region11: #{mgn_inference.1} parent=5 // pred_region
        %s186 = ssub.s32 %s15, 1
        // Predicated region
        $region13: #{mgn_inference.1} parent=11 // pred_check
          %p187 = pneg %p62
        $region14: #{mgn_inference.1} parent=11 // pred_check_branch
          %189 = sbr.rel (%p187) target = $region16
        $region15: #{mgn_inference.1} parent=11 // pred_region
          _
        $region16: #{mgn_inference.1} parent=11 // pred_fallthru
          _
        // Predicated region
        $region17: #{mgn_inference.1} parent=11 // pred_check
          %p190 = pneg %p83
        $region18: #{mgn_inference.1} parent=11 // pred_check_branch
          %192 = sbr.rel (%p190) target = $region20
        $region19: #{mgn_inference.1} parent=11 // pred_region
          _
        $region20: #{mgn_inference.1} parent=11 // pred_fallthru
          _
        // Predicated region
        $region21: #{mgn_inference.1} parent=11 // pred_check
          %p193 = pneg %p104
        $region22: #{mgn_inference.1} parent=11 // pred_check_branch
          %195 = sbr.rel (%p193) target = $region24
        $region23: #{mgn_inference.1} parent=11 // pred_region
          _
        $region24: #{mgn_inference.1} parent=11 // pred_fallthru
          _
        // Predicated region
        $region25: #{mgn_inference.1} parent=11 // pred_check
          %p196 = pneg %p125
        $region26: #{mgn_inference.1} parent=11 // pred_check_branch
          %198 = sbr.rel (%p196) target = $region28
        $region27: #{mgn_inference.1} parent=11 // pred_region
          _
        $region28: #{mgn_inference.1} parent=11 // pred_fallthru
          _
        // Predicated region
        $region29: #{mgn_inference.1} parent=11 // pred_check
          %p199 = pneg %p146
        $region30: #{mgn_inference.1} parent=11 // pred_check_branch
          %201 = sbr.rel (%p199) target = $region32
        $region31: #{mgn_inference.1} parent=11 // pred_region
          _
        $region32: #{mgn_inference.1} parent=11 // pred_fallthru
          _
      $region12: #{mgn_inference.1} parent=5 // pred_fallthru
        _
      %p202 = scmp.lt.s32.totalorder %s15, 2
      // Predicated region
      $region33: #{mgn_inference.1} parent=5 // pred_check
        %p203 = pneg %p202
      $region34: #{mgn_inference.1} parent=5 // pred_check_branch
        %205 = sbr.rel (%p203) target = $region36
      $region35: #{mgn_inference.1} parent=5 // pred_region
        // Predicated region
        $region37: #{mgn_inference.1} parent=35 // pred_check
          %p206 = pneg %p35
        $region38: #{mgn_inference.1} parent=35 // pred_check_branch
          %208 = sbr.rel (%p206) target = $region40
        $region39: #{mgn_inference.1} parent=35 // pred_region
          %s209 = smul.u32 8, %s15
          %p210 = scmp.lt.s32.totalorder %s209, 15
          %s211 = scalar_select %p210, %s209, 15
          %s212 = smul.addr %s211, 12
          %s213 = smul.addr %s212, 8
          %s214 = scalar_lea.vmem %s0, %s213
          %s215 = smul.u32 8, %s15
        $region40: #{mgn_inference.1} parent=35 // pred_fallthru
          _
      $region36: #{mgn_inference.1} parent=5 // pred_fallthru
        _
      %p216 = scmp.le.s32.totalorder 1, %s15
      %p217 = scmp.lt.s32.totalorder %s15, 3
      %p218 = pnand %p216, %p217
      %p219 = pneg %p218
      // Predicated region
      $region41: #{mgn_inference.1} parent=5 // pred_check
        _
      $region42: #{mgn_inference.1} parent=5 // pred_check_branch
        %221 = sbr.rel (%p218) target = $region44
      $region43: #{mgn_inference.1} parent=5 // pred_region
        %s222 = ssub.s32 %s15, 1
        %s223 = smul.u32 8, %s20
        %p224 = scmp.lt.s32.totalorder %s223, 15
        %s225 = scalar_select %p224, %s223, 15
        %s226 = smul.addr %s225, 12
        %s227 = smul.addr %s226, 8
        %s228 = scalar_lea.vmem %s0, %s227
        %p229 = pneg %p41
        %p230 = pneg %p38
        %p231 = pneg %p62
        %p232 = pneg %p59
        %p233 = pneg %p83
        %p234 = pneg %p80
        %p235 = pneg %p104
        %p236 = pneg %p101
        %p237 = pneg %p125
        %p238 = pneg %p122
        %p239 = pneg %p146
        %p240 = pneg %p143
        %p241 = pneg %p172
        %p242 = pneg %p169
        %s243 = sand.u32 %s159, 1
        %s244 = scalar_lea.sflag [#allocation3], %s243
        %s245 = sand.u32 %s159, 1
        %s246 = smul.addr %s245, 8
        %s247 = scalar_lea.vmem [#allocation2], %s246
        %s248 = smul.u32 8, %s20
        %p249 = scmp.lt.s32.totalorder %s248, 15
        %s250 = scalar_select %p249, %s248, 15
        %s251 = smul.addr %s250, 12
        %s252 = smul.addr %s251, 8
        %s253 = scalar_lea.vmem %s0, %s252
        %s254 = smul.u32 8, %s20
        %v256 = vld [vmem:[%s5] ss:$0 sm:$0xff]
        %v257 = vld [vmem:[%s5 + $0x1] ss:$0 sm:$0xff]
        %s258 = scalar_lea.vmem %s5, 2
        %v259 = vld [vmem:[%s258] ss:$8 sm:$0x3]
        %s260 = scalar_lea.vmem %s5, 3
        %v261 = vld [vmem:[%s260] ss:$8 sm:$0x3]
        %v262 = vld [vmem:[%s5 + $0x4] ss:$0 sm:$0xff]
        %v263 = vld [vmem:[%s5 + $0x5] ss:$0 sm:$0xff]
        %v264 = vld [vmem:[%s5 + $0x6] ss:$0 sm:$0xff]
        %v265 = vld [vmem:[%s5 + $0x7] ss:$0 sm:$0xff]
        %v266 = vld [vmem:[%s1] sm:$0xff]
        %v267 = vld [vmem:[%s253] sm:$0xff]
        %v268 = vld [vmem:[%s253 + $0x8] sm:$0xff]
        %v269 = vld [vmem:[%s253 + $0x60] sm:$0xff]
        %v270 = vld [vmem:[%s253 + $0x68] sm:$0xff]
        %v271 = vld [vmem:[%s253 + $0xc0] sm:$0xff]
        %v272 = vld [vmem:[%s253 + $0xc8] sm:$0xff]
        %v273 = vld [vmem:[%s253 + $0x120] sm:$0xff]
        %v274 = vld [vmem:[%s253 + $0x128] sm:$0xff]
        %v275 = vld [vmem:[%s253 + $0x180] sm:$0xff]
        %v276 = vld [vmem:[%s253 + $0x188] sm:$0xff]
        %v277 = vld [vmem:[%s253 + $0x1e0] sm:$0xff]
        %v278 = vld [vmem:[%s253 + $0x1e8] sm:$0xff]
        %v279 = vld [vmem:[%s253 + $0x240] sm:$0xff]
        %v280 = vld [vmem:[%s253 + $0x248] sm:$0xff]
        %v281 = vld [vmem:[%s253 + $0x2a0] sm:$0xff]
        %v282 = vld [vmem:[%s253 + $0x2a8] sm:$0xff]
        %v283 = vpack.c.bf16 %v268, %v267
        %v284 = vpack.c.bf16 %v270, %v269
        %v285 = vpack.c.bf16 %v272, %v271
        %v286 = vpack.c.bf16 %v274, %v273
        %v287 = vpack.c.bf16 %v276, %v275
        %v288 = vpack.c.bf16 %v278, %v277
        %v289 = vpack.c.bf16 %v280, %v279
        %v290 = vpack.c.bf16 %v282, %v281
        %v291 = vld [vmem:[%s2] sm:$0x3]
        %vm292 = vcmask 31744
        %v294 = vsel %vm292, %v283, 0
        %v297 = vsel %vm292, %v284, 0
        %v300 = vsel %vm292, %v285, 0
        %v303 = vsel %vm292, %v286, 0
        %v306 = vsel %vm292, %v287, 0
        %v309 = vsel %vm292, %v288, 0
        %v312 = vsel %vm292, %v289, 0
        %v315 = vsel %vm292, %v290, 0
        %vm317 = vcmask 1041408
        %v319 = vsel %vm317, %v291, 0
        %321 = vmatprep.subr.bf16.mxu0 0
        %322 = vmatpush1.bf16.msra.mxu0 %v319
        %323 = vmatprep.subr.bf16.mxu0 0
        %324 = vmatpush1.bf16.msra.mxu0 0
        %325 = vmatprep.subr.bf16.mxu0 0
        %326 = vmatpush1.bf16.msra.mxu0 0
        %327 = vmatprep.subr.bf16.mxu0 0
        %328 = vmatpush1.bf16.msra.mxu0 0
        %329 = vmatprep.subr.bf16.mxu0 0
        %330 = vmatpush1.bf16.msra.mxu0 0
        %331 = vmatprep.subr.bf16.mxu0 0
        %332 = vmatpush1.bf16.msra.mxu0 0
        %333 = vmatprep.subr.bf16.mxu0 0
        %334 = vmatpush1.bf16.msra.mxu0 0
        %335 = vmatprep.subr.bf16.mxu0 0
        %336 = vmatpush1.bf16.msra.mxu0 0
        %337 = vmatprep.subr.bf16.mxu0 0
        %338 = vmatpush1.bf16.msra.mxu0 0
        %339 = vmatprep.subr.bf16.mxu0 0
        %340 = vmatpush1.bf16.msra.mxu0 0
        %341 = vmatprep.subr.bf16.mxu0 0
        %342 = vmatpush1.bf16.msra.mxu0 0
        %343 = vmatprep.subr.bf16.mxu0 0
        %344 = vmatpush1.bf16.msra.mxu0 0
        %345 = vmatprep.subr.bf16.mxu0 0
        %346 = vmatpush1.bf16.msra.mxu0 0
        %347 = vmatprep.subr.bf16.mxu0 0
        %348 = vmatpush1.bf16.msra.mxu0 0
        %349 = vmatprep.subr.bf16.mxu0 0
        %350 = vmatpush1.bf16.msra.mxu0 0
        %351 = vmatprep.subr.bf16.mxu0 0
        %352 = vmatpush1.bf16.msra.mxu0 0
        %353 = vmatprep.mubr.bf16.mxu0 0
        %354 = vmatmul.mubr.bf16.gmra.mrb[0].mxu0 %v294
        %v355 = vpop.f32.mrb[0].mxu0
        %v356 = vadd.f32 0.0, %v355
        %v357 = vpop.f32.mrb[0].mxu0
        %v358 = vpop.f32.mrb[0].mxu0
        %v359 = vadd.f32 0.0, %v358
        %v360 = vpop.f32.mrb[0].mxu0
        %361 = vmatprep.mubr.bf16.mxu0 0
        %362 = vmatmul.mubr.bf16.gmra.mrb[0].mxu0 %v297
        %v363 = vpop.f32.mrb[0].mxu0
        %v364 = vadd.f32 0.0, %v363
        %v365 = vpop.f32.mrb[0].mxu0
        %v366 = vpop.f32.mrb[0].mxu0
        %v367 = vadd.f32 0.0, %v366
        %v368 = vpop.f32.mrb[0].mxu0
        %369 = vmatprep.mubr.bf16.mxu0 0
        %370 = vmatmul.mubr.bf16.gmra.mrb[0].mxu0 %v300
        %v371 = vpop.f32.mrb[0].mxu0
        %v372 = vadd.f32 0.0, %v371
        %v373 = vpop.f32.mrb[0].mxu0
        %v374 = vpop.f32.mrb[0].mxu0
        %v375 = vadd.f32 0.0, %v374
        %v376 = vpop.f32.mrb[0].mxu0
        %377 = vmatprep.mubr.bf16.mxu0 0
        %378 = vmatmul.mubr.bf16.gmra.mrb[0].mxu0 %v303
        %v379 = vpop.f32.mrb[0].mxu0
        %v380 = vadd.f32 0.0, %v379
        %v381 = vpop.f32.mrb[0].mxu0
        %v382 = vpop.f32.mrb[0].mxu0
        %v383 = vadd.f32 0.0, %v382
        %v384 = vpop.f32.mrb[0].mxu0
        %385 = vmatprep.mubr.bf16.mxu0 0
        %386 = vmatmul.mubr.bf16.gmra.mrb[0].mxu0 %v306
        %v387 = vpop.f32.mrb[0].mxu0
        %v388 = vadd.f32 0.0, %v387
        %v389 = vpop.f32.mrb[0].mxu0
        %v390 = vpop.f32.mrb[0].mxu0
        %v391 = vadd.f32 0.0, %v390
        %v392 = vpop.f32.mrb[0].mxu0
        %393 = vmatprep.mubr.bf16.mxu0 0
        %394 = vmatmul.mubr.bf16.gmra.mrb[0].mxu0 %v309
        %v395 = vpop.f32.mrb[0].mxu0
        %v396 = vadd.f32 0.0, %v395
        %v397 = vpop.f32.mrb[0].mxu0
        %v398 = vpop.f32.mrb[0].mxu0
        %v399 = vadd.f32 0.0, %v398
        %v400 = vpop.f32.mrb[0].mxu0
        %401 = vmatprep.mubr.bf16.mxu0 0
        %402 = vmatmul.mubr.bf16.gmra.mrb[0].mxu0 %v312
        %v403 = vpop.f32.mrb[0].mxu0
        %v404 = vadd.f32 0.0, %v403
        %v405 = vpop.f32.mrb[0].mxu0
        %v406 = vpop.f32.mrb[0].mxu0
        %v407 = vadd.f32 0.0, %v406
        %v408 = vpop.f32.mrb[0].mxu0
        %409 = vmatprep.mubr.bf16.mxu0 0
        %410 = vmatmul.mubr.bf16.gmra.mrb[0].mxu0 %v315
        %v411 = vpop.f32.mrb[0].mxu0
        %v412 = vadd.f32 0.0, %v411
        %v413 = vpop.f32.mrb[0].mxu0
        %v414 = vpop.f32.mrb[0].mxu0
        %v415 = vadd.f32 0.0, %v414
        %v416 = vpop.f32.mrb[0].mxu0
        %417 = vdwg.mxu0
        %v418 = vmul.f32 %v356, %v256
        %v419 = vmul.f32 %v359, %v256
        %v420 = vmul.f32 %v364, %v256
        %v421 = vmul.f32 %v367, %v256
        %v422 = vmul.f32 %v372, %v256
        %v423 = vmul.f32 %v375, %v256
        %v424 = vmul.f32 %v380, %v256
        %v425 = vmul.f32 %v383, %v256
        %v426 = vmul.f32 %v388, %v256
        %v427 = vmul.f32 %v391, %v256
        %v428 = vmul.f32 %v396, %v256
        %v429 = vmul.f32 %v399, %v256
        %v430 = vmul.f32 %v404, %v256
        %v431 = vmul.f32 %v407, %v256
        %v432 = vmul.f32 %v412, %v256
        %v433 = vmul.f32 %v415, %v256
        %v434 = vadd.f32 %v418, %v257
        %v435 = vadd.f32 %v419, %v257
        %v436 = vadd.f32 %v420, %v257
        %v437 = vadd.f32 %v421, %v257
        %v438 = vadd.f32 %v422, %v257
        %v439 = vadd.f32 %v423, %v257
        %v440 = vadd.f32 %v424, %v257
        %v441 = vadd.f32 %v425, %v257
        %v442 = vadd.f32 %v426, %v257
        %v443 = vadd.f32 %v427, %v257
        %v444 = vadd.f32 %v428, %v257
        %v445 = vadd.f32 %v429, %v257
        %v446 = vadd.f32 %v430, %v257
        %v447 = vadd.f32 %v431, %v257
        %v448 = vadd.f32 %v432, %v257
        %v449 = vadd.f32 %v433, %v257
        %v450 = vmax.f32 %v434, 0.0
        %v451 = vmax.f32 %v435, 0.0
        %v452 = vmax.f32 %v436, 0.0
        %v453 = vmax.f32 %v437, 0.0
        %v454 = vmax.f32 %v438, 0.0
        %v455 = vmax.f32 %v439, 0.0
        %v456 = vmax.f32 %v440, 0.0
        %v457 = vmax.f32 %v441, 0.0
        %v458 = vmax.f32 %v442, 0.0
        %v459 = vmax.f32 %v443, 0.0
        %v460 = vmax.f32 %v444, 0.0
        %v461 = vmax.f32 %v445, 0.0
        %v462 = vmax.f32 %v446, 0.0
        %v463 = vmax.f32 %v447, 0.0
        %v464 = vmax.f32 %v448, 0.0
        %v465 = vmax.f32 %v449, 0.0
        %v466 = vpack.c.bf16 %v451, %v450
        %v467 = vpack.c.bf16 %v453, %v452
        %v468 = vpack.c.bf16 %v455, %v454
        %v469 = vpack.c.bf16 %v457, %v456
        %v470 = vpack.c.bf16 %v459, %v458
        %v471 = vpack.c.bf16 %v461, %v460
        %v472 = vpack.c.bf16 %v463, %v462
        %v473 = vpack.c.bf16 %v465, %v464
        %v474 = vld [vmem:[%s3] sm:$0xff]
        %v475 = vld [vmem:[%s3 + $0x8] sm:$0xff]
        %v476 = vld [vmem:[%s3 + $0x10] sm:$0xff]
        %v477 = vld [vmem:[%s3 + $0x18] sm:$0xff]
        %v482 = vunpack.c.l.b16 %v474
        %v483 = vunpack.c.h.b16 %v474
        %v484 = vunpack.c.l.b16 %v475
        %v485 = vunpack.c.h.b16 %v475
        %v486 = vunpack.c.l.b16 %v476
        %v487 = vunpack.c.h.b16 %v476
        %v488 = vunpack.c.l.b16 %v477
        %v489 = vunpack.c.h.b16 %v477
        %v490 = vpack.c.b16 %v484, %v482
        %v491 = vpack.c.b16 %v485, %v483
        %v492 = vpack.c.b16 %v488, %v486
        %v493 = vpack.c.b16 %v489, %v487
        %vm498 = vcmask 261120
        %v500 = vsel %vm498, %v466, 0
        %v503 = vsel %vm498, %v467, 0
        %v506 = vsel %vm498, %v468, 0
        %v509 = vsel %vm498, %v469, 0
        %v512 = vsel %vm498, %v470, 0
        %v515 = vsel %vm498, %v471, 0
        %v518 = vsel %vm498, %v472, 0
        %v521 = vsel %vm498, %v473, 0
        %523 = vmatprep.subr.bf16.mxu0 %v491
        %524 = vmatpush1.bf16.msra.mxu0 %v490
        %525 = vmatprep.subr.bf16.mxu0 %v493
        %526 = vmatpush1.bf16.msra.mxu0 %v492
        %527 = vmatprep.subr.bf16.mxu0 0
        %528 = vmatpush1.bf16.msra.mxu0 0
        %529 = vmatprep.subr.bf16.mxu0 0
        %530 = vmatpush1.bf16.msra.mxu0 0
        %531 = vmatprep.subr.bf16.mxu0 0
        %532 = vmatpush1.bf16.msra.mxu0 0
        %533 = vmatprep.subr.bf16.mxu0 0
        %534 = vmatpush1.bf16.msra.mxu0 0
        %535 = vmatprep.subr.bf16.mxu0 0
        %536 = vmatpush1.bf16.msra.mxu0 0
        %537 = vmatprep.subr.bf16.mxu0 0
        %538 = vmatpush1.bf16.msra.mxu0 0
        %539 = vmatprep.subr.bf16.mxu0 0
        %540 = vmatpush1.bf16.msra.mxu0 0
        %541 = vmatprep.subr.bf16.mxu0 0
        %542 = vmatpush1.bf16.msra.mxu0 0
        %543 = vmatprep.subr.bf16.mxu0 0
        %544 = vmatpush1.bf16.msra.mxu0 0
        %545 = vmatprep.subr.bf16.mxu0 0
        %546 = vmatpush1.bf16.msra.mxu0 0
        %547 = vmatprep.subr.bf16.mxu0 0
        %548 = vmatpush1.bf16.msra.mxu0 0
        %549 = vmatprep.subr.bf16.mxu0 0
        %550 = vmatpush1.bf16.msra.mxu0 0
        %551 = vmatprep.subr.bf16.mxu0 0
        %552 = vmatpush1.bf16.msra.mxu0 0
        %553 = vmatprep.subr.bf16.mxu0 0
        %554 = vmatpush1.bf16.msra.mxu0 0
        %555 = vmatprep.mubr.bf16.mxu0 0
        %556 = vmatmul.mubr.bf16.gmra.mrb[0].mxu0 %v500
        %v557 = vpop.f32.mrb[0].mxu0
        %v558 = vadd.f32 0.0, %v557
        %v559 = vpop.f32.mrb[0].mxu0
        %v560 = vadd.f32 0.0, %v559
        %v561 = vpop.f32.mrb[0].mxu0
        %v562 = vadd.f32 0.0, %v561
        %v563 = vpop.f32.mrb[0].mxu0
        %v564 = vadd.f32 0.0, %v563
        %565 = vmatprep.mubr.bf16.mxu0 0
        %566 = vmatmul.mubr.bf16.gmra.mrb[0].mxu0 %v503
        %v567 = vpop.f32.mrb[0].mxu0
        %v568 = vadd.f32 0.0, %v567
        %v569 = vpop.f32.mrb[0].mxu0
        %v570 = vadd.f32 0.0, %v569
        %v571 = vpop.f32.mrb[0].mxu0
        %v572 = vadd.f32 0.0, %v571
        %v573 = vpop.f32.mrb[0].mxu0
        %v574 = vadd.f32 0.0, %v573
        %575 = vmatprep.mubr.bf16.mxu0 0
        %576 = vmatmul.mubr.bf16.gmra.mrb[0].mxu0 %v506
        %v577 = vpop.f32.mrb[0].mxu0
        %v578 = vadd.f32 0.0, %v577
        %v579 = vpop.f32.mrb[0].mxu0
        %v580 = vadd.f32 0.0, %v579
        %v581 = vpop.f32.mrb[0].mxu0
        %v582 = vadd.f32 0.0, %v581
        %v583 = vpop.f32.mrb[0].mxu0
        %v584 = vadd.f32 0.0, %v583
        %585 = vmatprep.mubr.bf16.mxu0 0
        %586 = vmatmul.mubr.bf16.gmra.mrb[0].mxu0 %v509
        %v587 = vpop.f32.mrb[0].mxu0
        %v588 = vadd.f32 0.0, %v587
        %v589 = vpop.f32.mrb[0].mxu0
        %v590 = vadd.f32 0.0, %v589
        %v591 = vpop.f32.mrb[0].mxu0
        %v592 = vadd.f32 0.0, %v591
        %v593 = vpop.f32.mrb[0].mxu0
        %v594 = vadd.f32 0.0, %v593
        %595 = vmatprep.mubr.bf16.mxu0 0
        %596 = vmatmul.mubr.bf16.gmra.mrb[0].mxu0 %v512
        %v597 = vpop.f32.mrb[0].mxu0
        %v598 = vadd.f32 0.0, %v597
        %v599 = vpop.f32.mrb[0].mxu0
        %v600 = vadd.f32 0.0, %v599
        %v601 = vpop.f32.mrb[0].mxu0
        %v602 = vadd.f32 0.0, %v601
        %v603 = vpop.f32.mrb[0].mxu0
        %v604 = vadd.f32 0.0, %v603
        %605 = vmatprep.mubr.bf16.mxu0 0
        %606 = vmatmul.mubr.bf16.gmra.mrb[0].mxu0 %v515
        %v607 = vpop.f32.mrb[0].mxu0
        %v608 = vadd.f32 0.0, %v607
        %v609 = vpop.f32.mrb[0].mxu0
        %v610 = vadd.f32 0.0, %v609
        %v611 = vpop.f32.mrb[0].mxu0
        %v612 = vadd.f32 0.0, %v611
        %v613 = vpop.f32.mrb[0].mxu0
        %v614 = vadd.f32 0.0, %v613
        %615 = vmatprep.mubr.bf16.mxu0 0
        %616 = vmatmul.mubr.bf16.gmra.mrb[0].mxu0 %v518
        %v617 = vpop.f32.mrb[0].mxu0
        %v618 = vadd.f32 0.0, %v617
        %v619 = vpop.f32.mrb[0].mxu0
        %v620 = vadd.f32 0.0, %v619
        %v621 = vpop.f32.mrb[0].mxu0
        %v622 = vadd.f32 0.0, %v621
        %v623 = vpop.f32.mrb[0].mxu0
        %v624 = vadd.f32 0.0, %v623
        %625 = vmatprep.mubr.bf16.mxu0 0
        %626 = vmatmul.mubr.bf16.gmra.mrb[0].mxu0 %v521
        %v627 = vpop.f32.mrb[0].mxu0
        %v628 = vadd.f32 0.0, %v627
        %v629 = vpop.f32.mrb[0].mxu0
        %v630 = vadd.f32 0.0, %v629
        %v631 = vpop.f32.mrb[0].mxu0
        %v632 = vadd.f32 0.0, %v631
        %v633 = vpop.f32.mrb[0].mxu0
        %v634 = vadd.f32 0.0, %v633
        %635 = vdwg.mxu0
        %v637 = vlaneseq
        %v638 = vshrl.u32 %v637, 7
        %v639 = vsub.s32 0, %v638
        %v640 = vrot.slane %v259, %v639
        %v641 = vlaneseq
        %v642 = vshrl.u32 %v641, 7
        %v643 = vsub.s32 1, %v642
        %v644 = vrot.slane %v259, %v643
        %v647 = vmul.f32 %v558, %v640
        %v648 = vmul.f32 %v560, %v644
        %v649 = vmul.f32 %v562, %v640
        %v650 = vmul.f32 %v564, %v644
        %v651 = vmul.f32 %v568, %v640
        %v652 = vmul.f32 %v570, %v644
        %v653 = vmul.f32 %v572, %v640
        %v654 = vmul.f32 %v574, %v644
        %v655 = vmul.f32 %v578, %v640
        %v656 = vmul.f32 %v580, %v644
        %v657 = vmul.f32 %v582, %v640
        %v658 = vmul.f32 %v584, %v644
        %v659 = vmul.f32 %v588, %v640
        %v660 = vmul.f32 %v590, %v644
        %v661 = vmul.f32 %v592, %v640
        %v662 = vmul.f32 %v594, %v644
        %v663 = vmul.f32 %v598, %v640
        %v664 = vmul.f32 %v600, %v644
        %v665 = vmul.f32 %v602, %v640
        %v666 = vmul.f32 %v604, %v644
        %v667 = vmul.f32 %v608, %v640
        %v668 = vmul.f32 %v610, %v644
        %v669 = vmul.f32 %v612, %v640
        %v670 = vmul.f32 %v614, %v644
        %v671 = vmul.f32 %v618, %v640
        %v672 = vmul.f32 %v620, %v644
        %v673 = vmul.f32 %v622, %v640
        %v674 = vmul.f32 %v624, %v644
        %v675 = vmul.f32 %v628, %v640
        %v676 = vmul.f32 %v630, %v644
        %v677 = vmul.f32 %v632, %v640
        %v678 = vmul.f32 %v634, %v644
        %v680 = vlaneseq
        %v681 = vshrl.u32 %v680, 7
        %v682 = vsub.s32 0, %v681
        %v683 = vrot.slane %v261, %v682
        %v684 = vlaneseq
        %v685 = vshrl.u32 %v684, 7
        %v686 = vsub.s32 1, %v685
        %v687 = vrot.slane %v261, %v686
        %v690 = vadd.f32 %v647, %v683
        %v691 = vadd.f32 %v648, %v687
        %v692 = vadd.f32 %v649, %v683
        %v693 = vadd.f32 %v650, %v687
        %v694 = vadd.f32 %v651, %v683
        %v695 = vadd.f32 %v652, %v687
        %v696 = vadd.f32 %v653, %v683
        %v697 = vadd.f32 %v654, %v687
        %v698 = vadd.f32 %v655, %v683
        %v699 = vadd.f32 %v656, %v687
        %v700 = vadd.f32 %v657, %v683
        %v701 = vadd.f32 %v658, %v687
        %v702 = vadd.f32 %v659, %v683
        %v703 = vadd.f32 %v660, %v687
        %v704 = vadd.f32 %v661, %v683
        %v705 = vadd.f32 %v662, %v687
        %v706 = vadd.f32 %v663, %v683
        %v707 = vadd.f32 %v664, %v687
        %v708 = vadd.f32 %v665, %v683
        %v709 = vadd.f32 %v666, %v687
        %v710 = vadd.f32 %v667, %v683
        %v711 = vadd.f32 %v668, %v687
        %v712 = vadd.f32 %v669, %v683
        %v713 = vadd.f32 %v670, %v687
        %v714 = vadd.f32 %v671, %v683
        %v715 = vadd.f32 %v672, %v687
        %v716 = vadd.f32 %v673, %v683
        %v717 = vadd.f32 %v674, %v687
        %v718 = vadd.f32 %v675, %v683
        %v719 = vadd.f32 %v676, %v687
        %v720 = vadd.f32 %v677, %v683
        %v721 = vadd.f32 %v678, %v687
        %v722 = vmax.f32 %v690, 0.0
        %v723 = vmax.f32 %v691, 0.0
        %v724 = vmax.f32 %v692, 0.0
        %v725 = vmax.f32 %v693, 0.0
        %v726 = vmax.f32 %v694, 0.0
        %v727 = vmax.f32 %v695, 0.0
        %v728 = vmax.f32 %v696, 0.0
        %v729 = vmax.f32 %v697, 0.0
        %v730 = vmax.f32 %v698, 0.0
        %v731 = vmax.f32 %v699, 0.0
        %v732 = vmax.f32 %v700, 0.0
        %v733 = vmax.f32 %v701, 0.0
        %v734 = vmax.f32 %v702, 0.0
        %v735 = vmax.f32 %v703, 0.0
        %v736 = vmax.f32 %v704, 0.0
        %v737 = vmax.f32 %v705, 0.0
        %v738 = vmax.f32 %v706, 0.0
        %v739 = vmax.f32 %v707, 0.0
        %v740 = vmax.f32 %v708, 0.0
        %v741 = vmax.f32 %v709, 0.0
        %v742 = vmax.f32 %v710, 0.0
        %v743 = vmax.f32 %v711, 0.0
        %v744 = vmax.f32 %v712, 0.0
        %v745 = vmax.f32 %v713, 0.0
        %v746 = vmax.f32 %v714, 0.0
        %v747 = vmax.f32 %v715, 0.0
        %v748 = vmax.f32 %v716, 0.0
        %v749 = vmax.f32 %v717, 0.0
        %v750 = vmax.f32 %v718, 0.0
        %v751 = vmax.f32 %v719, 0.0
        %v752 = vmax.f32 %v720, 0.0
        %v753 = vmax.f32 %v721, 0.0
        %754 = vmatprep.subr.mxu0 %v723
        %755 = vmatpush1.msra.mxu0 %v722
        %756 = vmatprep.subr.mxu0 %v725
        %757 = vmatpush1.msra.mxu0 %v724
        %758 = vmatprep.subr.mxu0 %v727
        %759 = vmatpush1.msra.mxu0 %v726
        %760 = vmatprep.subr.mxu0 %v729
        %761 = vmatpush1.msra.mxu0 %v728
        %762 = vmatprep.subr.mxu0 %v731
        %763 = vmatpush1.msra.mxu0 %v730
        %764 = vmatprep.subr.mxu0 %v733
        %765 = vmatpush1.msra.mxu0 %v732
        %766 = vmatprep.subr.mxu0 %v735
        %767 = vmatpush1.msra.mxu0 %v734
        %768 = vmatprep.subr.mxu0 %v737
        %769 = vmatpush1.msra.mxu0 %v736
        %770 = vmatprep.subr.mxu0 %v739
        %771 = vmatpush1.msra.mxu0 %v738
        %772 = vmatprep.subr.mxu0 %v741
        %773 = vmatpush1.msra.mxu0 %v740
        %774 = vmatprep.subr.mxu0 %v743
        %775 = vmatpush1.msra.mxu0 %v742
        %776 = vmatprep.subr.mxu0 %v745
        %777 = vmatpush1.msra.mxu0 %v744
        %778 = vmatprep.subr.mxu0 %v747
        %779 = vmatpush1.msra.mxu0 %v746
        %780 = vmatprep.subr.mxu0 %v749
        %781 = vmatpush1.msra.mxu0 %v748
        %782 = vmatprep.subr.mxu0 %v751
        %783 = vmatpush1.msra.mxu0 %v750
        %784 = vmatprep.subr.mxu0 %v753
        %785 = vmatpush1.msra.mxu0 %v752
        %786 = vmatprep.subr.mxu0 0.0
        %787 = vmatpush1.msra.mxu0 0.0
        %788 = vmatprep.subr.mxu0 0.0
        %789 = vmatpush1.msra.mxu0 0.0
        %790 = vmatprep.subr.mxu0 0.0
        %791 = vmatpush1.msra.mxu0 0.0
        %792 = vmatprep.subr.mxu0 0.0
        %793 = vmatpush1.msra.mxu0 0.0
        %794 = vmatprep.subr.mxu0 0.0
        %795 = vmatpush1.msra.mxu0 0.0
        %796 = vmatprep.subr.mxu0 0.0
        %797 = vmatpush1.msra.mxu0 0.0
        %798 = vmatprep.subr.mxu0 0.0
        %799 = vmatpush1.msra.mxu0 0.0
        %800 = vmatprep.subr.mxu0 0.0
        %801 = vmatpush1.msra.mxu0 0.0
        %802 = vmatprep.subr.mxu0 0.0
        %803 = vmatpush1.msra.mxu0 0.0
        %804 = vmatprep.subr.mxu0 0.0
        %805 = vmatpush1.msra.mxu0 0.0
        %806 = vmatprep.subr.mxu0 0.0
        %807 = vmatpush1.msra.mxu0 0.0
        %808 = vmatprep.subr.mxu0 0.0
        %809 = vmatpush1.msra.mxu0 0.0
        %810 = vmatprep.subr.mxu0 0.0
        %811 = vmatpush1.msra.mxu0 0.0
        %812 = vmatprep.subr.mxu0 0.0
        %813 = vmatpush1.msra.mxu0 0.0
        %814 = vmatprep.subr.mxu0 0.0
        %815 = vmatpush1.msra.mxu0 0.0
        %816 = vmatprep.subr.mxu0 0.0
        %817 = vmatpush1.msra.mxu0 0.0
        %818 = vmatprep.mubr.f32.mxu0 0.0
        %819 = vmatmul.mubr.f32.gmra.mrb[0].mxu0 %v266
        %v820 = vpop.f32.mrb[0].mxu0
        %v821 = vadd.f32 0.0, %v820
        %v822 = vpop.f32.mrb[0].mxu0
        %v823 = vadd.f32 0.0, %v822
        %824 = vdwg.mxu0
        %v825 = vpack.c.bf16 %v821, %v821
        %v826 = vpack.c.bf16 %v823, %v823
        %v827 = vld [vmem:[%s4] sm:$0xf]
        %v828 = vld [vmem:[%s4 + $0x4] sm:$0xf]
        %v829 = vld [vmem:[%s4 + $0x8] sm:$0xf]
        %v830 = vld [vmem:[%s4 + $0xc] sm:$0xf]
        %v831 = vld [vmem:[%s4 + $0x10] sm:$0xf]
        %v832 = vld [vmem:[%s4 + $0x14] sm:$0xf]
        %v833 = vld [vmem:[%s4 + $0x18] sm:$0xf]
        %v834 = vld [vmem:[%s4 + $0x1c] sm:$0xf]
        %v835 = vld [vmem:[%s4 + $0x20] sm:$0xf]
        %v836 = vld [vmem:[%s4 + $0x24] sm:$0xf]
        %v837 = vld [vmem:[%s4 + $0x28] sm:$0xf]
        %v838 = vld [vmem:[%s4 + $0x2c] sm:$0xf]
        %v839 = vld [vmem:[%s4 + $0x30] sm:$0xf]
        %v840 = vld [vmem:[%s4 + $0x34] sm:$0xf]
        %v841 = vld [vmem:[%s4 + $0x38] sm:$0xf]
        %v842 = vld [vmem:[%s4 + $0x3c] sm:$0xf]
        %v843 = vld [vmem:[%s4 + $0x40] sm:$0xf]
        %v844 = vld [vmem:[%s4 + $0x44] sm:$0xf]
        %v845 = vld [vmem:[%s4 + $0x48] sm:$0xf]
        %v846 = vld [vmem:[%s4 + $0x4c] sm:$0xf]
        %v847 = vld [vmem:[%s4 + $0x50] sm:$0xf]
        %v848 = vld [vmem:[%s4 + $0x54] sm:$0xf]
        %v849 = vld [vmem:[%s4 + $0x58] sm:$0xf]
        %v850 = vld [vmem:[%s4 + $0x5c] sm:$0xf]
        %s851 = scalar_lea.vmem %s253, 16
        %v852 = vld [vmem:[%s851] sm:$0xff]
        %v853 = vld [vmem:[%s851 + $0x8] sm:$0xff]
        %v854 = vld [vmem:[%s851 + $0x60] sm:$0xff]
        %v855 = vld [vmem:[%s851 + $0x68] sm:$0xff]
        %v856 = vld [vmem:[%s851 + $0xc0] sm:$0xff]
        %v857 = vld [vmem:[%s851 + $0xc8] sm:$0xff]
        %v858 = vld [vmem:[%s851 + $0x120] sm:$0xff]
        %v859 = vld [vmem:[%s851 + $0x128] sm:$0xff]
        %v860 = vld [vmem:[%s851 + $0x180] sm:$0xff]
        %v861 = vld [vmem:[%s851 + $0x188] sm:$0xff]
        %v862 = vld [vmem:[%s851 + $0x1e0] sm:$0xff]
        %v863 = vld [vmem:[%s851 + $0x1e8] sm:$0xff]
        %v864 = vld [vmem:[%s851 + $0x240] sm:$0xff]
        %v865 = vld [vmem:[%s851 + $0x248] sm:$0xff]
        %v866 = vld [vmem:[%s851 + $0x2a0] sm:$0xff]
        %v867 = vld [vmem:[%s851 + $0x2a8] sm:$0xff]
        %v868 = vpack.c.bf16 %v853, %v852
        %v869 = vpack.c.bf16 %v855, %v854
        %v870 = vpack.c.bf16 %v857, %v856
        %v871 = vpack.c.bf16 %v859, %v858
        %v872 = vpack.c.bf16 %v861, %v860
        %v873 = vpack.c.bf16 %v863, %v862
        %v874 = vpack.c.bf16 %v865, %v864
        %v875 = vpack.c.bf16 %v867, %v866
        %v877 = vsel %vm292, %v868, 0
        %v880 = vsel %vm292, %v869, 0
        %v883 = vsel %vm292, %v870, 0
        %v886 = vsel %vm292, %v871, 0
        %v889 = vsel %vm292, %v872, 0
        %v892 = vsel %vm292, %v873, 0
        %v895 = vsel %vm292, %v874, 0
        %v898 = vsel %vm292, %v875, 0
        %900 = vmatprep.subr.bf16.mxu0 0
        %901 = vmatpush1.bf16.msra.mxu0 %v319
        %902 = vmatprep.subr.bf16.mxu0 0
        %903 = vmatpush1.bf16.msra.mxu0 0
        %904 = vmatprep.subr.bf16.mxu0 0
        %905 = vmatpush1.bf16.msra.mxu0 0
        %906 = vmatprep.subr.bf16.mxu0 0
        %907 = vmatpush1.bf16.msra.mxu0 0
        %908 = vmatprep.subr.bf16.mxu0 0
        %909 = vmatpush1.bf16.msra.mxu0 0
        %910 = vmatprep.subr.bf16.mxu0 0
        %911 = vmatpush1.bf16.msra.mxu0 0
        %912 = vmatprep.subr.bf16.mxu0 0
        %913 = vmatpush1.bf16.msra.mxu0 0
        %914 = vmatprep.subr.bf16.mxu0 0
        %915 = vmatpush1.bf16.msra.mxu0 0
        %916 = vmatprep.subr.bf16.mxu0 0
        %917 = vmatpush1.bf16.msra.mxu0 0
        %918 = vmatprep.subr.bf16.mxu0 0
        %919 = vmatpush1.bf16.msra.mxu0 0
        %920 = vmatprep.subr.bf16.mxu0 0
        %921 = vmatpush1.bf16.msra.mxu0 0
        %922 = vmatprep.subr.bf16.mxu0 0
        %923 = vmatpush1.bf16.msra.mxu0 0
        %924 = vmatprep.subr.bf16.mxu0 0
        %925 = vmatpush1.bf16.msra.mxu0 0
        %926 = vmatprep.subr.bf16.mxu0 0
        %927 = vmatpush1.bf16.msra.mxu0 0
        %928 = vmatprep.subr.bf16.mxu0 0
        %929 = vmatpush1.bf16.msra.mxu0 0
        %930 = vmatprep.subr.bf16.mxu0 0
        %931 = vmatpush1.bf16.msra.mxu0 0
        %932 = vmatprep.mubr.bf16.mxu0 0
        %933 = vmatmul.mubr.bf16.gmra.mrb[0].mxu0 %v877
        %v934 = vpop.f32.mrb[0].mxu0
        %v935 = vadd.f32 0.0, %v934
        %v936 = vpop.f32.mrb[0].mxu0
        %v937 = vpop.f32.mrb[0].mxu0
        %v938 = vadd.f32 0.0, %v937
        %v939 = vpop.f32.mrb[0].mxu0
        %940 = vmatprep.mubr.bf16.mxu0 0
        %941 = vmatmul.mubr.bf16.gmra.mrb[0].mxu0 %v880
        %v942 = vpop.f32.mrb[0].mxu0
        %v943 = vadd.f32 0.0, %v942
        %v944 = vpop.f32.mrb[0].mxu0
        %v945 = vpop.f32.mrb[0].mxu0
        %v946 = vadd.f32 0.0, %v945
        %v947 = vpop.f32.mrb[0].mxu0
        %948 = vmatprep.mubr.bf16.mxu0 0
        %949 = vmatmul.mubr.bf16.gmra.mrb[0].mxu0 %v883
        %v950 = vpop.f32.mrb[0].mxu0
        %v951 = vadd.f32 0.0, %v950
        %v952 = vpop.f32.mrb[0].mxu0
        %v953 = vpop.f32.mrb[0].mxu0
        %v954 = vadd.f32 0.0, %v953
        %v955 = vpop.f32.mrb[0].mxu0
        %956 = vmatprep.mubr.bf16.mxu0 0
        %957 = vmatmul.mubr.bf16.gmra.mrb[0].mxu0 %v886
        %v958 = vpop.f32.mrb[0].mxu0
        %v959 = vadd.f32 0.0, %v958
        %v960 = vpop.f32.mrb[0].mxu0
        %v961 = vpop.f32.mrb[0].mxu0
        %v962 = vadd.f32 0.0, %v961
        %v963 = vpop.f32.mrb[0].mxu0
        %964 = vmatprep.mubr.bf16.mxu0 0
        %965 = vmatmul.mubr.bf16.gmra.mrb[0].mxu0 %v889
        %v966 = vpop.f32.mrb[0].mxu0
        %v967 = vadd.f32 0.0, %v966
        %v968 = vpop.f32.mrb[0].mxu0
        %v969 = vpop.f32.mrb[0].mxu0
        %v970 = vadd.f32 0.0, %v969
        %v971 = vpop.f32.mrb[0].mxu0
        %972 = vmatprep.mubr.bf16.mxu0 0
        %973 = vmatmul.mubr.bf16.gmra.mrb[0].mxu0 %v892
        %v974 = vpop.f32.mrb[0].mxu0
        %v975 = vadd.f32 0.0, %v974
        %v976 = vpop.f32.mrb[0].mxu0
        %v977 = vpop.f32.mrb[0].mxu0
        %v978 = vadd.f32 0.0, %v977
        %v979 = vpop.f32.mrb[0].mxu0
        %980 = vmatprep.mubr.bf16.mxu0 0
        %981 = vmatmul.mubr.bf16.gmra.mrb[0].mxu0 %v895
        %v982 = vpop.f32.mrb[0].mxu0
        %v983 = vadd.f32 0.0, %v982
        %v984 = vpop.f32.mrb[0].mxu0
        %v985 = vpop.f32.mrb[0].mxu0
        %v986 = vadd.f32 0.0, %v985
        %v987 = vpop.f32.mrb[0].mxu0
        %988 = vmatprep.mubr.bf16.mxu0 0
        %989 = vmatmul.mubr.bf16.gmra.mrb[0].mxu0 %v898
        %v990 = vpop.f32.mrb[0].mxu0
        %v991 = vadd.f32 0.0, %v990
        %v992 = vpop.f32.mrb[0].mxu0
        %v993 = vpop.f32.mrb[0].mxu0
        %v994 = vadd.f32 0.0, %v993
        %v995 = vpop.f32.mrb[0].mxu0
        %996 = vdwg.mxu0
        %v997 = vmul.f32 %v935, %v256
        %v998 = vmul.f32 %v938, %v256
        %v999 = vmul.f32 %v943, %v256
        %v1000 = vmul.f32 %v946, %v256
        %v1001 = vmul.f32 %v951, %v256
        %v1002 = vmul.f32 %v954, %v256
        %v1003 = vmul.f32 %v959, %v256
        %v1004 = vmul.f32 %v962, %v256
        %v1005 = vmul.f32 %v967, %v256
        %v1006 = vmul.f32 %v970, %v256
        %v1007 = vmul.f32 %v975, %v256
        %v1008 = vmul.f32 %v978, %v256
        %v1009 = vmul.f32 %v983, %v256
        %v1010 = vmul.f32 %v986, %v256
        %v1011 = vmul.f32 %v991, %v256
        %v1012 = vmul.f32 %v994, %v256
        %v1013 = vadd.f32 %v997, %v257
        %v1014 = vadd.f32 %v998, %v257
        %v1015 = vadd.f32 %v999, %v257
        %v1016 = vadd.f32 %v1000, %v257
        %v1017 = vadd.f32 %v1001, %v257
        %v1018 = vadd.f32 %v1002, %v257
        %v1019 = vadd.f32 %v1003, %v257
        %v1020 = vadd.f32 %v1004, %v257
        %v1021 = vadd.f32 %v1005, %v257
        %v1022 = vadd.f32 %v1006, %v257
        %v1023 = vadd.f32 %v1007, %v257
        %v1024 = vadd.f32 %v1008, %v257
        %v1025 = vadd.f32 %v1009, %v257
        %v1026 = vadd.f32 %v1010, %v257
        %v1027 = vadd.f32 %v1011, %v257
        %v1028 = vadd.f32 %v1012, %v257
        %v1029 = vmax.f32 %v1013, 0.0
        %v1030 = vmax.f32 %v1014, 0.0
        %v1031 = vmax.f32 %v1015, 0.0
        %v1032 = vmax.f32 %v1016, 0.0
        %v1033 = vmax.f32 %v1017, 0.0
        %v1034 = vmax.f32 %v1018, 0.0
        %v1035 = vmax.f32 %v1019, 0.0
        %v1036 = vmax.f32 %v1020, 0.0
        %v1037 = vmax.f32 %v1021, 0.0
        %v1038 = vmax.f32 %v1022, 0.0
        %v1039 = vmax.f32 %v1023, 0.0
        %v1040 = vmax.f32 %v1024, 0.0
        %v1041 = vmax.f32 %v1025, 0.0
        %v1042 = vmax.f32 %v1026, 0.0
        %v1043 = vmax.f32 %v1027, 0.0
        %v1044 = vmax.f32 %v1028, 0.0
        %v1045 = vpack.c.bf16 %v1030, %v1029
        %v1046 = vpack.c.bf16 %v1032, %v1031
        %v1047 = vpack.c.bf16 %v1034, %v1033
        %v1048 = vpack.c.bf16 %v1036, %v1035
        %v1049 = vpack.c.bf16 %v1038, %v1037
        %v1050 = vpack.c.bf16 %v1040, %v1039
        %v1051 = vpack.c.bf16 %v1042, %v1041
        %v1052 = vpack.c.bf16 %v1044, %v1043
        %v1054 = vsel %vm498, %v1045, 0
        %v1057 = vsel %vm498, %v1046, 0
        %v1060 = vsel %vm498, %v1047, 0
        %v1063 = vsel %vm498, %v1048, 0
        %v1066 = vsel %vm498, %v1049, 0
        %v1069 = vsel %vm498, %v1050, 0
        %v1072 = vsel %vm498, %v1051, 0
        %v1075 = vsel %vm498, %v1052, 0
        %1077 = vmatprep.subr.bf16.mxu0 %v491
        %1078 = vmatpush1.bf16.msra.mxu0 %v490
        %1079 = vmatprep.subr.bf16.mxu0 %v493
        %1080 = vmatpush1.bf16.msra.mxu0 %v492
        %1081 = vmatprep.subr.bf16.mxu0 0
        %1082 = vmatpush1.bf16.msra.mxu0 0
        %1083 = vmatprep.subr.bf16.mxu0 0
        %1084 = vmatpush1.bf16.msra.mxu0 0
        %1085 = vmatprep.subr.bf16.mxu0 0
        %1086 = vmatpush1.bf16.msra.mxu0 0
        %1087 = vmatprep.subr.bf16.mxu0 0
        %1088 = vmatpush1.bf16.msra.mxu0 0
        %1089 = vmatprep.subr.bf16.mxu0 0
        %1090 = vmatpush1.bf16.msra.mxu0 0
        %1091 = vmatprep.subr.bf16.mxu0 0
        %1092 = vmatpush1.bf16.msra.mxu0 0
        %1093 = vmatprep.subr.bf16.mxu0 0
        %1094 = vmatpush1.bf16.msra.mxu0 0
        %1095 = vmatprep.subr.bf16.mxu0 0
        %1096 = vmatpush1.bf16.msra.mxu0 0
        %1097 = vmatprep.subr.bf16.mxu0 0
        %1098 = vmatpush1.bf16.msra.mxu0 0
        %1099 = vmatprep.subr.bf16.mxu0 0
        %1100 = vmatpush1.bf16.msra.mxu0 0
        %1101 = vmatprep.subr.bf16.mxu0 0
        %1102 = vmatpush1.bf16.msra.mxu0 0
        %1103 = vmatprep.subr.bf16.mxu0 0
        %1104 = vmatpush1.bf16.msra.mxu0 0
        %1105 = vmatprep.subr.bf16.mxu0 0
        %1106 = vmatpush1.bf16.msra.mxu0 0
        %1107 = vmatprep.subr.bf16.mxu0 0
        %1108 = vmatpush1.bf16.msra.mxu0 0
        %1109 = vmatprep.mubr.bf16.mxu0 0
        %1110 = vmatmul.mubr.bf16.gmra.mrb[0].mxu0 %v1054
        %v1111 = vpop.f32.mrb[0].mxu0
        %v1112 = vadd.f32 0.0, %v1111
        %v1113 = vpop.f32.mrb[0].mxu0
        %v1114 = vadd.f32 0.0, %v1113
        %v1115 = vpop.f32.mrb[0].mxu0
        %v1116 = vadd.f32 0.0, %v1115
        %v1117 = vpop.f32.mrb[0].mxu0
        %v1118 = vadd.f32 0.0, %v1117
        %1119 = vmatprep.mubr.bf16.mxu0 0
        %1120 = vmatmul.mubr.bf16.gmra.mrb[0].mxu0 %v1057
        %v1121 = vpop.f32.mrb[0].mxu0
        %v1122 = vadd.f32 0.0, %v1121
        %v1123 = vpop.f32.mrb[0].mxu0
        %v1124 = vadd.f32 0.0, %v1123
        %v1125 = vpop.f32.mrb[0].mxu0
        %v1126 = vadd.f32 0.0, %v1125
        %v1127 = vpop.f32.mrb[0].mxu0
        %v1128 = vadd.f32 0.0, %v1127
        %1129 = vmatprep.mubr.bf16.mxu0 0
        %1130 = vmatmul.mubr.bf16.gmra.mrb[0].mxu0 %v1060
        %v1131 = vpop.f32.mrb[0].mxu0
        %v1132 = vadd.f32 0.0, %v1131
        %v1133 = vpop.f32.mrb[0].mxu0
        %v1134 = vadd.f32 0.0, %v1133
        %v1135 = vpop.f32.mrb[0].mxu0
        %v1136 = vadd.f32 0.0, %v1135
        %v1137 = vpop.f32.mrb[0].mxu0
        %v1138 = vadd.f32 0.0, %v1137
        %1139 = vmatprep.mubr.bf16.mxu0 0
        %1140 = vmatmul.mubr.bf16.gmra.mrb[0].mxu0 %v1063
        %v1141 = vpop.f32.mrb[0].mxu0
        %v1142 = vadd.f32 0.0, %v1141
        %v1143 = vpop.f32.mrb[0].mxu0
        %v1144 = vadd.f32 0.0, %v1143
        %v1145 = vpop.f32.mrb[0].mxu0
        %v1146 = vadd.f32 0.0, %v1145
        %v1147 = vpop.f32.mrb[0].mxu0
        %v1148 = vadd.f32 0.0, %v1147
        %1149 = vmatprep.mubr.bf16.mxu0 0
        %1150 = vmatmul.mubr.bf16.gmra.mrb[0].mxu0 %v1066
        %v1151 = vpop.f32.mrb[0].mxu0
        %v1152 = vadd.f32 0.0, %v1151
        %v1153 = vpop.f32.mrb[0].mxu0
        %v1154 = vadd.f32 0.0, %v1153
        %v1155 = vpop.f32.mrb[0].mxu0
        %v1156 = vadd.f32 0.0, %v1155
        %v1157 = vpop.f32.mrb[0].mxu0
        %v1158 = vadd.f32 0.0, %v1157
        %1159 = vmatprep.mubr.bf16.mxu0 0
        %1160 = vmatmul.mubr.bf16.gmra.mrb[0].mxu0 %v1069
        %v1161 = vpop.f32.mrb[0].mxu0
        %v1162 = vadd.f32 0.0, %v1161
        %v1163 = vpop.f32.mrb[0].mxu0
        %v1164 = vadd.f32 0.0, %v1163
        %v1165 = vpop.f32.mrb[0].mxu0
        %v1166 = vadd.f32 0.0, %v1165
        %v1167 = vpop.f32.mrb[0].mxu0
        %v1168 = vadd.f32 0.0, %v1167
        %1169 = vmatprep.mubr.bf16.mxu0 0
        %1170 = vmatmul.mubr.bf16.gmra.mrb[0].mxu0 %v1072
        %v1171 = vpop.f32.mrb[0].mxu0
        %v1172 = vadd.f32 0.0, %v1171
        %v1173 = vpop.f32.mrb[0].mxu0
        %v1174 = vadd.f32 0.0, %v1173
        %v1175 = vpop.f32.mrb[0].mxu0
        %v1176 = vadd.f32 0.0, %v1175
        %v1177 = vpop.f32.mrb[0].mxu0
        %v1178 = vadd.f32 0.0, %v1177
        %1179 = vmatprep.mubr.bf16.mxu0 0
        %1180 = vmatmul.mubr.bf16.gmra.mrb[0].mxu0 %v1075
        %v1181 = vpop.f32.mrb[0].mxu0
        %v1182 = vadd.f32 0.0, %v1181
        %v1183 = vpop.f32.mrb[0].mxu0
        %v1184 = vadd.f32 0.0, %v1183
        %v1185 = vpop.f32.mrb[0].mxu0
        %v1186 = vadd.f32 0.0, %v1185
        %v1187 = vpop.f32.mrb[0].mxu0
        %v1188 = vadd.f32 0.0, %v1187
        %1189 = vdwg.mxu0
        %v1190 = vmul.f32 %v1112, %v640
        %v1191 = vmul.f32 %v1114, %v644
        %v1192 = vmul.f32 %v1116, %v640
        %v1193 = vmul.f32 %v1118, %v644
        %v1194 = vmul.f32 %v1122, %v640
        %v1195 = vmul.f32 %v1124, %v644
        %v1196 = vmul.f32 %v1126, %v640
        %v1197 = vmul.f32 %v1128, %v644
        %v1198 = vmul.f32 %v1132, %v640
        %v1199 = vmul.f32 %v1134, %v644
        %v1200 = vmul.f32 %v1136, %v640
        %v1201 = vmul.f32 %v1138, %v644
        %v1202 = vmul.f32 %v1142, %v640
        %v1203 = vmul.f32 %v1144, %v644
        %v1204 = vmul.f32 %v1146, %v640
        %v1205 = vmul.f32 %v1148, %v644
        %v1206 = vmul.f32 %v1152, %v640
        %v1207 = vmul.f32 %v1154, %v644
        %v1208 = vmul.f32 %v1156, %v640
        %v1209 = vmul.f32 %v1158, %v644
        %v1210 = vmul.f32 %v1162, %v640
        %v1211 = vmul.f32 %v1164, %v644
        %v1212 = vmul.f32 %v1166, %v640
        %v1213 = vmul.f32 %v1168, %v644
        %v1214 = vmul.f32 %v1172, %v640
        %v1215 = vmul.f32 %v1174, %v644
        %v1216 = vmul.f32 %v1176, %v640
        %v1217 = vmul.f32 %v1178, %v644
        %v1218 = vmul.f32 %v1182, %v640
        %v1219 = vmul.f32 %v1184, %v644
        %v1220 = vmul.f32 %v1186, %v640
        %v1221 = vmul.f32 %v1188, %v644
        %v1222 = vadd.f32 %v1190, %v683
        %v1223 = vadd.f32 %v1191, %v687
        %v1224 = vadd.f32 %v1192, %v683
        %v1225 = vadd.f32 %v1193, %v687
        %v1226 = vadd.f32 %v1194, %v683
        %v1227 = vadd.f32 %v1195, %v687
        %v1228 = vadd.f32 %v1196, %v683
        %v1229 = vadd.f32 %v1197, %v687
        %v1230 = vadd.f32 %v1198, %v683
        %v1231 = vadd.f32 %v1199, %v687
        %v1232 = vadd.f32 %v1200, %v683
        %v1233 = vadd.f32 %v1201, %v687
        %v1234 = vadd.f32 %v1202, %v683
        %v1235 = vadd.f32 %v1203, %v687
        %v1236 = vadd.f32 %v1204, %v683
        %v1237 = vadd.f32 %v1205, %v687
        %v1238 = vadd.f32 %v1206, %v683
        %v1239 = vadd.f32 %v1207, %v687
        %v1240 = vadd.f32 %v1208, %v683
        %v1241 = vadd.f32 %v1209, %v687
        %v1242 = vadd.f32 %v1210, %v683
        %v1243 = vadd.f32 %v1211, %v687
        %v1244 = vadd.f32 %v1212, %v683
        %v1245 = vadd.f32 %v1213, %v687
        %v1246 = vadd.f32 %v1214, %v683
        %v1247 = vadd.f32 %v1215, %v687
        %v1248 = vadd.f32 %v1216, %v683
        %v1249 = vadd.f32 %v1217, %v687
        %v1250 = vadd.f32 %v1218, %v683
        %v1251 = vadd.f32 %v1219, %v687
        %v1252 = vadd.f32 %v1220, %v683
        %v1253 = vadd.f32 %v1221, %v687
        %v1254 = vmax.f32 %v1222, 0.0
        %v1255 = vmax.f32 %v1223, 0.0
        %v1256 = vmax.f32 %v1224, 0.0
        %v1257 = vmax.f32 %v1225, 0.0
        %v1258 = vmax.f32 %v1226, 0.0
        %v1259 = vmax.f32 %v1227, 0.0
        %v1260 = vmax.f32 %v1228, 0.0
        %v1261 = vmax.f32 %v1229, 0.0
        %v1262 = vmax.f32 %v1230, 0.0
        %v1263 = vmax.f32 %v1231, 0.0
        %v1264 = vmax.f32 %v1232, 0.0
        %v1265 = vmax.f32 %v1233, 0.0
        %v1266 = vmax.f32 %v1234, 0.0
        %v1267 = vmax.f32 %v1235, 0.0
        %v1268 = vmax.f32 %v1236, 0.0
        %v1269 = vmax.f32 %v1237, 0.0
        %v1270 = vmax.f32 %v1238, 0.0
        %v1271 = vmax.f32 %v1239, 0.0
        %v1272 = vmax.f32 %v1240, 0.0
        %v1273 = vmax.f32 %v1241, 0.0
        %v1274 = vmax.f32 %v1242, 0.0
        %v1275 = vmax.f32 %v1243, 0.0
        %v1276 = vmax.f32 %v1244, 0.0
        %v1277 = vmax.f32 %v1245, 0.0
        %v1278 = vmax.f32 %v1246, 0.0
        %v1279 = vmax.f32 %v1247, 0.0
        %v1280 = vmax.f32 %v1248, 0.0
        %v1281 = vmax.f32 %v1249, 0.0
        %v1282 = vmax.f32 %v1250, 0.0
        %v1283 = vmax.f32 %v1251, 0.0
        %v1284 = vmax.f32 %v1252, 0.0
        %v1285 = vmax.f32 %v1253, 0.0
        %1286 = vmatprep.subr.mxu0 %v1255
        %1287 = vmatpush1.msra.mxu0 %v1254
        %1288 = vmatprep.subr.mxu0 %v1257
        %1289 = vmatpush1.msra.mxu0 %v1256
        %1290 = vmatprep.subr.mxu0 %v1259
        %1291 = vmatpush1.msra.mxu0 %v1258
        %1292 = vmatprep.subr.mxu0 %v1261
        %1293 = vmatpush1.msra.mxu0 %v1260
        %1294 = vmatprep.subr.mxu0 %v1263
        %1295 = vmatpush1.msra.mxu0 %v1262
        %1296 = vmatprep.subr.mxu0 %v1265
        %1297 = vmatpush1.msra.mxu0 %v1264
        %1298 = vmatprep.subr.mxu0 %v1267
        %1299 = vmatpush1.msra.mxu0 %v1266
        %1300 = vmatprep.subr.mxu0 %v1269
        %1301 = vmatpush1.msra.mxu0 %v1268
        %1302 = vmatprep.subr.mxu0 %v1271
        %1303 = vmatpush1.msra.mxu0 %v1270
        %1304 = vmatprep.subr.mxu0 %v1273
        %1305 = vmatpush1.msra.mxu0 %v1272
        %1306 = vmatprep.subr.mxu0 %v1275
        %1307 = vmatpush1.msra.mxu0 %v1274
        %1308 = vmatprep.subr.mxu0 %v1277
        %1309 = vmatpush1.msra.mxu0 %v1276
        %1310 = vmatprep.subr.mxu0 %v1279
        %1311 = vmatpush1.msra.mxu0 %v1278
        %1312 = vmatprep.subr.mxu0 %v1281
        %1313 = vmatpush1.msra.mxu0 %v1280
        %1314 = vmatprep.subr.mxu0 %v1283
        %1315 = vmatpush1.msra.mxu0 %v1282
        %1316 = vmatprep.subr.mxu0 %v1285
        %1317 = vmatpush1.msra.mxu0 %v1284
        %1318 = vmatprep.subr.mxu0 0.0
        %1319 = vmatpush1.msra.mxu0 0.0
        %1320 = vmatprep.subr.mxu0 0.0
        %1321 = vmatpush1.msra.mxu0 0.0
        %1322 = vmatprep.subr.mxu0 0.0
        %1323 = vmatpush1.msra.mxu0 0.0
        %1324 = vmatprep.subr.mxu0 0.0
        %1325 = vmatpush1.msra.mxu0 0.0
        %1326 = vmatprep.subr.mxu0 0.0
        %1327 = vmatpush1.msra.mxu0 0.0
        %1328 = vmatprep.subr.mxu0 0.0
        %1329 = vmatpush1.msra.mxu0 0.0
        %1330 = vmatprep.subr.mxu0 0.0
        %1331 = vmatpush1.msra.mxu0 0.0
        %1332 = vmatprep.subr.mxu0 0.0
        %1333 = vmatpush1.msra.mxu0 0.0
        %1334 = vmatprep.subr.mxu0 0.0
        %1335 = vmatpush1.msra.mxu0 0.0
        %1336 = vmatprep.subr.mxu0 0.0
        %1337 = vmatpush1.msra.mxu0 0.0
        %1338 = vmatprep.subr.mxu0 0.0
        %1339 = vmatpush1.msra.mxu0 0.0
        %1340 = vmatprep.subr.mxu0 0.0
        %1341 = vmatpush1.msra.mxu0 0.0
        %1342 = vmatprep.subr.mxu0 0.0
        %1343 = vmatpush1.msra.mxu0 0.0
        %1344 = vmatprep.subr.mxu0 0.0
        %1345 = vmatpush1.msra.mxu0 0.0
        %1346 = vmatprep.subr.mxu0 0.0
        %1347 = vmatpush1.msra.mxu0 0.0
        %1348 = vmatprep.subr.mxu0 0.0
        %1349 = vmatpush1.msra.mxu0 0.0
        %1350 = vmatprep.mubr.f32.mxu0 0.0
        %1351 = vmatmul.mubr.f32.gmra.mrb[0].mxu0 %v266
        %v1352 = vpop.f32.mrb[0].mxu0
        %v1353 = vadd.f32 0.0, %v1352
        %v1354 = vpop.f32.mrb[0].mxu0
        %v1355 = vadd.f32 0.0, %v1354
        %1356 = vdwg.mxu0
        %v1357 = vpack.c.bf16 %v1353, %v1353
        %v1358 = vpack.c.bf16 %v1355, %v1355
        %s1359 = scalar_lea.vmem %s4, 96
        %v1360 = vld [vmem:[%s1359] sm:$0xf]
        %v1361 = vld [vmem:[%s1359 + $0x4] sm:$0xf]
        %v1362 = vld [vmem:[%s1359 + $0x8] sm:$0xf]
        %v1363 = vld [vmem:[%s1359 + $0xc] sm:$0xf]
        %v1364 = vld [vmem:[%s1359 + $0x10] sm:$0xf]
        %v1365 = vld [vmem:[%s1359 + $0x14] sm:$0xf]
        %v1366 = vld [vmem:[%s1359 + $0x18] sm:$0xf]
        %v1367 = vld [vmem:[%s1359 + $0x1c] sm:$0xf]
        %v1368 = vld [vmem:[%s1359 + $0x20] sm:$0xf]
        %v1369 = vld [vmem:[%s1359 + $0x24] sm:$0xf]
        %v1370 = vld [vmem:[%s1359 + $0x28] sm:$0xf]
        %v1371 = vld [vmem:[%s1359 + $0x2c] sm:$0xf]
        %v1372 = vld [vmem:[%s1359 + $0x30] sm:$0xf]
        %v1373 = vld [vmem:[%s1359 + $0x34] sm:$0xf]
        %v1374 = vld [vmem:[%s1359 + $0x38] sm:$0xf]
        %v1375 = vld [vmem:[%s1359 + $0x3c] sm:$0xf]
        %v1376 = vld [vmem:[%s1359 + $0x40] sm:$0xf]
        %v1377 = vld [vmem:[%s1359 + $0x44] sm:$0xf]
        %v1378 = vld [vmem:[%s1359 + $0x48] sm:$0xf]
        %v1379 = vld [vmem:[%s1359 + $0x4c] sm:$0xf]
        %v1380 = vld [vmem:[%s1359 + $0x50] sm:$0xf]
        %v1381 = vld [vmem:[%s1359 + $0x54] sm:$0xf]
        %v1382 = vld [vmem:[%s1359 + $0x58] sm:$0xf]
        %v1383 = vld [vmem:[%s1359 + $0x5c] sm:$0xf]
        %v1408 = vunpack.c.l.b16 %v1360
        %v1409 = vunpack.c.l.b16 %v1361
        %v1410 = vunpack.c.l.b16 %v1362
        %v1411 = vunpack.c.l.b16 %v1363
        %v1412 = vunpack.c.l.b16 %v1364
        %v1413 = vunpack.c.l.b16 %v1365
        %v1414 = vunpack.c.l.b16 %v1366
        %v1415 = vunpack.c.l.b16 %v1367
        %v1416 = vunpack.c.l.b16 %v1368
        %v1417 = vunpack.c.l.b16 %v1369
        %v1418 = vunpack.c.l.b16 %v1370
        %v1419 = vunpack.c.l.b16 %v1371
        %v1420 = vunpack.c.l.b16 %v1372
        %v1421 = vunpack.c.l.b16 %v1373
        %v1422 = vunpack.c.l.b16 %v1374
        %v1423 = vunpack.c.l.b16 %v1375
        %v1424 = vunpack.c.l.b16 %v1376
        %v1425 = vunpack.c.l.b16 %v1377
        %v1426 = vunpack.c.l.b16 %v1378
        %v1427 = vunpack.c.l.b16 %v1379
        %v1428 = vunpack.c.l.b16 %v1380
        %v1429 = vunpack.c.l.b16 %v1381
        %v1430 = vunpack.c.l.b16 %v1382
        %v1431 = vunpack.c.l.b16 %v1383
        %v1432 = vpack.c.b16 %v1409, %v1408
        %v1433 = vpack.c.b16 %v1411, %v1410
        %v1434 = vpack.c.b16 %v1413, %v1412
        %v1435 = vpack.c.b16 %v1415, %v1414
        %v1436 = vpack.c.b16 %v1417, %v1416
        %v1437 = vpack.c.b16 %v1419, %v1418
        %v1438 = vpack.c.b16 %v1421, %v1420
        %v1439 = vpack.c.b16 %v1423, %v1422
        %v1440 = vpack.c.b16 %v1425, %v1424
        %v1441 = vpack.c.b16 %v1427, %v1426
        %v1442 = vpack.c.b16 %v1429, %v1428
        %v1443 = vpack.c.b16 %v1431, %v1430
        %vm1456 = vcmask 523264
        %v1458 = vsel %vm1456, %v1358, 0
        %1460 = vmatprep.subr.bf16.mxu0 0
        %1461 = vmatpush1.bf16.msra.mxu0 %v1432
        %1462 = vmatprep.subr.bf16.mxu0 0
        %1463 = vmatpush1.bf16.msra.mxu0 %v1433
        %1464 = vmatprep.subr.bf16.mxu0 0
        %1465 = vmatpush1.bf16.msra.mxu0 %v1434
        %1466 = vmatprep.subr.bf16.mxu0 0
        %1467 = vmatpush1.bf16.msra.mxu0 %v1435
        %1468 = vmatprep.subr.bf16.mxu0 0
        %1469 = vmatpush1.bf16.msra.mxu0 %v1436
        %1470 = vmatprep.subr.bf16.mxu0 0
        %1471 = vmatpush1.bf16.msra.mxu0 %v1437
        %1472 = vmatprep.subr.bf16.mxu0 0
        %1473 = vmatpush1.bf16.msra.mxu0 %v1438
        %1474 = vmatprep.subr.bf16.mxu0 0
        %1475 = vmatpush1.bf16.msra.mxu0 %v1439
        %1476 = vmatprep.subr.bf16.mxu0 0
        %1477 = vmatpush1.bf16.msra.mxu0 %v1440
        %1478 = vmatprep.subr.bf16.mxu0 0
        %1479 = vmatpush1.bf16.msra.mxu0 %v1441
        %1480 = vmatprep.subr.bf16.mxu0 0
        %1481 = vmatpush1.bf16.msra.mxu0 %v1442
        %1482 = vmatprep.subr.bf16.mxu0 0
        %1483 = vmatpush1.bf16.msra.mxu0 %v1443
        %1484 = vmatprep.subr.bf16.mxu0 0
        %1485 = vmatpush1.bf16.msra.mxu0 0
        %1486 = vmatprep.subr.bf16.mxu0 0
        %1487 = vmatpush1.bf16.msra.mxu0 0
        %1488 = vmatprep.subr.bf16.mxu0 0
        %1489 = vmatpush1.bf16.msra.mxu0 0
        %1490 = vmatprep.subr.bf16.mxu0 0
        %1491 = vmatpush1.bf16.msra.mxu0 0
        %1492 = vmatprep.mubr.bf16.mxu0 %v1458
        %1493 = vmatmul.mubr.bf16.gmra.mrb[0].mxu0 %v1357
        %v1494 = vpop.f32.mrb[0].mxu0
        %v1495 = vadd.f32 0.0, %v1494
        %v1496 = vpop.f32.mrb[0].mxu0
        %v1497 = vpop.f32.mrb[0].mxu0
        %v1498 = vpop.f32.mrb[0].mxu0
        %1499 = vdwg.mxu0
        %v1524 = vunpack.c.l.b16 %v827
        %v1525 = vunpack.c.l.b16 %v828
        %v1526 = vunpack.c.l.b16 %v829
        %v1527 = vunpack.c.l.b16 %v830
        %v1528 = vunpack.c.l.b16 %v831
        %v1529 = vunpack.c.l.b16 %v832
        %v1530 = vunpack.c.l.b16 %v833
        %v1531 = vunpack.c.l.b16 %v834
        %v1532 = vunpack.c.l.b16 %v835
        %v1533 = vunpack.c.l.b16 %v836
        %v1534 = vunpack.c.l.b16 %v837
        %v1535 = vunpack.c.l.b16 %v838
        %v1536 = vunpack.c.l.b16 %v839
        %v1537 = vunpack.c.l.b16 %v840
        %v1538 = vunpack.c.l.b16 %v841
        %v1539 = vunpack.c.l.b16 %v842
        %v1540 = vunpack.c.l.b16 %v843
        %v1541 = vunpack.c.l.b16 %v844
        %v1542 = vunpack.c.l.b16 %v845
        %v1543 = vunpack.c.l.b16 %v846
        %v1544 = vunpack.c.l.b16 %v847
        %v1545 = vunpack.c.l.b16 %v848
        %v1546 = vunpack.c.l.b16 %v849
        %v1547 = vunpack.c.l.b16 %v850
        %v1548 = vpack.c.b16 %v1525, %v1524
        %v1549 = vpack.c.b16 %v1527, %v1526
        %v1550 = vpack.c.b16 %v1529, %v1528
        %v1551 = vpack.c.b16 %v1531, %v1530
        %v1552 = vpack.c.b16 %v1533, %v1532
        %v1553 = vpack.c.b16 %v1535, %v1534
        %v1554 = vpack.c.b16 %v1537, %v1536
        %v1555 = vpack.c.b16 %v1539, %v1538
        %v1556 = vpack.c.b16 %v1541, %v1540
        %v1557 = vpack.c.b16 %v1543, %v1542
        %v1558 = vpack.c.b16 %v1545, %v1544
        %v1559 = vpack.c.b16 %v1547, %v1546
        %v1573 = vsel %vm1456, %v826, 0
        %1575 = vmatprep.subr.bf16.mxu0 0
        %1576 = vmatpush1.bf16.msra.mxu0 %v1548
        %1577 = vmatprep.subr.bf16.mxu0 0
        %1578 = vmatpush1.bf16.msra.mxu0 %v1549
        %1579 = vmatprep.subr.bf16.mxu0 0
        %1580 = vmatpush1.bf16.msra.mxu0 %v1550
        %1581 = vmatprep.subr.bf16.mxu0 0
        %1582 = vmatpush1.bf16.msra.mxu0 %v1551
        %1583 = vmatprep.subr.bf16.mxu0 0
        %1584 = vmatpush1.bf16.msra.mxu0 %v1552
        %1585 = vmatprep.subr.bf16.mxu0 0
        %1586 = vmatpush1.bf16.msra.mxu0 %v1553
        %1587 = vmatprep.subr.bf16.mxu0 0
        %1588 = vmatpush1.bf16.msra.mxu0 %v1554
        %1589 = vmatprep.subr.bf16.mxu0 0
        %1590 = vmatpush1.bf16.msra.mxu0 %v1555
        %1591 = vmatprep.subr.bf16.mxu0 0
        %1592 = vmatpush1.bf16.msra.mxu0 %v1556
        %1593 = vmatprep.subr.bf16.mxu0 0
        %1594 = vmatpush1.bf16.msra.mxu0 %v1557
        %1595 = vmatprep.subr.bf16.mxu0 0
        %1596 = vmatpush1.bf16.msra.mxu0 %v1558
        %1597 = vmatprep.subr.bf16.mxu0 0
        %1598 = vmatpush1.bf16.msra.mxu0 %v1559
        %1599 = vmatprep.subr.bf16.mxu0 0
        %1600 = vmatpush1.bf16.msra.mxu0 0
        %1601 = vmatprep.subr.bf16.mxu0 0
        %1602 = vmatpush1.bf16.msra.mxu0 0
        %1603 = vmatprep.subr.bf16.mxu0 0
        %1604 = vmatpush1.bf16.msra.mxu0 0
        %1605 = vmatprep.subr.bf16.mxu0 0
        %1606 = vmatpush1.bf16.msra.mxu0 0
        %1607 = vmatprep.mubr.bf16.mxu0 %v1573
        %1608 = vmatmul.mubr.bf16.gmra.mrb[0].mxu0 %v825
        %v1609 = vpop.f32.mrb[0].mxu0
        %v1610 = vadd.f32 %v1495, %v1609
        %v1611 = vpop.f32.mrb[0].mxu0
        %v1612 = vpop.f32.mrb[0].mxu0
        %v1613 = vpop.f32.mrb[0].mxu0
        %1614 = vdwg.mxu0
        %s1615 = scalar_lea.vmem %s253, 32
        %v1616 = vld [vmem:[%s1615] sm:$0xff]
        %v1617 = vld [vmem:[%s1615 + $0x8] sm:$0xff]
        %v1618 = vld [vmem:[%s1615 + $0x60] sm:$0xff]
        %v1619 = vld [vmem:[%s1615 + $0x68] sm:$0xff]
        %v1620 = vld [vmem:[%s1615 + $0xc0] sm:$0xff]
        %v1621 = vld [vmem:[%s1615 + $0xc8] sm:$0xff]
        %v1622 = vld [vmem:[%s1615 + $0x120] sm:$0xff]
        %v1623 = vld [vmem:[%s1615 + $0x128] sm:$0xff]
        %v1624 = vld [vmem:[%s1615 + $0x180] sm:$0xff]
        %v1625 = vld [vmem:[%s1615 + $0x188] sm:$0xff]
        %v1626 = vld [vmem:[%s1615 + $0x1e0] sm:$0xff]
        %v1627 = vld [vmem:[%s1615 + $0x1e8] sm:$0xff]
        %v1628 = vld [vmem:[%s1615 + $0x240] sm:$0xff]
        %v1629 = vld [vmem:[%s1615 + $0x248] sm:$0xff]
        %v1630 = vld [vmem:[%s1615 + $0x2a0] sm:$0xff]
        %v1631 = vld [vmem:[%s1615 + $0x2a8] sm:$0xff]
        %v1632 = vpack.c.bf16 %v1617, %v1616
        %v1633 = vpack.c.bf16 %v1619, %v1618
        %v1634 = vpack.c.bf16 %v1621, %v1620
        %v1635 = vpack.c.bf16 %v1623, %v1622
        %v1636 = vpack.c.bf16 %v1625, %v1624
        %v1637 = vpack.c.bf16 %v1627, %v1626
        %v1638 = vpack.c.bf16 %v1629, %v1628
        %v1639 = vpack.c.bf16 %v1631, %v1630
        %v1641 = vsel %vm292, %v1632, 0
        %v1644 = vsel %vm292, %v1633, 0
        %v1647 = vsel %vm292, %v1634, 0
        %v1650 = vsel %vm292, %v1635, 0
        %v1653 = vsel %vm292, %v1636, 0
        %v1656 = vsel %vm292, %v1637, 0
        %v1659 = vsel %vm292, %v1638, 0
        %v1662 = vsel %vm292, %v1639, 0
        %1664 = vmatprep.subr.bf16.mxu0 0
        %1665 = vmatpush1.bf16.msra.mxu0 %v319
        %1666 = vmatprep.subr.bf16.mxu0 0
        %1667 = vmatpush1.bf16.msra.mxu0 0
        %1668 = vmatprep.subr.bf16.mxu0 0
        %1669 = vmatpush1.bf16.msra.mxu0 0
        %1670 = vmatprep.subr.bf16.mxu0 0
        %1671 = vmatpush1.bf16.msra.mxu0 0
        %1672 = vmatprep.subr.bf16.mxu0 0
        %1673 = vmatpush1.bf16.msra.mxu0 0
        %1674 = vmatprep.subr.bf16.mxu0 0
        %1675 = vmatpush1.bf16.msra.mxu0 0
        %1676 = vmatprep.subr.bf16.mxu0 0
        %1677 = vmatpush1.bf16.msra.mxu0 0
        %1678 = vmatprep.subr.bf16.mxu0 0
        %1679 = vmatpush1.bf16.msra.mxu0 0
        %1680 = vmatprep.subr.bf16.mxu0 0
        %1681 = vmatpush1.bf16.msra.mxu0 0
        %1682 = vmatprep.subr.bf16.mxu0 0
        %1683 = vmatpush1.bf16.msra.mxu0 0
        %1684 = vmatprep.subr.bf16.mxu0 0
        %1685 = vmatpush1.bf16.msra.mxu0 0
        %1686 = vmatprep.subr.bf16.mxu0 0
        %1687 = vmatpush1.bf16.msra.mxu0 0
        %1688 = vmatprep.subr.bf16.mxu0 0
        %1689 = vmatpush1.bf16.msra.mxu0 0
        %1690 = vmatprep.subr.bf16.mxu0 0
        %1691 = vmatpush1.bf16.msra.mxu0 0
        %1692 = vmatprep.subr.bf16.mxu0 0
        %1693 = vmatpush1.bf16.msra.mxu0 0
        %1694 = vmatprep.subr.bf16.mxu0 0
        %1695 = vmatpush1.bf16.msra.mxu0 0
        %1696 = vmatprep.mubr.bf16.mxu0 0
        %1697 = vmatmul.mubr.bf16.gmra.mrb[0].mxu0 %v1641
        %v1698 = vpop.f32.mrb[0].mxu0
        %v1699 = vadd.f32 0.0, %v1698
        %v1700 = vpop.f32.mrb[0].mxu0
        %v1701 = vpop.f32.mrb[0].mxu0
        %v1702 = vadd.f32 0.0, %v1701
        %v1703 = vpop.f32.mrb[0].mxu0
        %1704 = vmatprep.mubr.bf16.mxu0 0
        %1705 = vmatmul.mubr.bf16.gmra.mrb[0].mxu0 %v1644
        %v1706 = vpop.f32.mrb[0].mxu0
        %v1707 = vadd.f32 0.0, %v1706
        %v1708 = vpop.f32.mrb[0].mxu0
        %v1709 = vpop.f32.mrb[0].mxu0
        %v1710 = vadd.f32 0.0, %v1709
        %v1711 = vpop.f32.mrb[0].mxu0
        %1712 = vmatprep.mubr.bf16.mxu0 0
        %1713 = vmatmul.mubr.bf16.gmra.mrb[0].mxu0 %v1647
        %v1714 = vpop.f32.mrb[0].mxu0
        %v1715 = vadd.f32 0.0, %v1714
        %v1716 = vpop.f32.mrb[0].mxu0
        %v1717 = vpop.f32.mrb[0].mxu0
        %v1718 = vadd.f32 0.0, %v1717
        %v1719 = vpop.f32.mrb[0].mxu0
        %1720 = vmatprep.mubr.bf16.mxu0 0
        %1721 = vmatmul.mubr.bf16.gmra.mrb[0].mxu0 %v1650
        %v1722 = vpop.f32.mrb[0].mxu0
        %v1723 = vadd.f32 0.0, %v1722
        %v1724 = vpop.f32.mrb[0].mxu0
        %v1725 = vpop.f32.mrb[0].mxu0
        %v1726 = vadd.f32 0.0, %v1725
        %v1727 = vpop.f32.mrb[0].mxu0
        %1728 = vmatprep.mubr.bf16.mxu0 0
        %1729 = vmatmul.mubr.bf16.gmra.mrb[0].mxu0 %v1653
        %v1730 = vpop.f32.mrb[0].mxu0
        %v1731 = vadd.f32 0.0, %v1730
        %v1732 = vpop.f32.mrb[0].mxu0
        %v1733 = vpop.f32.mrb[0].mxu0
        %v1734 = vadd.f32 0.0, %v1733
        %v1735 = vpop.f32.mrb[0].mxu0
        %1736 = vmatprep.mubr.bf16.mxu0 0
        %1737 = vmatmul.mubr.bf16.gmra.mrb[0].mxu0 %v1656
        %v1738 = vpop.f32.mrb[0].mxu0
        %v1739 = vadd.f32 0.0, %v1738
        %v1740 = vpop.f32.mrb[0].mxu0
        %v1741 = vpop.f32.mrb[0].mxu0
        %v1742 = vadd.f32 0.0, %v1741
        %v1743 = vpop.f32.mrb[0].mxu0
        %1744 = vmatprep.mubr.bf16.mxu0 0
        %1745 = vmatmul.mubr.bf16.gmra.mrb[0].mxu0 %v1659
        %v1746 = vpop.f32.mrb[0].mxu0
        %v1747 = vadd.f32 0.0, %v1746
        %v1748 = vpop.f32.mrb[0].mxu0
        %v1749 = vpop.f32.mrb[0].mxu0
        %v1750 = vadd.f32 0.0, %v1749
        %v1751 = vpop.f32.mrb[0].mxu0
        %1752 = vmatprep.mubr.bf16.mxu0 0
        %1753 = vmatmul.mubr.bf16.gmra.mrb[0].mxu0 %v1662
        %v1754 = vpop.f32.mrb[0].mxu0
        %v1755 = vadd.f32 0.0, %v1754
        %v1756 = vpop.f32.mrb[0].mxu0
        %v1757 = vpop.f32.mrb[0].mxu0
        %v1758 = vadd.f32 0.0, %v1757
        %v1759 = vpop.f32.mrb[0].mxu0
        %1760 = vdwg.mxu0
        %v1761 = vmul.f32 %v1699, %v256
        %v1762 = vmul.f32 %v1702, %v256
        %v1763 = vmul.f32 %v1707, %v256
        %v1764 = vmul.f32 %v1710, %v256
        %v1765 = vmul.f32 %v1715, %v256
        %v1766 = vmul.f32 %v1718, %v256
        %v1767 = vmul.f32 %v1723, %v256
        %v1768 = vmul.f32 %v1726, %v256
        %v1769 = vmul.f32 %v1731, %v256
        %v1770 = vmul.f32 %v1734, %v256
        %v1771 = vmul.f32 %v1739, %v256
        %v1772 = vmul.f32 %v1742, %v256
        %v1773 = vmul.f32 %v1747, %v256
        %v1774 = vmul.f32 %v1750, %v256
        %v1775 = vmul.f32 %v1755, %v256
        %v1776 = vmul.f32 %v1758, %v256
        %v1777 = vadd.f32 %v1761, %v257
        %v1778 = vadd.f32 %v1762, %v257
        %v1779 = vadd.f32 %v1763, %v257
        %v1780 = vadd.f32 %v1764, %v257
        %v1781 = vadd.f32 %v1765, %v257
        %v1782 = vadd.f32 %v1766, %v257
        %v1783 = vadd.f32 %v1767, %v257
        %v1784 = vadd.f32 %v1768, %v257
        %v1785 = vadd.f32 %v1769, %v257
        %v1786 = vadd.f32 %v1770, %v257
        %v1787 = vadd.f32 %v1771, %v257
        %v1788 = vadd.f32 %v1772, %v257
        %v1789 = vadd.f32 %v1773, %v257
        %v1790 = vadd.f32 %v1774, %v257
        %v1791 = vadd.f32 %v1775, %v257
        %v1792 = vadd.f32 %v1776, %v257
        %v1793 = vmax.f32 %v1777, 0.0
        %v1794 = vmax.f32 %v1778, 0.0
        %v1795 = vmax.f32 %v1779, 0.0
        %v1796 = vmax.f32 %v1780, 0.0
        %v1797 = vmax.f32 %v1781, 0.0
        %v1798 = vmax.f32 %v1782, 0.0
        %v1799 = vmax.f32 %v1783, 0.0
        %v1800 = vmax.f32 %v1784, 0.0
        %v1801 = vmax.f32 %v1785, 0.0
        %v1802 = vmax.f32 %v1786, 0.0
        %v1803 = vmax.f32 %v1787, 0.0
        %v1804 = vmax.f32 %v1788, 0.0
        %v1805 = vmax.f32 %v1789, 0.0
        %v1806 = vmax.f32 %v1790, 0.0
        %v1807 = vmax.f32 %v1791, 0.0
        %v1808 = vmax.f32 %v1792, 0.0
        %v1809 = vpack.c.bf16 %v1794, %v1793
        %v1810 = vpack.c.bf16 %v1796, %v1795
        %v1811 = vpack.c.bf16 %v1798, %v1797
        %v1812 = vpack.c.bf16 %v1800, %v1799
        %v1813 = vpack.c.bf16 %v1802, %v1801
        %v1814 = vpack.c.bf16 %v1804, %v1803
        %v1815 = vpack.c.bf16 %v1806, %v1805
        %v1816 = vpack.c.bf16 %v1808, %v1807
        %v1818 = vsel %vm498, %v1809, 0
        %v1821 = vsel %vm498, %v1810, 0
        %v1824 = vsel %vm498, %v1811, 0
        %v1827 = vsel %vm498, %v1812, 0
        %v1830 = vsel %vm498, %v1813, 0
        %v1833 = vsel %vm498, %v1814, 0
        %v1836 = vsel %vm498, %v1815, 0
        %v1839 = vsel %vm498, %v1816, 0
        %1841 = vmatprep.subr.bf16.mxu0 %v491
        %1842 = vmatpush1.bf16.msra.mxu0 %v490
        %1843 = vmatprep.subr.bf16.mxu0 %v493
        %1844 = vmatpush1.bf16.msra.mxu0 %v492
        %1845 = vmatprep.subr.bf16.mxu0 0
        %1846 = vmatpush1.bf16.msra.mxu0 0
        %1847 = vmatprep.subr.bf16.mxu0 0
        %1848 = vmatpush1.bf16.msra.mxu0 0
        %1849 = vmatprep.subr.bf16.mxu0 0
        %1850 = vmatpush1.bf16.msra.mxu0 0
        %1851 = vmatprep.subr.bf16.mxu0 0
        %1852 = vmatpush1.bf16.msra.mxu0 0
        %1853 = vmatprep.subr.bf16.mxu0 0
        %1854 = vmatpush1.bf16.msra.mxu0 0
        %1855 = vmatprep.subr.bf16.mxu0 0
        %1856 = vmatpush1.bf16.msra.mxu0 0
        %1857 = vmatprep.subr.bf16.mxu0 0
        %1858 = vmatpush1.bf16.msra.mxu0 0
        %1859 = vmatprep.subr.bf16.mxu0 0
        %1860 = vmatpush1.bf16.msra.mxu0 0
        %1861 = vmatprep.subr.bf16.mxu0 0
        %1862 = vmatpush1.bf16.msra.mxu0 0
        %1863 = vmatprep.subr.bf16.mxu0 0
        %1864 = vmatpush1.bf16.msra.mxu0 0
        %1865 = vmatprep.subr.bf16.mxu0 0
        %1866 = vmatpush1.bf16.msra.mxu0 0
        %1867 = vmatprep.subr.bf16.mxu0 0
        %1868 = vmatpush1.bf16.msra.mxu0 0
        %1869 = vmatprep.subr.bf16.mxu0 0
        %1870 = vmatpush1.bf16.msra.mxu0 0
        %1871 = vmatprep.subr.bf16.mxu0 0
        %1872 = vmatpush1.bf16.msra.mxu0 0
        %1873 = vmatprep.mubr.bf16.mxu0 0
        %1874 = vmatmul.mubr.bf16.gmra.mrb[0].mxu0 %v1818
        %v1875 = vpop.f32.mrb[0].mxu0
        %v1876 = vadd.f32 0.0, %v1875
        %v1877 = vpop.f32.mrb[0].mxu0
        %v1878 = vadd.f32 0.0, %v1877
        %v1879 = vpop.f32.mrb[0].mxu0
        %v1880 = vadd.f32 0.0, %v1879
        %v1881 = vpop.f32.mrb[0].mxu0
        %v1882 = vadd.f32 0.0, %v1881
        %1883 = vmatprep.mubr.bf16.mxu0 0
        %1884 = vmatmul.mubr.bf16.gmra.mrb[0].mxu0 %v1821
        %v1885 = vpop.f32.mrb[0].mxu0
        %v1886 = vadd.f32 0.0, %v1885
        %v1887 = vpop.f32.mrb[0].mxu0
        %v1888 = vadd.f32 0.0, %v1887
        %v1889 = vpop.f32.mrb[0].mxu0
        %v1890 = vadd.f32 0.0, %v1889
        %v1891 = vpop.f32.mrb[0].mxu0
        %v1892 = vadd.f32 0.0, %v1891
        %1893 = vmatprep.mubr.bf16.mxu0 0
        %1894 = vmatmul.mubr.bf16.gmra.mrb[0].mxu0 %v1824
        %v1895 = vpop.f32.mrb[0].mxu0
        %v1896 = vadd.f32 0.0, %v1895
        %v1897 = vpop.f32.mrb[0].mxu0
        %v1898 = vadd.f32 0.0, %v1897
        %v1899 = vpop.f32.mrb[0].mxu0
        %v1900 = vadd.f32 0.0, %v1899
        %v1901 = vpop.f32.mrb[0].mxu0
        %v1902 = vadd.f32 0.0, %v1901
        %1903 = vmatprep.mubr.bf16.mxu0 0
        %1904 = vmatmul.mubr.bf16.gmra.mrb[0].mxu0 %v1827
        %v1905 = vpop.f32.mrb[0].mxu0
        %v1906 = vadd.f32 0.0, %v1905
        %v1907 = vpop.f32.mrb[0].mxu0
        %v1908 = vadd.f32 0.0, %v1907
        %v1909 = vpop.f32.mrb[0].mxu0
        %v1910 = vadd.f32 0.0, %v1909
        %v1911 = vpop.f32.mrb[0].mxu0
        %v1912 = vadd.f32 0.0, %v1911
        %1913 = vmatprep.mubr.bf16.mxu0 0
        %1914 = vmatmul.mubr.bf16.gmra.mrb[0].mxu0 %v1830
        %v1915 = vpop.f32.mrb[0].mxu0
        %v1916 = vadd.f32 0.0, %v1915
        %v1917 = vpop.f32.mrb[0].mxu0
        %v1918 = vadd.f32 0.0, %v1917
        %v1919 = vpop.f32.mrb[0].mxu0
        %v1920 = vadd.f32 0.0, %v1919
        %v1921 = vpop.f32.mrb[0].mxu0
        %v1922 = vadd.f32 0.0, %v1921
        %1923 = vmatprep.mubr.bf16.mxu0 0
        %1924 = vmatmul.mubr.bf16.gmra.mrb[0].mxu0 %v1833
        %v1925 = vpop.f32.mrb[0].mxu0
        %v1926 = vadd.f32 0.0, %v1925
        %v1927 = vpop.f32.mrb[0].mxu0
        %v1928 = vadd.f32 0.0, %v1927
        %v1929 = vpop.f32.mrb[0].mxu0
        %v1930 = vadd.f32 0.0, %v1929
        %v1931 = vpop.f32.mrb[0].mxu0
        %v1932 = vadd.f32 0.0, %v1931
        %1933 = vmatprep.mubr.bf16.mxu0 0
        %1934 = vmatmul.mubr.bf16.gmra.mrb[0].mxu0 %v1836
        %v1935 = vpop.f32.mrb[0].mxu0
        %v1936 = vadd.f32 0.0, %v1935
        %v1937 = vpop.f32.mrb[0].mxu0
        %v1938 = vadd.f32 0.0, %v1937
        %v1939 = vpop.f32.mrb[0].mxu0
        %v1940 = vadd.f32 0.0, %v1939
        %v1941 = vpop.f32.mrb[0].mxu0
        %v1942 = vadd.f32 0.0, %v1941
        %1943 = vmatprep.mubr.bf16.mxu0 0
        %1944 = vmatmul.mubr.bf16.gmra.mrb[0].mxu0 %v1839
        %v1945 = vpop.f32.mrb[0].mxu0
        %v1946 = vadd.f32 0.0, %v1945
        %v1947 = vpop.f32.mrb[0].mxu0
        %v1948 = vadd.f32 0.0, %v1947
        %v1949 = vpop.f32.mrb[0].mxu0
        %v1950 = vadd.f32 0.0, %v1949
        %v1951 = vpop.f32.mrb[0].mxu0
        %v1952 = vadd.f32 0.0, %v1951
        %1953 = vdwg.mxu0
        %v1954 = vmul.f32 %v1876, %v640
        %v1955 = vmul.f32 %v1878, %v644
        %v1956 = vmul.f32 %v1880, %v640
        %v1957 = vmul.f32 %v1882, %v644
        %v1958 = vmul.f32 %v1886, %v640
        %v1959 = vmul.f32 %v1888, %v644
        %v1960 = vmul.f32 %v1890, %v640
        %v1961 = vmul.f32 %v1892, %v644
        %v1962 = vmul.f32 %v1896, %v640
        %v1963 = vmul.f32 %v1898, %v644
        %v1964 = vmul.f32 %v1900, %v640
        %v1965 = vmul.f32 %v1902, %v644
        %v1966 = vmul.f32 %v1906, %v640
        %v1967 = vmul.f32 %v1908, %v644
        %v1968 = vmul.f32 %v1910, %v640
        %v1969 = vmul.f32 %v1912, %v644
        %v1970 = vmul.f32 %v1916, %v640
        %v1971 = vmul.f32 %v1918, %v644
        %v1972 = vmul.f32 %v1920, %v640
        %v1973 = vmul.f32 %v1922, %v644
        %v1974 = vmul.f32 %v1926, %v640
        %v1975 = vmul.f32 %v1928, %v644
        %v1976 = vmul.f32 %v1930, %v640
        %v1977 = vmul.f32 %v1932, %v644
        %v1978 = vmul.f32 %v1936, %v640
        %v1979 = vmul.f32 %v1938, %v644
        %v1980 = vmul.f32 %v1940, %v640
        %v1981 = vmul.f32 %v1942, %v644
        %v1982 = vmul.f32 %v1946, %v640
        %v1983 = vmul.f32 %v1948, %v644
        %v1984 = vmul.f32 %v1950, %v640
        %v1985 = vmul.f32 %v1952, %v644
        %v1986 = vadd.f32 %v1954, %v683
        %v1987 = vadd.f32 %v1955, %v687
        %v1988 = vadd.f32 %v1956, %v683
        %v1989 = vadd.f32 %v1957, %v687
        %v1990 = vadd.f32 %v1958, %v683
        %v1991 = vadd.f32 %v1959, %v687
        %v1992 = vadd.f32 %v1960, %v683
        %v1993 = vadd.f32 %v1961, %v687
        %v1994 = vadd.f32 %v1962, %v683
        %v1995 = vadd.f32 %v1963, %v687
        %v1996 = vadd.f32 %v1964, %v683
        %v1997 = vadd.f32 %v1965, %v687
        %v1998 = vadd.f32 %v1966, %v683
        %v1999 = vadd.f32 %v1967, %v687
        %v2000 = vadd.f32 %v1968, %v683
        %v2001 = vadd.f32 %v1969, %v687
        %v2002 = vadd.f32 %v1970, %v683
        %v2003 = vadd.f32 %v1971, %v687
        %v2004 = vadd.f32 %v1972, %v683
        %v2005 = vadd.f32 %v1973, %v687
        %v2006 = vadd.f32 %v1974, %v683
        %v2007 = vadd.f32 %v1975, %v687
        %v2008 = vadd.f32 %v1976, %v683
        %v2009 = vadd.f32 %v1977, %v687
        %v2010 = vadd.f32 %v1978, %v683
        %v2011 = vadd.f32 %v1979, %v687
        %v2012 = vadd.f32 %v1980, %v683
        %v2013 = vadd.f32 %v1981, %v687
        %v2014 = vadd.f32 %v1982, %v683
        %v2015 = vadd.f32 %v1983, %v687
        %v2016 = vadd.f32 %v1984, %v683
        %v2017 = vadd.f32 %v1985, %v687
        %v2018 = vmax.f32 %v1986, 0.0
        %v2019 = vmax.f32 %v1987, 0.0
        %v2020 = vmax.f32 %v1988, 0.0
        %v2021 = vmax.f32 %v1989, 0.0
        %v2022 = vmax.f32 %v1990, 0.0
        %v2023 = vmax.f32 %v1991, 0.0
        %v2024 = vmax.f32 %v1992, 0.0
        %v2025 = vmax.f32 %v1993, 0.0
        %v2026 = vmax.f32 %v1994, 0.0
        %v2027 = vmax.f32 %v1995, 0.0
        %v2028 = vmax.f32 %v1996, 0.0
        %v2029 = vmax.f32 %v1997, 0.0
        %v2030 = vmax.f32 %v1998, 0.0
        %v2031 = vmax.f32 %v1999, 0.0
        %v2032 = vmax.f32 %v2000, 0.0
        %v2033 = vmax.f32 %v2001, 0.0
        %v2034 = vmax.f32 %v2002, 0.0
        %v2035 = vmax.f32 %v2003, 0.0
        %v2036 = vmax.f32 %v2004, 0.0
        %v2037 = vmax.f32 %v2005, 0.0
        %v2038 = vmax.f32 %v2006, 0.0
        %v2039 = vmax.f32 %v2007, 0.0
        %v2040 = vmax.f32 %v2008, 0.0
        %v2041 = vmax.f32 %v2009, 0.0
        %v2042 = vmax.f32 %v2010, 0.0
        %v2043 = vmax.f32 %v2011, 0.0
        %v2044 = vmax.f32 %v2012, 0.0
        %v2045 = vmax.f32 %v2013, 0.0
        %v2046 = vmax.f32 %v2014, 0.0
        %v2047 = vmax.f32 %v2015, 0.0
        %v2048 = vmax.f32 %v2016, 0.0
        %v2049 = vmax.f32 %v2017, 0.0
        %2050 = vmatprep.subr.mxu0 %v2019
        %2051 = vmatpush1.msra.mxu0 %v2018
        %2052 = vmatprep.subr.mxu0 %v2021
        %2053 = vmatpush1.msra.mxu0 %v2020
        %2054 = vmatprep.subr.mxu0 %v2023
        %2055 = vmatpush1.msra.mxu0 %v2022
        %2056 = vmatprep.subr.mxu0 %v2025
        %2057 = vmatpush1.msra.mxu0 %v2024
        %2058 = vmatprep.subr.mxu0 %v2027
        %2059 = vmatpush1.msra.mxu0 %v2026
        %2060 = vmatprep.subr.mxu0 %v2029
        %2061 = vmatpush1.msra.mxu0 %v2028
        %2062 = vmatprep.subr.mxu0 %v2031
        %2063 = vmatpush1.msra.mxu0 %v2030
        %2064 = vmatprep.subr.mxu0 %v2033
        %2065 = vmatpush1.msra.mxu0 %v2032
        %2066 = vmatprep.subr.mxu0 %v2035
        %2067 = vmatpush1.msra.mxu0 %v2034
        %2068 = vmatprep.subr.mxu0 %v2037
        %2069 = vmatpush1.msra.mxu0 %v2036
        %2070 = vmatprep.subr.mxu0 %v2039
        %2071 = vmatpush1.msra.mxu0 %v2038
        %2072 = vmatprep.subr.mxu0 %v2041
        %2073 = vmatpush1.msra.mxu0 %v2040
        %2074 = vmatprep.subr.mxu0 %v2043
        %2075 = vmatpush1.msra.mxu0 %v2042
        %2076 = vmatprep.subr.mxu0 %v2045
        %2077 = vmatpush1.msra.mxu0 %v2044
        %2078 = vmatprep.subr.mxu0 %v2047
        %2079 = vmatpush1.msra.mxu0 %v2046
        %2080 = vmatprep.subr.mxu0 %v2049
        %2081 = vmatpush1.msra.mxu0 %v2048
        %2082 = vmatprep.subr.mxu0 0.0
        %2083 = vmatpush1.msra.mxu0 0.0
        %2084 = vmatprep.subr.mxu0 0.0
        %2085 = vmatpush1.msra.mxu0 0.0
        %2086 = vmatprep.subr.mxu0 0.0
        %2087 = vmatpush1.msra.mxu0 0.0
        %2088 = vmatprep.subr.mxu0 0.0
        %2089 = vmatpush1.msra.mxu0 0.0
        %2090 = vmatprep.subr.mxu0 0.0
        %2091 = vmatpush1.msra.mxu0 0.0
        %2092 = vmatprep.subr.mxu0 0.0
        %2093 = vmatpush1.msra.mxu0 0.0
        %2094 = vmatprep.subr.mxu0 0.0
        %2095 = vmatpush1.msra.mxu0 0.0
        %2096 = vmatprep.subr.mxu0 0.0
        %2097 = vmatpush1.msra.mxu0 0.0
        %2098 = vmatprep.subr.mxu0 0.0
        %2099 = vmatpush1.msra.mxu0 0.0
        %2100 = vmatprep.subr.mxu0 0.0
        %2101 = vmatpush1.msra.mxu0 0.0
        %2102 = vmatprep.subr.mxu0 0.0
        %2103 = vmatpush1.msra.mxu0 0.0
        %2104 = vmatprep.subr.mxu0 0.0
        %2105 = vmatpush1.msra.mxu0 0.0
        %2106 = vmatprep.subr.mxu0 0.0
        %2107 = vmatpush1.msra.mxu0 0.0
        %2108 = vmatprep.subr.mxu0 0.0
        %2109 = vmatpush1.msra.mxu0 0.0
        %2110 = vmatprep.subr.mxu0 0.0
        %2111 = vmatpush1.msra.mxu0 0.0
        %2112 = vmatprep.subr.mxu0 0.0
        %2113 = vmatpush1.msra.mxu0 0.0
        %2114 = vmatprep.mubr.f32.mxu0 0.0
        %2115 = vmatmul.mubr.f32.gmra.mrb[0].mxu0 %v266
        %v2116 = vpop.f32.mrb[0].mxu0
        %v2117 = vadd.f32 0.0, %v2116
        %v2118 = vpop.f32.mrb[0].mxu0
        %v2119 = vadd.f32 0.0, %v2118
        %2120 = vdwg.mxu0
        %v2121 = vpack.c.bf16 %v2117, %v2117
        %v2122 = vpack.c.bf16 %v2119, %v2119
        %s2123 = scalar_lea.vmem %s4, 192
        %v2124 = vld [vmem:[%s2123] sm:$0xf]
        %v2125 = vld [vmem:[%s2123 + $0x4] sm:$0xf]
        %v2126 = vld [vmem:[%s2123 + $0x8] sm:$0xf]
        %v2127 = vld [vmem:[%s2123 + $0xc] sm:$0xf]
        %v2128 = vld [vmem:[%s2123 + $0x10] sm:$0xf]
        %v2129 = vld [vmem:[%s2123 + $0x14] sm:$0xf]
        %v2130 = vld [vmem:[%s2123 + $0x18] sm:$0xf]
        %v2131 = vld [vmem:[%s2123 + $0x1c] sm:$0xf]
        %v2132 = vld [vmem:[%s2123 + $0x20] sm:$0xf]
        %v2133 = vld [vmem:[%s2123 + $0x24] sm:$0xf]
        %v2134 = vld [vmem:[%s2123 + $0x28] sm:$0xf]
        %v2135 = vld [vmem:[%s2123 + $0x2c] sm:$0xf]
        %v2136 = vld [vmem:[%s2123 + $0x30] sm:$0xf]
        %v2137 = vld [vmem:[%s2123 + $0x34] sm:$0xf]
        %v2138 = vld [vmem:[%s2123 + $0x38] sm:$0xf]
        %v2139 = vld [vmem:[%s2123 + $0x3c] sm:$0xf]
        %v2140 = vld [vmem:[%s2123 + $0x40] sm:$0xf]
        %v2141 = vld [vmem:[%s2123 + $0x44] sm:$0xf]
        %v2142 = vld [vmem:[%s2123 + $0x48] sm:$0xf]
        %v2143 = vld [vmem:[%s2123 + $0x4c] sm:$0xf]
        %v2144 = vld [vmem:[%s2123 + $0x50] sm:$0xf]
        %v2145 = vld [vmem:[%s2123 + $0x54] sm:$0xf]
        %v2146 = vld [vmem:[%s2123 + $0x58] sm:$0xf]
        %v2147 = vld [vmem:[%s2123 + $0x5c] sm:$0xf]
        %v2172 = vunpack.c.l.b16 %v2124
        %v2173 = vunpack.c.l.b16 %v2125
        %v2174 = vunpack.c.l.b16 %v2126
        %v2175 = vunpack.c.l.b16 %v2127
        %v2176 = vunpack.c.l.b16 %v2128
        %v2177 = vunpack.c.l.b16 %v2129
        %v2178 = vunpack.c.l.b16 %v2130
        %v2179 = vunpack.c.l.b16 %v2131
        %v2180 = vunpack.c.l.b16 %v2132
        %v2181 = vunpack.c.l.b16 %v2133
        %v2182 = vunpack.c.l.b16 %v2134
        %v2183 = vunpack.c.l.b16 %v2135
        %v2184 = vunpack.c.l.b16 %v2136
        %v2185 = vunpack.c.l.b16 %v2137
        %v2186 = vunpack.c.l.b16 %v2138
        %v2187 = vunpack.c.l.b16 %v2139
        %v2188 = vunpack.c.l.b16 %v2140
        %v2189 = vunpack.c.l.b16 %v2141
        %v2190 = vunpack.c.l.b16 %v2142
        %v2191 = vunpack.c.l.b16 %v2143
        %v2192 = vunpack.c.l.b16 %v2144
        %v2193 = vunpack.c.l.b16 %v2145
        %v2194 = vunpack.c.l.b16 %v2146
        %v2195 = vunpack.c.l.b16 %v2147
        %v2196 = vpack.c.b16 %v2173, %v2172
        %v2197 = vpack.c.b16 %v2175, %v2174
        %v2198 = vpack.c.b16 %v2177, %v2176
        %v2199 = vpack.c.b16 %v2179, %v2178
        %v2200 = vpack.c.b16 %v2181, %v2180
        %v2201 = vpack.c.b16 %v2183, %v2182
        %v2202 = vpack.c.b16 %v2185, %v2184
        %v2203 = vpack.c.b16 %v2187, %v2186
        %v2204 = vpack.c.b16 %v2189, %v2188
        %v2205 = vpack.c.b16 %v2191, %v2190
        %v2206 = vpack.c.b16 %v2193, %v2192
        %v2207 = vpack.c.b16 %v2195, %v2194
        %v2221 = vsel %vm1456, %v2122, 0
        %2223 = vmatprep.subr.bf16.mxu0 0
        %2224 = vmatpush1.bf16.msra.mxu0 %v2196
        %2225 = vmatprep.subr.bf16.mxu0 0
        %2226 = vmatpush1.bf16.msra.mxu0 %v2197
        %2227 = vmatprep.subr.bf16.mxu0 0
        %2228 = vmatpush1.bf16.msra.mxu0 %v2198
        %2229 = vmatprep.subr.bf16.mxu0 0
        %2230 = vmatpush1.bf16.msra.mxu0 %v2199
        %2231 = vmatprep.subr.bf16.mxu0 0
        %2232 = vmatpush1.bf16.msra.mxu0 %v2200
        %2233 = vmatprep.subr.bf16.mxu0 0
        %2234 = vmatpush1.bf16.msra.mxu0 %v2201
        %2235 = vmatprep.subr.bf16.mxu0 0
        %2236 = vmatpush1.bf16.msra.mxu0 %v2202
        %2237 = vmatprep.subr.bf16.mxu0 0
        %2238 = vmatpush1.bf16.msra.mxu0 %v2203
        %2239 = vmatprep.subr.bf16.mxu0 0
        %2240 = vmatpush1.bf16.msra.mxu0 %v2204
        %2241 = vmatprep.subr.bf16.mxu0 0
        %2242 = vmatpush1.bf16.msra.mxu0 %v2205
        %2243 = vmatprep.subr.bf16.mxu0 0
        %2244 = vmatpush1.bf16.msra.mxu0 %v2206
        %2245 = vmatprep.subr.bf16.mxu0 0
        %2246 = vmatpush1.bf16.msra.mxu0 %v2207
        %2247 = vmatprep.subr.bf16.mxu0 0
        %2248 = vmatpush1.bf16.msra.mxu0 0
        %2249 = vmatprep.subr.bf16.mxu0 0
        %2250 = vmatpush1.bf16.msra.mxu0 0
        %2251 = vmatprep.subr.bf16.mxu0 0
        %2252 = vmatpush1.bf16.msra.mxu0 0
        %2253 = vmatprep.subr.bf16.mxu0 0
        %2254 = vmatpush1.bf16.msra.mxu0 0
        %2255 = vmatprep.mubr.bf16.mxu0 %v2221
        %2256 = vmatmul.mubr.bf16.gmra.mrb[0].mxu0 %v2121
        %v2257 = vpop.f32.mrb[0].mxu0
        %v2258 = vadd.f32 0.0, %v2257
        %v2259 = vpop.f32.mrb[0].mxu0
        %v2260 = vpop.f32.mrb[0].mxu0
        %v2261 = vpop.f32.mrb[0].mxu0
        %2262 = vdwg.mxu0
        %v2263 = vadd.f32 %v1610, %v2258
        %s2264 = scalar_lea.vmem %s253, 48
        %v2265 = vld [vmem:[%s2264] sm:$0xff]
        %v2266 = vld [vmem:[%s2264 + $0x8] sm:$0xff]
        %v2267 = vld [vmem:[%s2264 + $0x60] sm:$0xff]
        %v2268 = vld [vmem:[%s2264 + $0x68] sm:$0xff]
        %v2269 = vld [vmem:[%s2264 + $0xc0] sm:$0xff]
        %v2270 = vld [vmem:[%s2264 + $0xc8] sm:$0xff]
        %v2271 = vld [vmem:[%s2264 + $0x120] sm:$0xff]
        %v2272 = vld [vmem:[%s2264 + $0x128] sm:$0xff]
        %v2273 = vld [vmem:[%s2264 + $0x180] sm:$0xff]
        %v2274 = vld [vmem:[%s2264 + $0x188] sm:$0xff]
        %v2275 = vld [vmem:[%s2264 + $0x1e0] sm:$0xff]
        %v2276 = vld [vmem:[%s2264 + $0x1e8] sm:$0xff]
        %v2277 = vld [vmem:[%s2264 + $0x240] sm:$0xff]
        %v2278 = vld [vmem:[%s2264 + $0x248] sm:$0xff]
        %v2279 = vld [vmem:[%s2264 + $0x2a0] sm:$0xff]
        %v2280 = vld [vmem:[%s2264 + $0x2a8] sm:$0xff]
        %v2281 = vpack.c.bf16 %v2266, %v2265
        %v2282 = vpack.c.bf16 %v2268, %v2267
        %v2283 = vpack.c.bf16 %v2270, %v2269
        %v2284 = vpack.c.bf16 %v2272, %v2271
        %v2285 = vpack.c.bf16 %v2274, %v2273
        %v2286 = vpack.c.bf16 %v2276, %v2275
        %v2287 = vpack.c.bf16 %v2278, %v2277
        %v2288 = vpack.c.bf16 %v2280, %v2279
        %v2290 = vsel %vm292, %v2281, 0
        %v2293 = vsel %vm292, %v2282, 0
        %v2296 = vsel %vm292, %v2283, 0
        %v2299 = vsel %vm292, %v2284, 0
        %v2302 = vsel %vm292, %v2285, 0
        %v2305 = vsel %vm292, %v2286, 0
        %v2308 = vsel %vm292, %v2287, 0
        %v2311 = vsel %vm292, %v2288, 0
        %2313 = vmatprep.subr.bf16.mxu0 0
        %2314 = vmatpush1.bf16.msra.mxu0 %v319
        %2315 = vmatprep.subr.bf16.mxu0 0
        %2316 = vmatpush1.bf16.msra.mxu0 0
        %2317 = vmatprep.subr.bf16.mxu0 0
        %2318 = vmatpush1.bf16.msra.mxu0 0
        %2319 = vmatprep.subr.bf16.mxu0 0
        %2320 = vmatpush1.bf16.msra.mxu0 0
        %2321 = vmatprep.subr.bf16.mxu0 0
        %2322 = vmatpush1.bf16.msra.mxu0 0
        %2323 = vmatprep.subr.bf16.mxu0 0
        %2324 = vmatpush1.bf16.msra.mxu0 0
        %2325 = vmatprep.subr.bf16.mxu0 0
        %2326 = vmatpush1.bf16.msra.mxu0 0
        %2327 = vmatprep.subr.bf16.mxu0 0
        %2328 = vmatpush1.bf16.msra.mxu0 0
        %2329 = vmatprep.subr.bf16.mxu0 0
        %2330 = vmatpush1.bf16.msra.mxu0 0
        %2331 = vmatprep.subr.bf16.mxu0 0
        %2332 = vmatpush1.bf16.msra.mxu0 0
        %2333 = vmatprep.subr.bf16.mxu0 0
        %2334 = vmatpush1.bf16.msra.mxu0 0
        %2335 = vmatprep.subr.bf16.mxu0 0
        %2336 = vmatpush1.bf16.msra.mxu0 0
        %2337 = vmatprep.subr.bf16.mxu0 0
        %2338 = vmatpush1.bf16.msra.mxu0 0
        %2339 = vmatprep.subr.bf16.mxu0 0
        %2340 = vmatpush1.bf16.msra.mxu0 0
        %2341 = vmatprep.subr.bf16.mxu0 0
        %2342 = vmatpush1.bf16.msra.mxu0 0
        %2343 = vmatprep.subr.bf16.mxu0 0
        %2344 = vmatpush1.bf16.msra.mxu0 0
        %2345 = vmatprep.mubr.bf16.mxu0 0
        %2346 = vmatmul.mubr.bf16.gmra.mrb[0].mxu0 %v2290
        %v2347 = vpop.f32.mrb[0].mxu0
        %v2348 = vadd.f32 0.0, %v2347
        %v2349 = vpop.f32.mrb[0].mxu0
        %v2350 = vpop.f32.mrb[0].mxu0
        %v2351 = vadd.f32 0.0, %v2350
        %v2352 = vpop.f32.mrb[0].mxu0
        %2353 = vmatprep.mubr.bf16.mxu0 0
        %2354 = vmatmul.mubr.bf16.gmra.mrb[0].mxu0 %v2293
        %v2355 = vpop.f32.mrb[0].mxu0
        %v2356 = vadd.f32 0.0, %v2355
        %v2357 = vpop.f32.mrb[0].mxu0
        %v2358 = vpop.f32.mrb[0].mxu0
        %v2359 = vadd.f32 0.0, %v2358
        %v2360 = vpop.f32.mrb[0].mxu0
        %2361 = vmatprep.mubr.bf16.mxu0 0
        %2362 = vmatmul.mubr.bf16.gmra.mrb[0].mxu0 %v2296
        %v2363 = vpop.f32.mrb[0].mxu0
        %v2364 = vadd.f32 0.0, %v2363
        %v2365 = vpop.f32.mrb[0].mxu0
        %v2366 = vpop.f32.mrb[0].mxu0
        %v2367 = vadd.f32 0.0, %v2366
        %v2368 = vpop.f32.mrb[0].mxu0
        %2369 = vmatprep.mubr.bf16.mxu0 0
        %2370 = vmatmul.mubr.bf16.gmra.mrb[0].mxu0 %v2299
        %v2371 = vpop.f32.mrb[0].mxu0
        %v2372 = vadd.f32 0.0, %v2371
        %v2373 = vpop.f32.mrb[0].mxu0
        %v2374 = vpop.f32.mrb[0].mxu0
        %v2375 = vadd.f32 0.0, %v2374
        %v2376 = vpop.f32.mrb[0].mxu0
        %2377 = vmatprep.mubr.bf16.mxu0 0
        %2378 = vmatmul.mubr.bf16.gmra.mrb[0].mxu0 %v2302
        %v2379 = vpop.f32.mrb[0].mxu0
        %v2380 = vadd.f32 0.0, %v2379
        %v2381 = vpop.f32.mrb[0].mxu0
        %v2382 = vpop.f32.mrb[0].mxu0
        %v2383 = vadd.f32 0.0, %v2382
        %v2384 = vpop.f32.mrb[0].mxu0
        %2385 = vmatprep.mubr.bf16.mxu0 0
        %2386 = vmatmul.mubr.bf16.gmra.mrb[0].mxu0 %v2305
        %v2387 = vpop.f32.mrb[0].mxu0
        %v2388 = vadd.f32 0.0, %v2387
        %v2389 = vpop.f32.mrb[0].mxu0
        %v2390 = vpop.f32.mrb[0].mxu0
        %v2391 = vadd.f32 0.0, %v2390
        %v2392 = vpop.f32.mrb[0].mxu0
        %2393 = vmatprep.mubr.bf16.mxu0 0
        %2394 = vmatmul.mubr.bf16.gmra.mrb[0].mxu0 %v2308
        %v2395 = vpop.f32.mrb[0].mxu0
        %v2396 = vadd.f32 0.0, %v2395
        %v2397 = vpop.f32.mrb[0].mxu0
        %v2398 = vpop.f32.mrb[0].mxu0
        %v2399 = vadd.f32 0.0, %v2398
        %v2400 = vpop.f32.mrb[0].mxu0
        %2401 = vmatprep.mubr.bf16.mxu0 0
        %2402 = vmatmul.mubr.bf16.gmra.mrb[0].mxu0 %v2311
        %v2403 = vpop.f32.mrb[0].mxu0
        %v2404 = vadd.f32 0.0, %v2403
        %v2405 = vpop.f32.mrb[0].mxu0
        %v2406 = vpop.f32.mrb[0].mxu0
        %v2407 = vadd.f32 0.0, %v2406
        %v2408 = vpop.f32.mrb[0].mxu0
        %2409 = vdwg.mxu0
        %v2410 = vmul.f32 %v2348, %v256
        %v2411 = vmul.f32 %v2351, %v256
        %v2412 = vmul.f32 %v2356, %v256
        %v2413 = vmul.f32 %v2359, %v256
        %v2414 = vmul.f32 %v2364, %v256
        %v2415 = vmul.f32 %v2367, %v256
        %v2416 = vmul.f32 %v2372, %v256
        %v2417 = vmul.f32 %v2375, %v256
        %v2418 = vmul.f32 %v2380, %v256
        %v2419 = vmul.f32 %v2383, %v256
        %v2420 = vmul.f32 %v2388, %v256
        %v2421 = vmul.f32 %v2391, %v256
        %v2422 = vmul.f32 %v2396, %v256
        %v2423 = vmul.f32 %v2399, %v256
        %v2424 = vmul.f32 %v2404, %v256
        %v2425 = vmul.f32 %v2407, %v256
        %v2426 = vadd.f32 %v2410, %v257
        %v2427 = vadd.f32 %v2411, %v257
        %v2428 = vadd.f32 %v2412, %v257
        %v2429 = vadd.f32 %v2413, %v257
        %v2430 = vadd.f32 %v2414, %v257
        %v2431 = vadd.f32 %v2415, %v257
        %v2432 = vadd.f32 %v2416, %v257
        %v2433 = vadd.f32 %v2417, %v257
        %v2434 = vadd.f32 %v2418, %v257
        %v2435 = vadd.f32 %v2419, %v257
        %v2436 = vadd.f32 %v2420, %v257
        %v2437 = vadd.f32 %v2421, %v257
        %v2438 = vadd.f32 %v2422, %v257
        %v2439 = vadd.f32 %v2423, %v257
        %v2440 = vadd.f32 %v2424, %v257
        %v2441 = vadd.f32 %v2425, %v257
        %v2442 = vmax.f32 %v2426, 0.0
        %v2443 = vmax.f32 %v2427, 0.0
        %v2444 = vmax.f32 %v2428, 0.0
        %v2445 = vmax.f32 %v2429, 0.0
        %v2446 = vmax.f32 %v2430, 0.0
        %v2447 = vmax.f32 %v2431, 0.0
        %v2448 = vmax.f32 %v2432, 0.0
        %v2449 = vmax.f32 %v2433, 0.0
        %v2450 = vmax.f32 %v2434, 0.0
        %v2451 = vmax.f32 %v2435, 0.0
        %v2452 = vmax.f32 %v2436, 0.0
        %v2453 = vmax.f32 %v2437, 0.0
        %v2454 = vmax.f32 %v2438, 0.0
        %v2455 = vmax.f32 %v2439, 0.0
        %v2456 = vmax.f32 %v2440, 0.0
        %v2457 = vmax.f32 %v2441, 0.0
        %v2458 = vpack.c.bf16 %v2443, %v2442
        %v2459 = vpack.c.bf16 %v2445, %v2444
        %v2460 = vpack.c.bf16 %v2447, %v2446
        %v2461 = vpack.c.bf16 %v2449, %v2448
        %v2462 = vpack.c.bf16 %v2451, %v2450
        %v2463 = vpack.c.bf16 %v2453, %v2452
        %v2464 = vpack.c.bf16 %v2455, %v2454
        %v2465 = vpack.c.bf16 %v2457, %v2456
        %v2467 = vsel %vm498, %v2458, 0
        %v2470 = vsel %vm498, %v2459, 0
        %v2473 = vsel %vm498, %v2460, 0
        %v2476 = vsel %vm498, %v2461, 0
        %v2479 = vsel %vm498, %v2462, 0
        %v2482 = vsel %vm498, %v2463, 0
        %v2485 = vsel %vm498, %v2464, 0
        %v2488 = vsel %vm498, %v2465, 0
        %2490 = vmatprep.subr.bf16.mxu0 %v491
        %2491 = vmatpush1.bf16.msra.mxu0 %v490
        %2492 = vmatprep.subr.bf16.mxu0 %v493
        %2493 = vmatpush1.bf16.msra.mxu0 %v492
        %2494 = vmatprep.subr.bf16.mxu0 0
        %2495 = vmatpush1.bf16.msra.mxu0 0
        %2496 = vmatprep.subr.bf16.mxu0 0
        %2497 = vmatpush1.bf16.msra.mxu0 0
        %2498 = vmatprep.subr.bf16.mxu0 0
        %2499 = vmatpush1.bf16.msra.mxu0 0
        %2500 = vmatprep.subr.bf16.mxu0 0
        %2501 = vmatpush1.bf16.msra.mxu0 0
        %2502 = vmatprep.subr.bf16.mxu0 0
        %2503 = vmatpush1.bf16.msra.mxu0 0
        %2504 = vmatprep.subr.bf16.mxu0 0
        %2505 = vmatpush1.bf16.msra.mxu0 0
        %2506 = vmatprep.subr.bf16.mxu0 0
        %2507 = vmatpush1.bf16.msra.mxu0 0
        %2508 = vmatprep.subr.bf16.mxu0 0
        %2509 = vmatpush1.bf16.msra.mxu0 0
        %2510 = vmatprep.subr.bf16.mxu0 0
        %2511 = vmatpush1.bf16.msra.mxu0 0
        %2512 = vmatprep.subr.bf16.mxu0 0
        %2513 = vmatpush1.bf16.msra.mxu0 0
        %2514 = vmatprep.subr.bf16.mxu0 0
        %2515 = vmatpush1.bf16.msra.mxu0 0
        %2516 = vmatprep.subr.bf16.mxu0 0
        %2517 = vmatpush1.bf16.msra.mxu0 0
        %2518 = vmatprep.subr.bf16.mxu0 0
        %2519 = vmatpush1.bf16.msra.mxu0 0
        %2520 = vmatprep.subr.bf16.mxu0 0
        %2521 = vmatpush1.bf16.msra.mxu0 0
        %2522 = vmatprep.mubr.bf16.mxu0 0
        %2523 = vmatmul.mubr.bf16.gmra.mrb[0].mxu0 %v2467
        %v2524 = vpop.f32.mrb[0].mxu0
        %v2525 = vadd.f32 0.0, %v2524
        %v2526 = vpop.f32.mrb[0].mxu0
        %v2527 = vadd.f32 0.0, %v2526
        %v2528 = vpop.f32.mrb[0].mxu0
        %v2529 = vadd.f32 0.0, %v2528
        %v2530 = vpop.f32.mrb[0].mxu0
        %v2531 = vadd.f32 0.0, %v2530
        %2532 = vmatprep.mubr.bf16.mxu0 0
        %2533 = vmatmul.mubr.bf16.gmra.mrb[0].mxu0 %v2470
        %v2534 = vpop.f32.mrb[0].mxu0
        %v2535 = vadd.f32 0.0, %v2534
        %v2536 = vpop.f32.mrb[0].mxu0
        %v2537 = vadd.f32 0.0, %v2536
        %v2538 = vpop.f32.mrb[0].mxu0
        %v2539 = vadd.f32 0.0, %v2538
        %v2540 = vpop.f32.mrb[0].mxu0
        %v2541 = vadd.f32 0.0, %v2540
        %2542 = vmatprep.mubr.bf16.mxu0 0
        %2543 = vmatmul.mubr.bf16.gmra.mrb[0].mxu0 %v2473
        %v2544 = vpop.f32.mrb[0].mxu0
        %v2545 = vadd.f32 0.0, %v2544
        %v2546 = vpop.f32.mrb[0].mxu0
        %v2547 = vadd.f32 0.0, %v2546
        %v2548 = vpop.f32.mrb[0].mxu0
        %v2549 = vadd.f32 0.0, %v2548
        %v2550 = vpop.f32.mrb[0].mxu0
        %v2551 = vadd.f32 0.0, %v2550
        %2552 = vmatprep.mubr.bf16.mxu0 0
        %2553 = vmatmul.mubr.bf16.gmra.mrb[0].mxu0 %v2476
        %v2554 = vpop.f32.mrb[0].mxu0
        %v2555 = vadd.f32 0.0, %v2554
        %v2556 = vpop.f32.mrb[0].mxu0
        %v2557 = vadd.f32 0.0, %v2556
        %v2558 = vpop.f32.mrb[0].mxu0
        %v2559 = vadd.f32 0.0, %v2558
        %v2560 = vpop.f32.mrb[0].mxu0
        %v2561 = vadd.f32 0.0, %v2560
        %2562 = vmatprep.mubr.bf16.mxu0 0
        %2563 = vmatmul.mubr.bf16.gmra.mrb[0].mxu0 %v2479
        %v2564 = vpop.f32.mrb[0].mxu0
        %v2565 = vadd.f32 0.0, %v2564
        %v2566 = vpop.f32.mrb[0].mxu0
        %v2567 = vadd.f32 0.0, %v2566
        %v2568 = vpop.f32.mrb[0].mxu0
        %v2569 = vadd.f32 0.0, %v2568
        %v2570 = vpop.f32.mrb[0].mxu0
        %v2571 = vadd.f32 0.0, %v2570
        %2572 = vmatprep.mubr.bf16.mxu0 0
        %2573 = vmatmul.mubr.bf16.gmra.mrb[0].mxu0 %v2482
        %v2574 = vpop.f32.mrb[0].mxu0
        %v2575 = vadd.f32 0.0, %v2574
        %v2576 = vpop.f32.mrb[0].mxu0
        %v2577 = vadd.f32 0.0, %v2576
        %v2578 = vpop.f32.mrb[0].mxu0
        %v2579 = vadd.f32 0.0, %v2578
        %v2580 = vpop.f32.mrb[0].mxu0
        %v2581 = vadd.f32 0.0, %v2580
        %2582 = vmatprep.mubr.bf16.mxu0 0
        %2583 = vmatmul.mubr.bf16.gmra.mrb[0].mxu0 %v2485
        %v2584 = vpop.f32.mrb[0].mxu0
        %v2585 = vadd.f32 0.0, %v2584
        %v2586 = vpop.f32.mrb[0].mxu0
        %v2587 = vadd.f32 0.0, %v2586
        %v2588 = vpop.f32.mrb[0].mxu0
        %v2589 = vadd.f32 0.0, %v2588
        %v2590 = vpop.f32.mrb[0].mxu0
        %v2591 = vadd.f32 0.0, %v2590
        %2592 = vmatprep.mubr.bf16.mxu0 0
        %2593 = vmatmul.mubr.bf16.gmra.mrb[0].mxu0 %v2488
        %v2594 = vpop.f32.mrb[0].mxu0
        %v2595 = vadd.f32 0.0, %v2594
        %v2596 = vpop.f32.mrb[0].mxu0
        %v2597 = vadd.f32 0.0, %v2596
        %v2598 = vpop.f32.mrb[0].mxu0
        %v2599 = vadd.f32 0.0, %v2598
        %v2600 = vpop.f32.mrb[0].mxu0
        %v2601 = vadd.f32 0.0, %v2600
        %2602 = vdwg.mxu0
        %v2603 = vmul.f32 %v2525, %v640
        %v2604 = vmul.f32 %v2527, %v644
        %v2605 = vmul.f32 %v2529, %v640
        %v2606 = vmul.f32 %v2531, %v644
        %v2607 = vmul.f32 %v2535, %v640
        %v2608 = vmul.f32 %v2537, %v644
        %v2609 = vmul.f32 %v2539, %v640
        %v2610 = vmul.f32 %v2541, %v644
        %v2611 = vmul.f32 %v2545, %v640
        %v2612 = vmul.f32 %v2547, %v644
        %v2613 = vmul.f32 %v2549, %v640
        %v2614 = vmul.f32 %v2551, %v644
        %v2615 = vmul.f32 %v2555, %v640
        %v2616 = vmul.f32 %v2557, %v644
        %v2617 = vmul.f32 %v2559, %v640
        %v2618 = vmul.f32 %v2561, %v644
        %v2619 = vmul.f32 %v2565, %v640
        %v2620 = vmul.f32 %v2567, %v644
        %v2621 = vmul.f32 %v2569, %v640
        %v2622 = vmul.f32 %v2571, %v644
        %v2623 = vmul.f32 %v2575, %v640
        %v2624 = vmul.f32 %v2577, %v644
        %v2625 = vmul.f32 %v2579, %v640
        %v2626 = vmul.f32 %v2581, %v644
        %v2627 = vmul.f32 %v2585, %v640
        %v2628 = vmul.f32 %v2587, %v644
        %v2629 = vmul.f32 %v2589, %v640
        %v2630 = vmul.f32 %v2591, %v644
        %v2631 = vmul.f32 %v2595, %v640
        %v2632 = vmul.f32 %v2597, %v644
        %v2633 = vmul.f32 %v2599, %v640
        %v2634 = vmul.f32 %v2601, %v644
        %v2635 = vadd.f32 %v2603, %v683
        %v2636 = vadd.f32 %v2604, %v687
        %v2637 = vadd.f32 %v2605, %v683
        %v2638 = vadd.f32 %v2606, %v687
        %v2639 = vadd.f32 %v2607, %v683
        %v2640 = vadd.f32 %v2608, %v687
        %v2641 = vadd.f32 %v2609, %v683
        %v2642 = vadd.f32 %v2610, %v687
        %v2643 = vadd.f32 %v2611, %v683
        %v2644 = vadd.f32 %v2612, %v687
        %v2645 = vadd.f32 %v2613, %v683
        %v2646 = vadd.f32 %v2614, %v687
        %v2647 = vadd.f32 %v2615, %v683
        %v2648 = vadd.f32 %v2616, %v687
        %v2649 = vadd.f32 %v2617, %v683
        %v2650 = vadd.f32 %v2618, %v687
        %v2651 = vadd.f32 %v2619, %v683
        %v2652 = vadd.f32 %v2620, %v687
        %v2653 = vadd.f32 %v2621, %v683
        %v2654 = vadd.f32 %v2622, %v687
        %v2655 = vadd.f32 %v2623, %v683
        %v2656 = vadd.f32 %v2624, %v687
        %v2657 = vadd.f32 %v2625, %v683
        %v2658 = vadd.f32 %v2626, %v687
        %v2659 = vadd.f32 %v2627, %v683
        %v2660 = vadd.f32 %v2628, %v687
        %v2661 = vadd.f32 %v2629, %v683
        %v2662 = vadd.f32 %v2630, %v687
        %v2663 = vadd.f32 %v2631, %v683
        %v2664 = vadd.f32 %v2632, %v687
        %v2665 = vadd.f32 %v2633, %v683
        %v2666 = vadd.f32 %v2634, %v687
        %v2667 = vmax.f32 %v2635, 0.0
        %v2668 = vmax.f32 %v2636, 0.0
        %v2669 = vmax.f32 %v2637, 0.0
        %v2670 = vmax.f32 %v2638, 0.0
        %v2671 = vmax.f32 %v2639, 0.0
        %v2672 = vmax.f32 %v2640, 0.0
        %v2673 = vmax.f32 %v2641, 0.0
        %v2674 = vmax.f32 %v2642, 0.0
        %v2675 = vmax.f32 %v2643, 0.0
        %v2676 = vmax.f32 %v2644, 0.0
        %v2677 = vmax.f32 %v2645, 0.0
        %v2678 = vmax.f32 %v2646, 0.0
        %v2679 = vmax.f32 %v2647, 0.0
        %v2680 = vmax.f32 %v2648, 0.0
        %v2681 = vmax.f32 %v2649, 0.0
        %v2682 = vmax.f32 %v2650, 0.0
        %v2683 = vmax.f32 %v2651, 0.0
        %v2684 = vmax.f32 %v2652, 0.0
        %v2685 = vmax.f32 %v2653, 0.0
        %v2686 = vmax.f32 %v2654, 0.0
        %v2687 = vmax.f32 %v2655, 0.0
        %v2688 = vmax.f32 %v2656, 0.0
        %v2689 = vmax.f32 %v2657, 0.0
        %v2690 = vmax.f32 %v2658, 0.0
        %v2691 = vmax.f32 %v2659, 0.0
        %v2692 = vmax.f32 %v2660, 0.0
        %v2693 = vmax.f32 %v2661, 0.0
        %v2694 = vmax.f32 %v2662, 0.0
        %v2695 = vmax.f32 %v2663, 0.0
        %v2696 = vmax.f32 %v2664, 0.0
        %v2697 = vmax.f32 %v2665, 0.0
        %v2698 = vmax.f32 %v2666, 0.0
        %2699 = vmatprep.subr.mxu0 %v2668
        %2700 = vmatpush1.msra.mxu0 %v2667
        %2701 = vmatprep.subr.mxu0 %v2670
        %2702 = vmatpush1.msra.mxu0 %v2669
        %2703 = vmatprep.subr.mxu0 %v2672
        %2704 = vmatpush1.msra.mxu0 %v2671
        %2705 = vmatprep.subr.mxu0 %v2674
        %2706 = vmatpush1.msra.mxu0 %v2673
        %2707 = vmatprep.subr.mxu0 %v2676
        %2708 = vmatpush1.msra.mxu0 %v2675
        %2709 = vmatprep.subr.mxu0 %v2678
        %2710 = vmatpush1.msra.mxu0 %v2677
        %2711 = vmatprep.subr.mxu0 %v2680
        %2712 = vmatpush1.msra.mxu0 %v2679
        %2713 = vmatprep.subr.mxu0 %v2682
        %2714 = vmatpush1.msra.mxu0 %v2681
        %2715 = vmatprep.subr.mxu0 %v2684
        %2716 = vmatpush1.msra.mxu0 %v2683
        %2717 = vmatprep.subr.mxu0 %v2686
        %2718 = vmatpush1.msra.mxu0 %v2685
        %2719 = vmatprep.subr.mxu0 %v2688
        %2720 = vmatpush1.msra.mxu0 %v2687
        %2721 = vmatprep.subr.mxu0 %v2690
        %2722 = vmatpush1.msra.mxu0 %v2689
        %2723 = vmatprep.subr.mxu0 %v2692
        %2724 = vmatpush1.msra.mxu0 %v2691
        %2725 = vmatprep.subr.mxu0 %v2694
        %2726 = vmatpush1.msra.mxu0 %v2693
        %2727 = vmatprep.subr.mxu0 %v2696
        %2728 = vmatpush1.msra.mxu0 %v2695
        %2729 = vmatprep.subr.mxu0 %v2698
        %2730 = vmatpush1.msra.mxu0 %v2697
        %2731 = vmatprep.subr.mxu0 0.0
        %2732 = vmatpush1.msra.mxu0 0.0
        %2733 = vmatprep.subr.mxu0 0.0
        %2734 = vmatpush1.msra.mxu0 0.0
        %2735 = vmatprep.subr.mxu0 0.0
        %2736 = vmatpush1.msra.mxu0 0.0
        %2737 = vmatprep.subr.mxu0 0.0
        %2738 = vmatpush1.msra.mxu0 0.0
        %2739 = vmatprep.subr.mxu0 0.0
        %2740 = vmatpush1.msra.mxu0 0.0
        %2741 = vmatprep.subr.mxu0 0.0
        %2742 = vmatpush1.msra.mxu0 0.0
        %2743 = vmatprep.subr.mxu0 0.0
        %2744 = vmatpush1.msra.mxu0 0.0
        %2745 = vmatprep.subr.mxu0 0.0
        %2746 = vmatpush1.msra.mxu0 0.0
        %2747 = vmatprep.subr.mxu0 0.0
        %2748 = vmatpush1.msra.mxu0 0.0
        %2749 = vmatprep.subr.mxu0 0.0
        %2750 = vmatpush1.msra.mxu0 0.0
        %2751 = vmatprep.subr.mxu0 0.0
        %2752 = vmatpush1.msra.mxu0 0.0
        %2753 = vmatprep.subr.mxu0 0.0
        %2754 = vmatpush1.msra.mxu0 0.0
        %2755 = vmatprep.subr.mxu0 0.0
        %2756 = vmatpush1.msra.mxu0 0.0
        %2757 = vmatprep.subr.mxu0 0.0
        %2758 = vmatpush1.msra.mxu0 0.0
        %2759 = vmatprep.subr.mxu0 0.0
        %2760 = vmatpush1.msra.mxu0 0.0
        %2761 = vmatprep.subr.mxu0 0.0
        %2762 = vmatpush1.msra.mxu0 0.0
        %2763 = vmatprep.mubr.f32.mxu0 0.0
        %2764 = vmatmul.mubr.f32.gmra.mrb[0].mxu0 %v266
        %v2765 = vpop.f32.mrb[0].mxu0
        %v2766 = vadd.f32 0.0, %v2765
        %v2767 = vpop.f32.mrb[0].mxu0
        %v2768 = vadd.f32 0.0, %v2767
        %2769 = vdwg.mxu0
        %v2770 = vpack.c.bf16 %v2766, %v2766
        %v2771 = vpack.c.bf16 %v2768, %v2768
        %s2772 = scalar_lea.vmem %s4, 288
        %v2773 = vld [vmem:[%s2772] sm:$0xf]
        %v2774 = vld [vmem:[%s2772 + $0x4] sm:$0xf]
        %v2775 = vld [vmem:[%s2772 + $0x8] sm:$0xf]
        %v2776 = vld [vmem:[%s2772 + $0xc] sm:$0xf]
        %v2777 = vld [vmem:[%s2772 + $0x10] sm:$0xf]
        %v2778 = vld [vmem:[%s2772 + $0x14] sm:$0xf]
        %v2779 = vld [vmem:[%s2772 + $0x18] sm:$0xf]
        %v2780 = vld [vmem:[%s2772 + $0x1c] sm:$0xf]
        %v2781 = vld [vmem:[%s2772 + $0x20] sm:$0xf]
        %v2782 = vld [vmem:[%s2772 + $0x24] sm:$0xf]
        %v2783 = vld [vmem:[%s2772 + $0x28] sm:$0xf]
        %v2784 = vld [vmem:[%s2772 + $0x2c] sm:$0xf]
        %v2785 = vld [vmem:[%s2772 + $0x30] sm:$0xf]
        %v2786 = vld [vmem:[%s2772 + $0x34] sm:$0xf]
        %v2787 = vld [vmem:[%s2772 + $0x38] sm:$0xf]
        %v2788 = vld [vmem:[%s2772 + $0x3c] sm:$0xf]
        %v2789 = vld [vmem:[%s2772 + $0x40] sm:$0xf]
        %v2790 = vld [vmem:[%s2772 + $0x44] sm:$0xf]
        %v2791 = vld [vmem:[%s2772 + $0x48] sm:$0xf]
        %v2792 = vld [vmem:[%s2772 + $0x4c] sm:$0xf]
        %v2793 = vld [vmem:[%s2772 + $0x50] sm:$0xf]
        %v2794 = vld [vmem:[%s2772 + $0x54] sm:$0xf]
        %v2795 = vld [vmem:[%s2772 + $0x58] sm:$0xf]
        %v2796 = vld [vmem:[%s2772 + $0x5c] sm:$0xf]
        %v2821 = vunpack.c.l.b16 %v2773
        %v2822 = vunpack.c.l.b16 %v2774
        %v2823 = vunpack.c.l.b16 %v2775
        %v2824 = vunpack.c.l.b16 %v2776
        %v2825 = vunpack.c.l.b16 %v2777
        %v2826 = vunpack.c.l.b16 %v2778
        %v2827 = vunpack.c.l.b16 %v2779
        %v2828 = vunpack.c.l.b16 %v2780
        %v2829 = vunpack.c.l.b16 %v2781
        %v2830 = vunpack.c.l.b16 %v2782
        %v2831 = vunpack.c.l.b16 %v2783
        %v2832 = vunpack.c.l.b16 %v2784
        %v2833 = vunpack.c.l.b16 %v2785
        %v2834 = vunpack.c.l.b16 %v2786
        %v2835 = vunpack.c.l.b16 %v2787
        %v2836 = vunpack.c.l.b16 %v2788
        %v2837 = vunpack.c.l.b16 %v2789
        %v2838 = vunpack.c.l.b16 %v2790
        %v2839 = vunpack.c.l.b16 %v2791
        %v2840 = vunpack.c.l.b16 %v2792
        %v2841 = vunpack.c.l.b16 %v2793
        %v2842 = vunpack.c.l.b16 %v2794
        %v2843 = vunpack.c.l.b16 %v2795
        %v2844 = vunpack.c.l.b16 %v2796
        %v2845 = vpack.c.b16 %v2822, %v2821
        %v2846 = vpack.c.b16 %v2824, %v2823
        %v2847 = vpack.c.b16 %v2826, %v2825
        %v2848 = vpack.c.b16 %v2828, %v2827
        %v2849 = vpack.c.b16 %v2830, %v2829
        %v2850 = vpack.c.b16 %v2832, %v2831
        %v2851 = vpack.c.b16 %v2834, %v2833
        %v2852 = vpack.c.b16 %v2836, %v2835
        %v2853 = vpack.c.b16 %v2838, %v2837
        %v2854 = vpack.c.b16 %v2840, %v2839
        %v2855 = vpack.c.b16 %v2842, %v2841
        %v2856 = vpack.c.b16 %v2844, %v2843
        %v2870 = vsel %vm1456, %v2771, 0
        %2872 = vmatprep.subr.bf16.mxu0 0
        %2873 = vmatpush1.bf16.msra.mxu0 %v2845
        %2874 = vmatprep.subr.bf16.mxu0 0
        %2875 = vmatpush1.bf16.msra.mxu0 %v2846
        %2876 = vmatprep.subr.bf16.mxu0 0
        %2877 = vmatpush1.bf16.msra.mxu0 %v2847
        %2878 = vmatprep.subr.bf16.mxu0 0
        %2879 = vmatpush1.bf16.msra.mxu0 %v2848
        %2880 = vmatprep.subr.bf16.mxu0 0
        %2881 = vmatpush1.bf16.msra.mxu0 %v2849
        %2882 = vmatprep.subr.bf16.mxu0 0
        %2883 = vmatpush1.bf16.msra.mxu0 %v2850
        %2884 = vmatprep.subr.bf16.mxu0 0
        %2885 = vmatpush1.bf16.msra.mxu0 %v2851
        %2886 = vmatprep.subr.bf16.mxu0 0
        %2887 = vmatpush1.bf16.msra.mxu0 %v2852
        %2888 = vmatprep.subr.bf16.mxu0 0
        %2889 = vmatpush1.bf16.msra.mxu0 %v2853
        %2890 = vmatprep.subr.bf16.mxu0 0
        %2891 = vmatpush1.bf16.msra.mxu0 %v2854
        %2892 = vmatprep.subr.bf16.mxu0 0
        %2893 = vmatpush1.bf16.msra.mxu0 %v2855
        %2894 = vmatprep.subr.bf16.mxu0 0
        %2895 = vmatpush1.bf16.msra.mxu0 %v2856
        %2896 = vmatprep.subr.bf16.mxu0 0
        %2897 = vmatpush1.bf16.msra.mxu0 0
        %2898 = vmatprep.subr.bf16.mxu0 0
        %2899 = vmatpush1.bf16.msra.mxu0 0
        %2900 = vmatprep.subr.bf16.mxu0 0
        %2901 = vmatpush1.bf16.msra.mxu0 0
        %2902 = vmatprep.subr.bf16.mxu0 0
        %2903 = vmatpush1.bf16.msra.mxu0 0
        %2904 = vmatprep.mubr.bf16.mxu0 %v2870
        %2905 = vmatmul.mubr.bf16.gmra.mrb[0].mxu0 %v2770
        %v2906 = vpop.f32.mrb[0].mxu0
        %v2907 = vadd.f32 0.0, %v2906
        %v2908 = vpop.f32.mrb[0].mxu0
        %v2909 = vpop.f32.mrb[0].mxu0
        %v2910 = vpop.f32.mrb[0].mxu0
        %2911 = vdwg.mxu0
        %v2912 = vadd.f32 %v2263, %v2907
        %s2913 = scalar_lea.vmem %s253, 64
        %v2914 = vld [vmem:[%s2913] sm:$0xff]
        %v2915 = vld [vmem:[%s2913 + $0x8] sm:$0xff]
        %v2916 = vld [vmem:[%s2913 + $0x60] sm:$0xff]
        %v2917 = vld [vmem:[%s2913 + $0x68] sm:$0xff]
        %v2918 = vld [vmem:[%s2913 + $0xc0] sm:$0xff]
        %v2919 = vld [vmem:[%s2913 + $0xc8] sm:$0xff]
        %v2920 = vld [vmem:[%s2913 + $0x120] sm:$0xff]
        %v2921 = vld [vmem:[%s2913 + $0x128] sm:$0xff]
        %v2922 = vld [vmem:[%s2913 + $0x180] sm:$0xff]
        %v2923 = vld [vmem:[%s2913 + $0x188] sm:$0xff]
        %v2924 = vld [vmem:[%s2913 + $0x1e0] sm:$0xff]
        %v2925 = vld [vmem:[%s2913 + $0x1e8] sm:$0xff]
        %v2926 = vld [vmem:[%s2913 + $0x240] sm:$0xff]
        %v2927 = vld [vmem:[%s2913 + $0x248] sm:$0xff]
        %v2928 = vld [vmem:[%s2913 + $0x2a0] sm:$0xff]
        %v2929 = vld [vmem:[%s2913 + $0x2a8] sm:$0xff]
        %v2930 = vpack.c.bf16 %v2915, %v2914
        %v2931 = vpack.c.bf16 %v2917, %v2916
        %v2932 = vpack.c.bf16 %v2919, %v2918
        %v2933 = vpack.c.bf16 %v2921, %v2920
        %v2934 = vpack.c.bf16 %v2923, %v2922
        %v2935 = vpack.c.bf16 %v2925, %v2924
        %v2936 = vpack.c.bf16 %v2927, %v2926
        %v2937 = vpack.c.bf16 %v2929, %v2928
        %v2939 = vsel %vm292, %v2930, 0
        %v2942 = vsel %vm292, %v2931, 0
        %v2945 = vsel %vm292, %v2932, 0
        %v2948 = vsel %vm292, %v2933, 0
        %v2951 = vsel %vm292, %v2934, 0
        %v2954 = vsel %vm292, %v2935, 0
        %v2957 = vsel %vm292, %v2936, 0
        %v2960 = vsel %vm292, %v2937, 0
        %2962 = vmatprep.subr.bf16.mxu0 0
        %2963 = vmatpush1.bf16.msra.mxu0 %v319
        %2964 = vmatprep.subr.bf16.mxu0 0
        %2965 = vmatpush1.bf16.msra.mxu0 0
        %2966 = vmatprep.subr.bf16.mxu0 0
        %2967 = vmatpush1.bf16.msra.mxu0 0
        %2968 = vmatprep.subr.bf16.mxu0 0
        %2969 = vmatpush1.bf16.msra.mxu0 0
        %2970 = vmatprep.subr.bf16.mxu0 0
        %2971 = vmatpush1.bf16.msra.mxu0 0
        %2972 = vmatprep.subr.bf16.mxu0 0
        %2973 = vmatpush1.bf16.msra.mxu0 0
        %2974 = vmatprep.subr.bf16.mxu0 0
        %2975 = vmatpush1.bf16.msra.mxu0 0
        %2976 = vmatprep.subr.bf16.mxu0 0
        %2977 = vmatpush1.bf16.msra.mxu0 0
        %2978 = vmatprep.subr.bf16.mxu0 0
        %2979 = vmatpush1.bf16.msra.mxu0 0
        %2980 = vmatprep.subr.bf16.mxu0 0
        %2981 = vmatpush1.bf16.msra.mxu0 0
        %2982 = vmatprep.subr.bf16.mxu0 0
        %2983 = vmatpush1.bf16.msra.mxu0 0
        %2984 = vmatprep.subr.bf16.mxu0 0
        %2985 = vmatpush1.bf16.msra.mxu0 0
        %2986 = vmatprep.subr.bf16.mxu0 0
        %2987 = vmatpush1.bf16.msra.mxu0 0
        %2988 = vmatprep.subr.bf16.mxu0 0
        %2989 = vmatpush1.bf16.msra.mxu0 0
        %2990 = vmatprep.subr.bf16.mxu0 0
        %2991 = vmatpush1.bf16.msra.mxu0 0
        %2992 = vmatprep.subr.bf16.mxu0 0
        %2993 = vmatpush1.bf16.msra.mxu0 0
        %2994 = vmatprep.mubr.bf16.mxu0 0
        %2995 = vmatmul.mubr.bf16.gmra.mrb[0].mxu0 %v2939
        %v2996 = vpop.f32.mrb[0].mxu0
        %v2997 = vadd.f32 0.0, %v2996
        %v2998 = vpop.f32.mrb[0].mxu0
        %v2999 = vpop.f32.mrb[0].mxu0
        %v3000 = vadd.f32 0.0, %v2999
        %v3001 = vpop.f32.mrb[0].mxu0
        %3002 = vmatprep.mubr.bf16.mxu0 0
        %3003 = vmatmul.mubr.bf16.gmra.mrb[0].mxu0 %v2942
        %v3004 = vpop.f32.mrb[0].mxu0
        %v3005 = vadd.f32 0.0, %v3004
        %v3006 = vpop.f32.mrb[0].mxu0
        %v3007 = vpop.f32.mrb[0].mxu0
        %v3008 = vadd.f32 0.0, %v3007
        %v3009 = vpop.f32.mrb[0].mxu0
        %3010 = vmatprep.mubr.bf16.mxu0 0
        %3011 = vmatmul.mubr.bf16.gmra.mrb[0].mxu0 %v2945
        %v3012 = vpop.f32.mrb[0].mxu0
        %v3013 = vadd.f32 0.0, %v3012
        %v3014 = vpop.f32.mrb[0].mxu0
        %v3015 = vpop.f32.mrb[0].mxu0
        %v3016 = vadd.f32 0.0, %v3015
        %v3017 = vpop.f32.mrb[0].mxu0
        %3018 = vmatprep.mubr.bf16.mxu0 0
        %3019 = vmatmul.mubr.bf16.gmra.mrb[0].mxu0 %v2948
        %v3020 = vpop.f32.mrb[0].mxu0
        %v3021 = vadd.f32 0.0, %v3020
        %v3022 = vpop.f32.mrb[0].mxu0
        %v3023 = vpop.f32.mrb[0].mxu0
        %v3024 = vadd.f32 0.0, %v3023
        %v3025 = vpop.f32.mrb[0].mxu0
        %3026 = vmatprep.mubr.bf16.mxu0 0
        %3027 = vmatmul.mubr.bf16.gmra.mrb[0].mxu0 %v2951
        %v3028 = vpop.f32.mrb[0].mxu0
        %v3029 = vadd.f32 0.0, %v3028
        %v3030 = vpop.f32.mrb[0].mxu0
        %v3031 = vpop.f32.mrb[0].mxu0
        %v3032 = vadd.f32 0.0, %v3031
        %v3033 = vpop.f32.mrb[0].mxu0
        %3034 = vmatprep.mubr.bf16.mxu0 0
        %3035 = vmatmul.mubr.bf16.gmra.mrb[0].mxu0 %v2954
        %v3036 = vpop.f32.mrb[0].mxu0
        %v3037 = vadd.f32 0.0, %v3036
        %v3038 = vpop.f32.mrb[0].mxu0
        %v3039 = vpop.f32.mrb[0].mxu0
        %v3040 = vadd.f32 0.0, %v3039
        %v3041 = vpop.f32.mrb[0].mxu0
        %3042 = vmatprep.mubr.bf16.mxu0 0
        %3043 = vmatmul.mubr.bf16.gmra.mrb[0].mxu0 %v2957
        %v3044 = vpop.f32.mrb[0].mxu0
        %v3045 = vadd.f32 0.0, %v3044
        %v3046 = vpop.f32.mrb[0].mxu0
        %v3047 = vpop.f32.mrb[0].mxu0
        %v3048 = vadd.f32 0.0, %v3047
        %v3049 = vpop.f32.mrb[0].mxu0
        %3050 = vmatprep.mubr.bf16.mxu0 0
        %3051 = vmatmul.mubr.bf16.gmra.mrb[0].mxu0 %v2960
        %v3052 = vpop.f32.mrb[0].mxu0
        %v3053 = vadd.f32 0.0, %v3052
        %v3054 = vpop.f32.mrb[0].mxu0
        %v3055 = vpop.f32.mrb[0].mxu0
        %v3056 = vadd.f32 0.0, %v3055
        %v3057 = vpop.f32.mrb[0].mxu0
        %3058 = vdwg.mxu0
        %v3059 = vmul.f32 %v2997, %v256
        %v3060 = vmul.f32 %v3000, %v256
        %v3061 = vmul.f32 %v3005, %v256
        %v3062 = vmul.f32 %v3008, %v256
        %v3063 = vmul.f32 %v3013, %v256
        %v3064 = vmul.f32 %v3016, %v256
        %v3065 = vmul.f32 %v3021, %v256
        %v3066 = vmul.f32 %v3024, %v256
        %v3067 = vmul.f32 %v3029, %v256
        %v3068 = vmul.f32 %v3032, %v256
        %v3069 = vmul.f32 %v3037, %v256
        %v3070 = vmul.f32 %v3040, %v256
        %v3071 = vmul.f32 %v3045, %v256
        %v3072 = vmul.f32 %v3048, %v256
        %v3073 = vmul.f32 %v3053, %v256
        %v3074 = vmul.f32 %v3056, %v256
        %v3075 = vadd.f32 %v3059, %v257
        %v3076 = vadd.f32 %v3060, %v257
        %v3077 = vadd.f32 %v3061, %v257
        %v3078 = vadd.f32 %v3062, %v257
        %v3079 = vadd.f32 %v3063, %v257
        %v3080 = vadd.f32 %v3064, %v257
        %v3081 = vadd.f32 %v3065, %v257
        %v3082 = vadd.f32 %v3066, %v257
        %v3083 = vadd.f32 %v3067, %v257
        %v3084 = vadd.f32 %v3068, %v257
        %v3085 = vadd.f32 %v3069, %v257
        %v3086 = vadd.f32 %v3070, %v257
        %v3087 = vadd.f32 %v3071, %v257
        %v3088 = vadd.f32 %v3072, %v257
        %v3089 = vadd.f32 %v3073, %v257
        %v3090 = vadd.f32 %v3074, %v257
        %v3091 = vmax.f32 %v3075, 0.0
        %v3092 = vmax.f32 %v3076, 0.0
        %v3093 = vmax.f32 %v3077, 0.0
        %v3094 = vmax.f32 %v3078, 0.0
        %v3095 = vmax.f32 %v3079, 0.0
        %v3096 = vmax.f32 %v3080, 0.0
        %v3097 = vmax.f32 %v3081, 0.0
        %v3098 = vmax.f32 %v3082, 0.0
        %v3099 = vmax.f32 %v3083, 0.0
        %v3100 = vmax.f32 %v3084, 0.0
        %v3101 = vmax.f32 %v3085, 0.0
        %v3102 = vmax.f32 %v3086, 0.0
        %v3103 = vmax.f32 %v3087, 0.0
        %v3104 = vmax.f32 %v3088, 0.0
        %v3105 = vmax.f32 %v3089, 0.0
        %v3106 = vmax.f32 %v3090, 0.0
        %v3107 = vpack.c.bf16 %v3092, %v3091
        %v3108 = vpack.c.bf16 %v3094, %v3093
        %v3109 = vpack.c.bf16 %v3096, %v3095
        %v3110 = vpack.c.bf16 %v3098, %v3097
        %v3111 = vpack.c.bf16 %v3100, %v3099
        %v3112 = vpack.c.bf16 %v3102, %v3101
        %v3113 = vpack.c.bf16 %v3104, %v3103
        %v3114 = vpack.c.bf16 %v3106, %v3105
        %v3116 = vsel %vm498, %v3107, 0
        %v3119 = vsel %vm498, %v3108, 0
        %v3122 = vsel %vm498, %v3109, 0
        %v3125 = vsel %vm498, %v3110, 0
        %v3128 = vsel %vm498, %v3111, 0
        %v3131 = vsel %vm498, %v3112, 0
        %v3134 = vsel %vm498, %v3113, 0
        %v3137 = vsel %vm498, %v3114, 0
        %3139 = vmatprep.subr.bf16.mxu0 %v491
        %3140 = vmatpush1.bf16.msra.mxu0 %v490
        %3141 = vmatprep.subr.bf16.mxu0 %v493
        %3142 = vmatpush1.bf16.msra.mxu0 %v492
        %3143 = vmatprep.subr.bf16.mxu0 0
        %3144 = vmatpush1.bf16.msra.mxu0 0
        %3145 = vmatprep.subr.bf16.mxu0 0
        %3146 = vmatpush1.bf16.msra.mxu0 0
        %3147 = vmatprep.subr.bf16.mxu0 0
        %3148 = vmatpush1.bf16.msra.mxu0 0
        %3149 = vmatprep.subr.bf16.mxu0 0
        %3150 = vmatpush1.bf16.msra.mxu0 0
        %3151 = vmatprep.subr.bf16.mxu0 0
        %3152 = vmatpush1.bf16.msra.mxu0 0
        %3153 = vmatprep.subr.bf16.mxu0 0
        %3154 = vmatpush1.bf16.msra.mxu0 0
        %3155 = vmatprep.subr.bf16.mxu0 0
        %3156 = vmatpush1.bf16.msra.mxu0 0
        %3157 = vmatprep.subr.bf16.mxu0 0
        %3158 = vmatpush1.bf16.msra.mxu0 0
        %3159 = vmatprep.subr.bf16.mxu0 0
        %3160 = vmatpush1.bf16.msra.mxu0 0
        %3161 = vmatprep.subr.bf16.mxu0 0
        %3162 = vmatpush1.bf16.msra.mxu0 0
        %3163 = vmatprep.subr.bf16.mxu0 0
        %3164 = vmatpush1.bf16.msra.mxu0 0
        %3165 = vmatprep.subr.bf16.mxu0 0
        %3166 = vmatpush1.bf16.msra.mxu0 0
        %3167 = vmatprep.subr.bf16.mxu0 0
        %3168 = vmatpush1.bf16.msra.mxu0 0
        %3169 = vmatprep.subr.bf16.mxu0 0
        %3170 = vmatpush1.bf16.msra.mxu0 0
        %3171 = vmatprep.mubr.bf16.mxu0 0
        %3172 = vmatmul.mubr.bf16.gmra.mrb[0].mxu0 %v3116
        %v3173 = vpop.f32.mrb[0].mxu0
        %v3174 = vadd.f32 0.0, %v3173
        %v3175 = vpop.f32.mrb[0].mxu0
        %v3176 = vadd.f32 0.0, %v3175
        %v3177 = vpop.f32.mrb[0].mxu0
        %v3178 = vadd.f32 0.0, %v3177
        %v3179 = vpop.f32.mrb[0].mxu0
        %v3180 = vadd.f32 0.0, %v3179
        %3181 = vmatprep.mubr.bf16.mxu0 0
        %3182 = vmatmul.mubr.bf16.gmra.mrb[0].mxu0 %v3119
        %v3183 = vpop.f32.mrb[0].mxu0
        %v3184 = vadd.f32 0.0, %v3183
        %v3185 = vpop.f32.mrb[0].mxu0
        %v3186 = vadd.f32 0.0, %v3185
        %v3187 = vpop.f32.mrb[0].mxu0
        %v3188 = vadd.f32 0.0, %v3187
        %v3189 = vpop.f32.mrb[0].mxu0
        %v3190 = vadd.f32 0.0, %v3189
        %3191 = vmatprep.mubr.bf16.mxu0 0
        %3192 = vmatmul.mubr.bf16.gmra.mrb[0].mxu0 %v3122
        %v3193 = vpop.f32.mrb[0].mxu0
        %v3194 = vadd.f32 0.0, %v3193
        %v3195 = vpop.f32.mrb[0].mxu0
        %v3196 = vadd.f32 0.0, %v3195
        %v3197 = vpop.f32.mrb[0].mxu0
        %v3198 = vadd.f32 0.0, %v3197
        %v3199 = vpop.f32.mrb[0].mxu0
        %v3200 = vadd.f32 0.0, %v3199
        %3201 = vmatprep.mubr.bf16.mxu0 0
        %3202 = vmatmul.mubr.bf16.gmra.mrb[0].mxu0 %v3125
        %v3203 = vpop.f32.mrb[0].mxu0
        %v3204 = vadd.f32 0.0, %v3203
        %v3205 = vpop.f32.mrb[0].mxu0
        %v3206 = vadd.f32 0.0, %v3205
        %v3207 = vpop.f32.mrb[0].mxu0
        %v3208 = vadd.f32 0.0, %v3207
        %v3209 = vpop.f32.mrb[0].mxu0
        %v3210 = vadd.f32 0.0, %v3209
        %3211 = vmatprep.mubr.bf16.mxu0 0
        %3212 = vmatmul.mubr.bf16.gmra.mrb[0].mxu0 %v3128
        %v3213 = vpop.f32.mrb[0].mxu0
        %v3214 = vadd.f32 0.0, %v3213
        %v3215 = vpop.f32.mrb[0].mxu0
        %v3216 = vadd.f32 0.0, %v3215
        %v3217 = vpop.f32.mrb[0].mxu0
        %v3218 = vadd.f32 0.0, %v3217
        %v3219 = vpop.f32.mrb[0].mxu0
        %v3220 = vadd.f32 0.0, %v3219
        %3221 = vmatprep.mubr.bf16.mxu0 0
        %3222 = vmatmul.mubr.bf16.gmra.mrb[0].mxu0 %v3131
        %v3223 = vpop.f32.mrb[0].mxu0
        %v3224 = vadd.f32 0.0, %v3223
        %v3225 = vpop.f32.mrb[0].mxu0
        %v3226 = vadd.f32 0.0, %v3225
        %v3227 = vpop.f32.mrb[0].mxu0
        %v3228 = vadd.f32 0.0, %v3227
        %v3229 = vpop.f32.mrb[0].mxu0
        %v3230 = vadd.f32 0.0, %v3229
        %3231 = vmatprep.mubr.bf16.mxu0 0
        %3232 = vmatmul.mubr.bf16.gmra.mrb[0].mxu0 %v3134
        %v3233 = vpop.f32.mrb[0].mxu0
        %v3234 = vadd.f32 0.0, %v3233
        %v3235 = vpop.f32.mrb[0].mxu0
        %v3236 = vadd.f32 0.0, %v3235
        %v3237 = vpop.f32.mrb[0].mxu0
        %v3238 = vadd.f32 0.0, %v3237
        %v3239 = vpop.f32.mrb[0].mxu0
        %v3240 = vadd.f32 0.0, %v3239
        %3241 = vmatprep.mubr.bf16.mxu0 0
        %3242 = vmatmul.mubr.bf16.gmra.mrb[0].mxu0 %v3137
        %v3243 = vpop.f32.mrb[0].mxu0
        %v3244 = vadd.f32 0.0, %v3243
        %v3245 = vpop.f32.mrb[0].mxu0
        %v3246 = vadd.f32 0.0, %v3245
        %v3247 = vpop.f32.mrb[0].mxu0
        %v3248 = vadd.f32 0.0, %v3247
        %v3249 = vpop.f32.mrb[0].mxu0
        %v3250 = vadd.f32 0.0, %v3249
        %3251 = vdwg.mxu0
        %v3252 = vmul.f32 %v3174, %v640
        %v3253 = vmul.f32 %v3176, %v644
        %v3254 = vmul.f32 %v3178, %v640
        %v3255 = vmul.f32 %v3180, %v644
        %v3256 = vmul.f32 %v3184, %v640
        %v3257 = vmul.f32 %v3186, %v644
        %v3258 = vmul.f32 %v3188, %v640
        %v3259 = vmul.f32 %v3190, %v644
        %v3260 = vmul.f32 %v3194, %v640
        %v3261 = vmul.f32 %v3196, %v644
        %v3262 = vmul.f32 %v3198, %v640
        %v3263 = vmul.f32 %v3200, %v644
        %v3264 = vmul.f32 %v3204, %v640
        %v3265 = vmul.f32 %v3206, %v644
        %v3266 = vmul.f32 %v3208, %v640
        %v3267 = vmul.f32 %v3210, %v644
        %v3268 = vmul.f32 %v3214, %v640
        %v3269 = vmul.f32 %v3216, %v644
        %v3270 = vmul.f32 %v3218, %v640
        %v3271 = vmul.f32 %v3220, %v644
        %v3272 = vmul.f32 %v3224, %v640
        %v3273 = vmul.f32 %v3226, %v644
        %v3274 = vmul.f32 %v3228, %v640
        %v3275 = vmul.f32 %v3230, %v644
        %v3276 = vmul.f32 %v3234, %v640
        %v3277 = vmul.f32 %v3236, %v644
        %v3278 = vmul.f32 %v3238, %v640
        %v3279 = vmul.f32 %v3240, %v644
        %v3280 = vmul.f32 %v3244, %v640
        %v3281 = vmul.f32 %v3246, %v644
        %v3282 = vmul.f32 %v3248, %v640
        %v3283 = vmul.f32 %v3250, %v644
        %v3284 = vadd.f32 %v3252, %v683
        %v3285 = vadd.f32 %v3253, %v687
        %v3286 = vadd.f32 %v3254, %v683
        %v3287 = vadd.f32 %v3255, %v687
        %v3288 = vadd.f32 %v3256, %v683
        %v3289 = vadd.f32 %v3257, %v687
        %v3290 = vadd.f32 %v3258, %v683
        %v3291 = vadd.f32 %v3259, %v687
        %v3292 = vadd.f32 %v3260, %v683
        %v3293 = vadd.f32 %v3261, %v687
        %v3294 = vadd.f32 %v3262, %v683
        %v3295 = vadd.f32 %v3263, %v687
        %v3296 = vadd.f32 %v3264, %v683
        %v3297 = vadd.f32 %v3265, %v687
        %v3298 = vadd.f32 %v3266, %v683
        %v3299 = vadd.f32 %v3267, %v687
        %v3300 = vadd.f32 %v3268, %v683
        %v3301 = vadd.f32 %v3269, %v687
        %v3302 = vadd.f32 %v3270, %v683
        %v3303 = vadd.f32 %v3271, %v687
        %v3304 = vadd.f32 %v3272, %v683
        %v3305 = vadd.f32 %v3273, %v687
        %v3306 = vadd.f32 %v3274, %v683
        %v3307 = vadd.f32 %v3275, %v687
        %v3308 = vadd.f32 %v3276, %v683
        %v3309 = vadd.f32 %v3277, %v687
        %v3310 = vadd.f32 %v3278, %v683
        %v3311 = vadd.f32 %v3279, %v687
        %v3312 = vadd.f32 %v3280, %v683
        %v3313 = vadd.f32 %v3281, %v687
        %v3314 = vadd.f32 %v3282, %v683
        %v3315 = vadd.f32 %v3283, %v687
        %v3316 = vmax.f32 %v3284, 0.0
        %v3317 = vmax.f32 %v3285, 0.0
        %v3318 = vmax.f32 %v3286, 0.0
        %v3319 = vmax.f32 %v3287, 0.0
        %v3320 = vmax.f32 %v3288, 0.0
        %v3321 = vmax.f32 %v3289, 0.0
        %v3322 = vmax.f32 %v3290, 0.0
        %v3323 = vmax.f32 %v3291, 0.0
        %v3324 = vmax.f32 %v3292, 0.0
        %v3325 = vmax.f32 %v3293, 0.0
        %v3326 = vmax.f32 %v3294, 0.0
        %v3327 = vmax.f32 %v3295, 0.0
        %v3328 = vmax.f32 %v3296, 0.0
        %v3329 = vmax.f32 %v3297, 0.0
        %v3330 = vmax.f32 %v3298, 0.0
        %v3331 = vmax.f32 %v3299, 0.0
        %v3332 = vmax.f32 %v3300, 0.0
        %v3333 = vmax.f32 %v3301, 0.0
        %v3334 = vmax.f32 %v3302, 0.0
        %v3335 = vmax.f32 %v3303, 0.0
        %v3336 = vmax.f32 %v3304, 0.0
        %v3337 = vmax.f32 %v3305, 0.0
        %v3338 = vmax.f32 %v3306, 0.0
        %v3339 = vmax.f32 %v3307, 0.0
        %v3340 = vmax.f32 %v3308, 0.0
        %v3341 = vmax.f32 %v3309, 0.0
        %v3342 = vmax.f32 %v3310, 0.0
        %v3343 = vmax.f32 %v3311, 0.0
        %v3344 = vmax.f32 %v3312, 0.0
        %v3345 = vmax.f32 %v3313, 0.0
        %v3346 = vmax.f32 %v3314, 0.0
        %v3347 = vmax.f32 %v3315, 0.0
        %3348 = vmatprep.subr.mxu0 %v3317
        %3349 = vmatpush1.msra.mxu0 %v3316
        %3350 = vmatprep.subr.mxu0 %v3319
        %3351 = vmatpush1.msra.mxu0 %v3318
        %3352 = vmatprep.subr.mxu0 %v3321
        %3353 = vmatpush1.msra.mxu0 %v3320
        %3354 = vmatprep.subr.mxu0 %v3323
        %3355 = vmatpush1.msra.mxu0 %v3322
        %3356 = vmatprep.subr.mxu0 %v3325
        %3357 = vmatpush1.msra.mxu0 %v3324
        %3358 = vmatprep.subr.mxu0 %v3327
        %3359 = vmatpush1.msra.mxu0 %v3326
        %3360 = vmatprep.subr.mxu0 %v3329
        %3361 = vmatpush1.msra.mxu0 %v3328
        %3362 = vmatprep.subr.mxu0 %v3331
        %3363 = vmatpush1.msra.mxu0 %v3330
        %3364 = vmatprep.subr.mxu0 %v3333
        %3365 = vmatpush1.msra.mxu0 %v3332
        %3366 = vmatprep.subr.mxu0 %v3335
        %3367 = vmatpush1.msra.mxu0 %v3334
        %3368 = vmatprep.subr.mxu0 %v3337
        %3369 = vmatpush1.msra.mxu0 %v3336
        %3370 = vmatprep.subr.mxu0 %v3339
        %3371 = vmatpush1.msra.mxu0 %v3338
        %3372 = vmatprep.subr.mxu0 %v3341
        %3373 = vmatpush1.msra.mxu0 %v3340
        %3374 = vmatprep.subr.mxu0 %v3343
        %3375 = vmatpush1.msra.mxu0 %v3342
        %3376 = vmatprep.subr.mxu0 %v3345
        %3377 = vmatpush1.msra.mxu0 %v3344
        %3378 = vmatprep.subr.mxu0 %v3347
        %3379 = vmatpush1.msra.mxu0 %v3346
        %3380 = vmatprep.subr.mxu0 0.0
        %3381 = vmatpush1.msra.mxu0 0.0
        %3382 = vmatprep.subr.mxu0 0.0
        %3383 = vmatpush1.msra.mxu0 0.0
        %3384 = vmatprep.subr.mxu0 0.0
        %3385 = vmatpush1.msra.mxu0 0.0
        %3386 = vmatprep.subr.mxu0 0.0
        %3387 = vmatpush1.msra.mxu0 0.0
        %3388 = vmatprep.subr.mxu0 0.0
        %3389 = vmatpush1.msra.mxu0 0.0
        %3390 = vmatprep.subr.mxu0 0.0
        %3391 = vmatpush1.msra.mxu0 0.0
        %3392 = vmatprep.subr.mxu0 0.0
        %3393 = vmatpush1.msra.mxu0 0.0
        %3394 = vmatprep.subr.mxu0 0.0
        %3395 = vmatpush1.msra.mxu0 0.0
        %3396 = vmatprep.subr.mxu0 0.0
        %3397 = vmatpush1.msra.mxu0 0.0
        %3398 = vmatprep.subr.mxu0 0.0
        %3399 = vmatpush1.msra.mxu0 0.0
        %3400 = vmatprep.subr.mxu0 0.0
        %3401 = vmatpush1.msra.mxu0 0.0
        %3402 = vmatprep.subr.mxu0 0.0
        %3403 = vmatpush1.msra.mxu0 0.0
        %3404 = vmatprep.subr.mxu0 0.0
        %3405 = vmatpush1.msra.mxu0 0.0
        %3406 = vmatprep.subr.mxu0 0.0
        %3407 = vmatpush1.msra.mxu0 0.0
        %3408 = vmatprep.subr.mxu0 0.0
        %3409 = vmatpush1.msra.mxu0 0.0
        %3410 = vmatprep.subr.mxu0 0.0
        %3411 = vmatpush1.msra.mxu0 0.0
        %3412 = vmatprep.mubr.f32.mxu0 0.0
        %3413 = vmatmul.mubr.f32.gmra.mrb[0].mxu0 %v266
        %v3414 = vpop.f32.mrb[0].mxu0
        %v3415 = vadd.f32 0.0, %v3414
        %v3416 = vpop.f32.mrb[0].mxu0
        %v3417 = vadd.f32 0.0, %v3416
        %3418 = vdwg.mxu0
        %v3419 = vpack.c.bf16 %v3415, %v3415
        %v3420 = vpack.c.bf16 %v3417, %v3417
        %s3421 = scalar_lea.vmem %s4, 384
        %v3422 = vld [vmem:[%s3421] sm:$0xf]
        %v3423 = vld [vmem:[%s3421 + $0x4] sm:$0xf]
        %v3424 = vld [vmem:[%s3421 + $0x8] sm:$0xf]
        %v3425 = vld [vmem:[%s3421 + $0xc] sm:$0xf]
        %v3426 = vld [vmem:[%s3421 + $0x10] sm:$0xf]
        %v3427 = vld [vmem:[%s3421 + $0x14] sm:$0xf]
        %v3428 = vld [vmem:[%s3421 + $0x18] sm:$0xf]
        %v3429 = vld [vmem:[%s3421 + $0x1c] sm:$0xf]
        %v3430 = vld [vmem:[%s3421 + $0x20] sm:$0xf]
        %v3431 = vld [vmem:[%s3421 + $0x24] sm:$0xf]
        %v3432 = vld [vmem:[%s3421 + $0x28] sm:$0xf]
        %v3433 = vld [vmem:[%s3421 + $0x2c] sm:$0xf]
        %v3434 = vld [vmem:[%s3421 + $0x30] sm:$0xf]
        %v3435 = vld [vmem:[%s3421 + $0x34] sm:$0xf]
        %v3436 = vld [vmem:[%s3421 + $0x38] sm:$0xf]
        %v3437 = vld [vmem:[%s3421 + $0x3c] sm:$0xf]
        %v3438 = vld [vmem:[%s3421 + $0x40] sm:$0xf]
        %v3439 = vld [vmem:[%s3421 + $0x44] sm:$0xf]
        %v3440 = vld [vmem:[%s3421 + $0x48] sm:$0xf]
        %v3441 = vld [vmem:[%s3421 + $0x4c] sm:$0xf]
        %v3442 = vld [vmem:[%s3421 + $0x50] sm:$0xf]
        %v3443 = vld [vmem:[%s3421 + $0x54] sm:$0xf]
        %v3444 = vld [vmem:[%s3421 + $0x58] sm:$0xf]
        %v3445 = vld [vmem:[%s3421 + $0x5c] sm:$0xf]
        %v3470 = vunpack.c.l.b16 %v3422
        %v3471 = vunpack.c.l.b16 %v3423
        %v3472 = vunpack.c.l.b16 %v3424
        %v3473 = vunpack.c.l.b16 %v3425
        %v3474 = vunpack.c.l.b16 %v3426
        %v3475 = vunpack.c.l.b16 %v3427
        %v3476 = vunpack.c.l.b16 %v3428
        %v3477 = vunpack.c.l.b16 %v3429
        %v3478 = vunpack.c.l.b16 %v3430
        %v3479 = vunpack.c.l.b16 %v3431
        %v3480 = vunpack.c.l.b16 %v3432
        %v3481 = vunpack.c.l.b16 %v3433
        %v3482 = vunpack.c.l.b16 %v3434
        %v3483 = vunpack.c.l.b16 %v3435
        %v3484 = vunpack.c.l.b16 %v3436
        %v3485 = vunpack.c.l.b16 %v3437
        %v3486 = vunpack.c.l.b16 %v3438
        %v3487 = vunpack.c.l.b16 %v3439
        %v3488 = vunpack.c.l.b16 %v3440
        %v3489 = vunpack.c.l.b16 %v3441
        %v3490 = vunpack.c.l.b16 %v3442
        %v3491 = vunpack.c.l.b16 %v3443
        %v3492 = vunpack.c.l.b16 %v3444
        %v3493 = vunpack.c.l.b16 %v3445
        %v3494 = vpack.c.b16 %v3471, %v3470
        %v3495 = vpack.c.b16 %v3473, %v3472
        %v3496 = vpack.c.b16 %v3475, %v3474
        %v3497 = vpack.c.b16 %v3477, %v3476
        %v3498 = vpack.c.b16 %v3479, %v3478
        %v3499 = vpack.c.b16 %v3481, %v3480
        %v3500 = vpack.c.b16 %v3483, %v3482
        %v3501 = vpack.c.b16 %v3485, %v3484
        %v3502 = vpack.c.b16 %v3487, %v3486
        %v3503 = vpack.c.b16 %v3489, %v3488
        %v3504 = vpack.c.b16 %v3491, %v3490
        %v3505 = vpack.c.b16 %v3493, %v3492
        %v3519 = vsel %vm1456, %v3420, 0
        %3521 = vmatprep.subr.bf16.mxu0 0
        %3522 = vmatpush1.bf16.msra.mxu0 %v3494
        %3523 = vmatprep.subr.bf16.mxu0 0
        %3524 = vmatpush1.bf16.msra.mxu0 %v3495
        %3525 = vmatprep.subr.bf16.mxu0 0
        %3526 = vmatpush1.bf16.msra.mxu0 %v3496
        %3527 = vmatprep.subr.bf16.mxu0 0
        %3528 = vmatpush1.bf16.msra.mxu0 %v3497
        %3529 = vmatprep.subr.bf16.mxu0 0
        %3530 = vmatpush1.bf16.msra.mxu0 %v3498
        %3531 = vmatprep.subr.bf16.mxu0 0
        %3532 = vmatpush1.bf16.msra.mxu0 %v3499
        %3533 = vmatprep.subr.bf16.mxu0 0
        %3534 = vmatpush1.bf16.msra.mxu0 %v3500
        %3535 = vmatprep.subr.bf16.mxu0 0
        %3536 = vmatpush1.bf16.msra.mxu0 %v3501
        %3537 = vmatprep.subr.bf16.mxu0 0
        %3538 = vmatpush1.bf16.msra.mxu0 %v3502
        %3539 = vmatprep.subr.bf16.mxu0 0
        %3540 = vmatpush1.bf16.msra.mxu0 %v3503
        %3541 = vmatprep.subr.bf16.mxu0 0
        %3542 = vmatpush1.bf16.msra.mxu0 %v3504
        %3543 = vmatprep.subr.bf16.mxu0 0
        %3544 = vmatpush1.bf16.msra.mxu0 %v3505
        %3545 = vmatprep.subr.bf16.mxu0 0
        %3546 = vmatpush1.bf16.msra.mxu0 0
        %3547 = vmatprep.subr.bf16.mxu0 0
        %3548 = vmatpush1.bf16.msra.mxu0 0
        %3549 = vmatprep.subr.bf16.mxu0 0
        %3550 = vmatpush1.bf16.msra.mxu0 0
        %3551 = vmatprep.subr.bf16.mxu0 0
        %3552 = vmatpush1.bf16.msra.mxu0 0
        %3553 = vmatprep.mubr.bf16.mxu0 %v3519
        %3554 = vmatmul.mubr.bf16.gmra.mrb[0].mxu0 %v3419
        %v3555 = vpop.f32.mrb[0].mxu0
        %v3556 = vadd.f32 0.0, %v3555
        %v3557 = vpop.f32.mrb[0].mxu0
        %v3558 = vpop.f32.mrb[0].mxu0
        %v3559 = vpop.f32.mrb[0].mxu0
        %3560 = vdwg.mxu0
        %v3561 = vadd.f32 %v2912, %v3556
        %s3562 = scalar_lea.vmem %s253, 80
        %v3563 = vld [vmem:[%s3562] sm:$0xff]
        %v3564 = vld [vmem:[%s3562 + $0x8] sm:$0xff]
        %v3565 = vld [vmem:[%s3562 + $0x60] sm:$0xff]
        %v3566 = vld [vmem:[%s3562 + $0x68] sm:$0xff]
        %v3567 = vld [vmem:[%s3562 + $0xc0] sm:$0xff]
        %v3568 = vld [vmem:[%s3562 + $0xc8] sm:$0xff]
        %v3569 = vld [vmem:[%s3562 + $0x120] sm:$0xff]
        %v3570 = vld [vmem:[%s3562 + $0x128] sm:$0xff]
        %v3571 = vld [vmem:[%s3562 + $0x180] sm:$0xff]
        %v3572 = vld [vmem:[%s3562 + $0x188] sm:$0xff]
        %v3573 = vld [vmem:[%s3562 + $0x1e0] sm:$0xff]
        %v3574 = vld [vmem:[%s3562 + $0x1e8] sm:$0xff]
        %v3575 = vld [vmem:[%s3562 + $0x240] sm:$0xff]
        %v3576 = vld [vmem:[%s3562 + $0x248] sm:$0xff]
        %v3577 = vld [vmem:[%s3562 + $0x2a0] sm:$0xff]
        %v3578 = vld [vmem:[%s3562 + $0x2a8] sm:$0xff]
        %v3579 = vpack.c.bf16 %v3564, %v3563
        %v3580 = vpack.c.bf16 %v3566, %v3565
        %v3581 = vpack.c.bf16 %v3568, %v3567
        %v3582 = vpack.c.bf16 %v3570, %v3569
        %v3583 = vpack.c.bf16 %v3572, %v3571
        %v3584 = vpack.c.bf16 %v3574, %v3573
        %v3585 = vpack.c.bf16 %v3576, %v3575
        %v3586 = vpack.c.bf16 %v3578, %v3577
        %v3588 = vsel %vm292, %v3579, 0
        %v3591 = vsel %vm292, %v3580, 0
        %v3594 = vsel %vm292, %v3581, 0
        %v3597 = vsel %vm292, %v3582, 0
        %v3600 = vsel %vm292, %v3583, 0
        %v3603 = vsel %vm292, %v3584, 0
        %v3606 = vsel %vm292, %v3585, 0
        %v3609 = vsel %vm292, %v3586, 0
        %3611 = vmatprep.subr.bf16.mxu0 0
        %3612 = vmatpush1.bf16.msra.mxu0 %v319
        %3613 = vmatprep.subr.bf16.mxu0 0
        %3614 = vmatpush1.bf16.msra.mxu0 0
        %3615 = vmatprep.subr.bf16.mxu0 0
        %3616 = vmatpush1.bf16.msra.mxu0 0
        %3617 = vmatprep.subr.bf16.mxu0 0
        %3618 = vmatpush1.bf16.msra.mxu0 0
        %3619 = vmatprep.subr.bf16.mxu0 0
        %3620 = vmatpush1.bf16.msra.mxu0 0
        %3621 = vmatprep.subr.bf16.mxu0 0
        %3622 = vmatpush1.bf16.msra.mxu0 0
        %3623 = vmatprep.subr.bf16.mxu0 0
        %3624 = vmatpush1.bf16.msra.mxu0 0
        %3625 = vmatprep.subr.bf16.mxu0 0
        %3626 = vmatpush1.bf16.msra.mxu0 0
        %3627 = vmatprep.subr.bf16.mxu0 0
        %3628 = vmatpush1.bf16.msra.mxu0 0
        %3629 = vmatprep.subr.bf16.mxu0 0
        %3630 = vmatpush1.bf16.msra.mxu0 0
        %3631 = vmatprep.subr.bf16.mxu0 0
        %3632 = vmatpush1.bf16.msra.mxu0 0
        %3633 = vmatprep.subr.bf16.mxu0 0
        %3634 = vmatpush1.bf16.msra.mxu0 0
        %3635 = vmatprep.subr.bf16.mxu0 0
        %3636 = vmatpush1.bf16.msra.mxu0 0
        %3637 = vmatprep.subr.bf16.mxu0 0
        %3638 = vmatpush1.bf16.msra.mxu0 0
        %3639 = vmatprep.subr.bf16.mxu0 0
        %3640 = vmatpush1.bf16.msra.mxu0 0
        %3641 = vmatprep.subr.bf16.mxu0 0
        %3642 = vmatpush1.bf16.msra.mxu0 0
        %3643 = vmatprep.mubr.bf16.mxu0 0
        %3644 = vmatmul.mubr.bf16.gmra.mrb[0].mxu0 %v3588
        %v3645 = vpop.f32.mrb[0].mxu0
        %v3646 = vadd.f32 0.0, %v3645
        %v3647 = vpop.f32.mrb[0].mxu0
        %v3648 = vpop.f32.mrb[0].mxu0
        %v3649 = vadd.f32 0.0, %v3648
        %v3650 = vpop.f32.mrb[0].mxu0
        %3651 = vmatprep.mubr.bf16.mxu0 0
        %3652 = vmatmul.mubr.bf16.gmra.mrb[0].mxu0 %v3591
        %v3653 = vpop.f32.mrb[0].mxu0
        %v3654 = vadd.f32 0.0, %v3653
        %v3655 = vpop.f32.mrb[0].mxu0
        %v3656 = vpop.f32.mrb[0].mxu0
        %v3657 = vadd.f32 0.0, %v3656
        %v3658 = vpop.f32.mrb[0].mxu0
        %3659 = vmatprep.mubr.bf16.mxu0 0
        %3660 = vmatmul.mubr.bf16.gmra.mrb[0].mxu0 %v3594
        %v3661 = vpop.f32.mrb[0].mxu0
        %v3662 = vadd.f32 0.0, %v3661
        %v3663 = vpop.f32.mrb[0].mxu0
        %v3664 = vpop.f32.mrb[0].mxu0
        %v3665 = vadd.f32 0.0, %v3664
        %v3666 = vpop.f32.mrb[0].mxu0
        %3667 = vmatprep.mubr.bf16.mxu0 0
        %3668 = vmatmul.mubr.bf16.gmra.mrb[0].mxu0 %v3597
        %v3669 = vpop.f32.mrb[0].mxu0
        %v3670 = vadd.f32 0.0, %v3669
        %v3671 = vpop.f32.mrb[0].mxu0
        %v3672 = vpop.f32.mrb[0].mxu0
        %v3673 = vadd.f32 0.0, %v3672
        %v3674 = vpop.f32.mrb[0].mxu0
        %3675 = vmatprep.mubr.bf16.mxu0 0
        %3676 = vmatmul.mubr.bf16.gmra.mrb[0].mxu0 %v3600
        %v3677 = vpop.f32.mrb[0].mxu0
        %v3678 = vadd.f32 0.0, %v3677
        %v3679 = vpop.f32.mrb[0].mxu0
        %v3680 = vpop.f32.mrb[0].mxu0
        %v3681 = vadd.f32 0.0, %v3680
        %v3682 = vpop.f32.mrb[0].mxu0
        %3683 = vmatprep.mubr.bf16.mxu0 0
        %3684 = vmatmul.mubr.bf16.gmra.mrb[0].mxu0 %v3603
        %v3685 = vpop.f32.mrb[0].mxu0
        %v3686 = vadd.f32 0.0, %v3685
        %v3687 = vpop.f32.mrb[0].mxu0
        %v3688 = vpop.f32.mrb[0].mxu0
        %v3689 = vadd.f32 0.0, %v3688
        %v3690 = vpop.f32.mrb[0].mxu0
        %3691 = vmatprep.mubr.bf16.mxu0 0
        %3692 = vmatmul.mubr.bf16.gmra.mrb[0].mxu0 %v3606
        %v3693 = vpop.f32.mrb[0].mxu0
        %v3694 = vadd.f32 0.0, %v3693
        %v3695 = vpop.f32.mrb[0].mxu0
        %v3696 = vpop.f32.mrb[0].mxu0
        %v3697 = vadd.f32 0.0, %v3696
        %v3698 = vpop.f32.mrb[0].mxu0
        %3699 = vmatprep.mubr.bf16.mxu0 0
        %3700 = vmatmul.mubr.bf16.gmra.mrb[0].mxu0 %v3609
        %v3701 = vpop.f32.mrb[0].mxu0
        %v3702 = vadd.f32 0.0, %v3701
        %v3703 = vpop.f32.mrb[0].mxu0
        %v3704 = vpop.f32.mrb[0].mxu0
        %v3705 = vadd.f32 0.0, %v3704
        %v3706 = vpop.f32.mrb[0].mxu0
        %3707 = vdwg.mxu0
        %v3708 = vmul.f32 %v3646, %v256
        %v3709 = vmul.f32 %v3649, %v256
        %v3710 = vmul.f32 %v3654, %v256
        %v3711 = vmul.f32 %v3657, %v256
        %v3712 = vmul.f32 %v3662, %v256
        %v3713 = vmul.f32 %v3665, %v256
        %v3714 = vmul.f32 %v3670, %v256
        %v3715 = vmul.f32 %v3673, %v256
        %v3716 = vmul.f32 %v3678, %v256
        %v3717 = vmul.f32 %v3681, %v256
        %v3718 = vmul.f32 %v3686, %v256
        %v3719 = vmul.f32 %v3689, %v256
        %v3720 = vmul.f32 %v3694, %v256
        %v3721 = vmul.f32 %v3697, %v256
        %v3722 = vmul.f32 %v3702, %v256
        %v3723 = vmul.f32 %v3705, %v256
        %v3724 = vadd.f32 %v3708, %v257
        %v3725 = vadd.f32 %v3709, %v257
        %v3726 = vadd.f32 %v3710, %v257
        %v3727 = vadd.f32 %v3711, %v257
        %v3728 = vadd.f32 %v3712, %v257
        %v3729 = vadd.f32 %v3713, %v257
        %v3730 = vadd.f32 %v3714, %v257
        %v3731 = vadd.f32 %v3715, %v257
        %v3732 = vadd.f32 %v3716, %v257
        %v3733 = vadd.f32 %v3717, %v257
        %v3734 = vadd.f32 %v3718, %v257
        %v3735 = vadd.f32 %v3719, %v257
        %v3736 = vadd.f32 %v3720, %v257
        %v3737 = vadd.f32 %v3721, %v257
        %v3738 = vadd.f32 %v3722, %v257
        %v3739 = vadd.f32 %v3723, %v257
        %v3740 = vmax.f32 %v3724, 0.0
        %v3741 = vmax.f32 %v3725, 0.0
        %v3742 = vmax.f32 %v3726, 0.0
        %v3743 = vmax.f32 %v3727, 0.0
        %v3744 = vmax.f32 %v3728, 0.0
        %v3745 = vmax.f32 %v3729, 0.0
        %v3746 = vmax.f32 %v3730, 0.0
        %v3747 = vmax.f32 %v3731, 0.0
        %v3748 = vmax.f32 %v3732, 0.0
        %v3749 = vmax.f32 %v3733, 0.0
        %v3750 = vmax.f32 %v3734, 0.0
        %v3751 = vmax.f32 %v3735, 0.0
        %v3752 = vmax.f32 %v3736, 0.0
        %v3753 = vmax.f32 %v3737, 0.0
        %v3754 = vmax.f32 %v3738, 0.0
        %v3755 = vmax.f32 %v3739, 0.0
        %v3756 = vpack.c.bf16 %v3741, %v3740
        %v3757 = vpack.c.bf16 %v3743, %v3742
        %v3758 = vpack.c.bf16 %v3745, %v3744
        %v3759 = vpack.c.bf16 %v3747, %v3746
        %v3760 = vpack.c.bf16 %v3749, %v3748
        %v3761 = vpack.c.bf16 %v3751, %v3750
        %v3762 = vpack.c.bf16 %v3753, %v3752
        %v3763 = vpack.c.bf16 %v3755, %v3754
        %v3765 = vsel %vm498, %v3756, 0
        %v3768 = vsel %vm498, %v3757, 0
        %v3771 = vsel %vm498, %v3758, 0
        %v3774 = vsel %vm498, %v3759, 0
        %v3777 = vsel %vm498, %v3760, 0
        %v3780 = vsel %vm498, %v3761, 0
        %v3783 = vsel %vm498, %v3762, 0
        %v3786 = vsel %vm498, %v3763, 0
        %3788 = vmatprep.subr.bf16.mxu0 %v491
        %3789 = vmatpush1.bf16.msra.mxu0 %v490
        %3790 = vmatprep.subr.bf16.mxu0 %v493
        %3791 = vmatpush1.bf16.msra.mxu0 %v492
        %3792 = vmatprep.subr.bf16.mxu0 0
        %3793 = vmatpush1.bf16.msra.mxu0 0
        %3794 = vmatprep.subr.bf16.mxu0 0
        %3795 = vmatpush1.bf16.msra.mxu0 0
        %3796 = vmatprep.subr.bf16.mxu0 0
        %3797 = vmatpush1.bf16.msra.mxu0 0
        %3798 = vmatprep.subr.bf16.mxu0 0
        %3799 = vmatpush1.bf16.msra.mxu0 0
        %3800 = vmatprep.subr.bf16.mxu0 0
        %3801 = vmatpush1.bf16.msra.mxu0 0
        %3802 = vmatprep.subr.bf16.mxu0 0
        %3803 = vmatpush1.bf16.msra.mxu0 0
        %3804 = vmatprep.subr.bf16.mxu0 0
        %3805 = vmatpush1.bf16.msra.mxu0 0
        %3806 = vmatprep.subr.bf16.mxu0 0
        %3807 = vmatpush1.bf16.msra.mxu0 0
        %3808 = vmatprep.subr.bf16.mxu0 0
        %3809 = vmatpush1.bf16.msra.mxu0 0
        %3810 = vmatprep.subr.bf16.mxu0 0
        %3811 = vmatpush1.bf16.msra.mxu0 0
        %3812 = vmatprep.subr.bf16.mxu0 0
        %3813 = vmatpush1.bf16.msra.mxu0 0
        %3814 = vmatprep.subr.bf16.mxu0 0
        %3815 = vmatpush1.bf16.msra.mxu0 0
        %3816 = vmatprep.subr.bf16.mxu0 0
        %3817 = vmatpush1.bf16.msra.mxu0 0
        %3818 = vmatprep.subr.bf16.mxu0 0
        %3819 = vmatpush1.bf16.msra.mxu0 0
        %3820 = vmatprep.mubr.bf16.mxu0 0
        %3821 = vmatmul.mubr.bf16.gmra.mrb[0].mxu0 %v3765
        %v3822 = vpop.f32.mrb[0].mxu0
        %v3823 = vadd.f32 0.0, %v3822
        %v3824 = vpop.f32.mrb[0].mxu0
        %v3825 = vadd.f32 0.0, %v3824
        %v3826 = vpop.f32.mrb[0].mxu0
        %v3827 = vadd.f32 0.0, %v3826
        %v3828 = vpop.f32.mrb[0].mxu0
        %v3829 = vadd.f32 0.0, %v3828
        %3830 = vmatprep.mubr.bf16.mxu0 0
        %3831 = vmatmul.mubr.bf16.gmra.mrb[0].mxu0 %v3768
        %v3832 = vpop.f32.mrb[0].mxu0
        %v3833 = vadd.f32 0.0, %v3832
        %v3834 = vpop.f32.mrb[0].mxu0
        %v3835 = vadd.f32 0.0, %v3834
        %v3836 = vpop.f32.mrb[0].mxu0
        %v3837 = vadd.f32 0.0, %v3836
        %v3838 = vpop.f32.mrb[0].mxu0
        %v3839 = vadd.f32 0.0, %v3838
        %3840 = vmatprep.mubr.bf16.mxu0 0
        %3841 = vmatmul.mubr.bf16.gmra.mrb[0].mxu0 %v3771
        %v3842 = vpop.f32.mrb[0].mxu0
        %v3843 = vadd.f32 0.0, %v3842
        %v3844 = vpop.f32.mrb[0].mxu0
        %v3845 = vadd.f32 0.0, %v3844
        %v3846 = vpop.f32.mrb[0].mxu0
        %v3847 = vadd.f32 0.0, %v3846
        %v3848 = vpop.f32.mrb[0].mxu0
        %v3849 = vadd.f32 0.0, %v3848
        %3850 = vmatprep.mubr.bf16.mxu0 0
        %3851 = vmatmul.mubr.bf16.gmra.mrb[0].mxu0 %v3774
        %v3852 = vpop.f32.mrb[0].mxu0
        %v3853 = vadd.f32 0.0, %v3852
        %v3854 = vpop.f32.mrb[0].mxu0
        %v3855 = vadd.f32 0.0, %v3854
        %v3856 = vpop.f32.mrb[0].mxu0
        %v3857 = vadd.f32 0.0, %v3856
        %v3858 = vpop.f32.mrb[0].mxu0
        %v3859 = vadd.f32 0.0, %v3858
        %3860 = vmatprep.mubr.bf16.mxu0 0
        %3861 = vmatmul.mubr.bf16.gmra.mrb[0].mxu0 %v3777
        %v3862 = vpop.f32.mrb[0].mxu0
        %v3863 = vadd.f32 0.0, %v3862
        %v3864 = vpop.f32.mrb[0].mxu0
        %v3865 = vadd.f32 0.0, %v3864
        %v3866 = vpop.f32.mrb[0].mxu0
        %v3867 = vadd.f32 0.0, %v3866
        %v3868 = vpop.f32.mrb[0].mxu0
        %v3869 = vadd.f32 0.0, %v3868
        %3870 = vmatprep.mubr.bf16.mxu0 0
        %3871 = vmatmul.mubr.bf16.gmra.mrb[0].mxu0 %v3780
        %v3872 = vpop.f32.mrb[0].mxu0
        %v3873 = vadd.f32 0.0, %v3872
        %v3874 = vpop.f32.mrb[0].mxu0
        %v3875 = vadd.f32 0.0, %v3874
        %v3876 = vpop.f32.mrb[0].mxu0
        %v3877 = vadd.f32 0.0, %v3876
        %v3878 = vpop.f32.mrb[0].mxu0
        %v3879 = vadd.f32 0.0, %v3878
        %3880 = vmatprep.mubr.bf16.mxu0 0
        %3881 = vmatmul.mubr.bf16.gmra.mrb[0].mxu0 %v3783
        %v3882 = vpop.f32.mrb[0].mxu0
        %v3883 = vadd.f32 0.0, %v3882
        %v3884 = vpop.f32.mrb[0].mxu0
        %v3885 = vadd.f32 0.0, %v3884
        %v3886 = vpop.f32.mrb[0].mxu0
        %v3887 = vadd.f32 0.0, %v3886
        %v3888 = vpop.f32.mrb[0].mxu0
        %v3889 = vadd.f32 0.0, %v3888
        %3890 = vmatprep.mubr.bf16.mxu0 0
        %3891 = vmatmul.mubr.bf16.gmra.mrb[0].mxu0 %v3786
        %v3892 = vpop.f32.mrb[0].mxu0
        %v3893 = vadd.f32 0.0, %v3892
        %v3894 = vpop.f32.mrb[0].mxu0
        %v3895 = vadd.f32 0.0, %v3894
        %v3896 = vpop.f32.mrb[0].mxu0
        %v3897 = vadd.f32 0.0, %v3896
        %v3898 = vpop.f32.mrb[0].mxu0
        %v3899 = vadd.f32 0.0, %v3898
        %3900 = vdwg.mxu0
        %v3901 = vmul.f32 %v3823, %v640
        %v3902 = vmul.f32 %v3825, %v644
        %v3903 = vmul.f32 %v3827, %v640
        %v3904 = vmul.f32 %v3829, %v644
        %v3905 = vmul.f32 %v3833, %v640
        %v3906 = vmul.f32 %v3835, %v644
        %v3907 = vmul.f32 %v3837, %v640
        %v3908 = vmul.f32 %v3839, %v644
        %v3909 = vmul.f32 %v3843, %v640
        %v3910 = vmul.f32 %v3845, %v644
        %v3911 = vmul.f32 %v3847, %v640
        %v3912 = vmul.f32 %v3849, %v644
        %v3913 = vmul.f32 %v3853, %v640
        %v3914 = vmul.f32 %v3855, %v644
        %v3915 = vmul.f32 %v3857, %v640
        %v3916 = vmul.f32 %v3859, %v644
        %v3917 = vmul.f32 %v3863, %v640
        %v3918 = vmul.f32 %v3865, %v644
        %v3919 = vmul.f32 %v3867, %v640
        %v3920 = vmul.f32 %v3869, %v644
        %v3921 = vmul.f32 %v3873, %v640
        %v3922 = vmul.f32 %v3875, %v644
        %v3923 = vmul.f32 %v3877, %v640
        %v3924 = vmul.f32 %v3879, %v644
        %v3925 = vmul.f32 %v3883, %v640
        %v3926 = vmul.f32 %v3885, %v644
        %v3927 = vmul.f32 %v3887, %v640
        %v3928 = vmul.f32 %v3889, %v644
        %v3929 = vmul.f32 %v3893, %v640
        %v3930 = vmul.f32 %v3895, %v644
        %v3931 = vmul.f32 %v3897, %v640
        %v3932 = vmul.f32 %v3899, %v644
        %v3933 = vadd.f32 %v3901, %v683
        %v3934 = vadd.f32 %v3902, %v687
        %v3935 = vadd.f32 %v3903, %v683
        %v3936 = vadd.f32 %v3904, %v687
        %v3937 = vadd.f32 %v3905, %v683
        %v3938 = vadd.f32 %v3906, %v687
        %v3939 = vadd.f32 %v3907, %v683
        %v3940 = vadd.f32 %v3908, %v687
        %v3941 = vadd.f32 %v3909, %v683
        %v3942 = vadd.f32 %v3910, %v687
        %v3943 = vadd.f32 %v3911, %v683
        %v3944 = vadd.f32 %v3912, %v687
        %v3945 = vadd.f32 %v3913, %v683
        %v3946 = vadd.f32 %v3914, %v687
        %v3947 = vadd.f32 %v3915, %v683
        %v3948 = vadd.f32 %v3916, %v687
        %v3949 = vadd.f32 %v3917, %v683
        %v3950 = vadd.f32 %v3918, %v687
        %v3951 = vadd.f32 %v3919, %v683
        %v3952 = vadd.f32 %v3920, %v687
        %v3953 = vadd.f32 %v3921, %v683
        %v3954 = vadd.f32 %v3922, %v687
        %v3955 = vadd.f32 %v3923, %v683
        %v3956 = vadd.f32 %v3924, %v687
        %v3957 = vadd.f32 %v3925, %v683
        %v3958 = vadd.f32 %v3926, %v687
        %v3959 = vadd.f32 %v3927, %v683
        %v3960 = vadd.f32 %v3928, %v687
        %v3961 = vadd.f32 %v3929, %v683
        %v3962 = vadd.f32 %v3930, %v687
        %v3963 = vadd.f32 %v3931, %v683
        %v3964 = vadd.f32 %v3932, %v687
        %v3965 = vmax.f32 %v3933, 0.0
        %v3966 = vmax.f32 %v3934, 0.0
        %v3967 = vmax.f32 %v3935, 0.0
        %v3968 = vmax.f32 %v3936, 0.0
        %v3969 = vmax.f32 %v3937, 0.0
        %v3970 = vmax.f32 %v3938, 0.0
        %v3971 = vmax.f32 %v3939, 0.0
        %v3972 = vmax.f32 %v3940, 0.0
        %v3973 = vmax.f32 %v3941, 0.0
        %v3974 = vmax.f32 %v3942, 0.0
        %v3975 = vmax.f32 %v3943, 0.0
        %v3976 = vmax.f32 %v3944, 0.0
        %v3977 = vmax.f32 %v3945, 0.0
        %v3978 = vmax.f32 %v3946, 0.0
        %v3979 = vmax.f32 %v3947, 0.0
        %v3980 = vmax.f32 %v3948, 0.0
        %v3981 = vmax.f32 %v3949, 0.0
        %v3982 = vmax.f32 %v3950, 0.0
        %v3983 = vmax.f32 %v3951, 0.0
        %v3984 = vmax.f32 %v3952, 0.0
        %v3985 = vmax.f32 %v3953, 0.0
        %v3986 = vmax.f32 %v3954, 0.0
        %v3987 = vmax.f32 %v3955, 0.0
        %v3988 = vmax.f32 %v3956, 0.0
        %v3989 = vmax.f32 %v3957, 0.0
        %v3990 = vmax.f32 %v3958, 0.0
        %v3991 = vmax.f32 %v3959, 0.0
        %v3992 = vmax.f32 %v3960, 0.0
        %v3993 = vmax.f32 %v3961, 0.0
        %v3994 = vmax.f32 %v3962, 0.0
        %v3995 = vmax.f32 %v3963, 0.0
        %v3996 = vmax.f32 %v3964, 0.0
        %3997 = vmatprep.subr.mxu0 %v3966
        %3998 = vmatpush1.msra.mxu0 %v3965
        %3999 = vmatprep.subr.mxu0 %v3968
        %4000 = vmatpush1.msra.mxu0 %v3967
        %4001 = vmatprep.subr.mxu0 %v3970
        %4002 = vmatpush1.msra.mxu0 %v3969
        %4003 = vmatprep.subr.mxu0 %v3972
        %4004 = vmatpush1.msra.mxu0 %v3971
        %4005 = vmatprep.subr.mxu0 %v3974
        %4006 = vmatpush1.msra.mxu0 %v3973
        %4007 = vmatprep.subr.mxu0 %v3976
        %4008 = vmatpush1.msra.mxu0 %v3975
        %4009 = vmatprep.subr.mxu0 %v3978
        %4010 = vmatpush1.msra.mxu0 %v3977
        %4011 = vmatprep.subr.mxu0 %v3980
        %4012 = vmatpush1.msra.mxu0 %v3979
        %4013 = vmatprep.subr.mxu0 %v3982
        %4014 = vmatpush1.msra.mxu0 %v3981
        %4015 = vmatprep.subr.mxu0 %v3984
        %4016 = vmatpush1.msra.mxu0 %v3983
        %4017 = vmatprep.subr.mxu0 %v3986
        %4018 = vmatpush1.msra.mxu0 %v3985
        %4019 = vmatprep.subr.mxu0 %v3988
        %4020 = vmatpush1.msra.mxu0 %v3987
        %4021 = vmatprep.subr.mxu0 %v3990
        %4022 = vmatpush1.msra.mxu0 %v3989
        %4023 = vmatprep.subr.mxu0 %v3992
        %4024 = vmatpush1.msra.mxu0 %v3991
        %4025 = vmatprep.subr.mxu0 %v3994
        %4026 = vmatpush1.msra.mxu0 %v3993
        %4027 = vmatprep.subr.mxu0 %v3996
        %4028 = vmatpush1.msra.mxu0 %v3995
        %4029 = vmatprep.subr.mxu0 0.0
        %4030 = vmatpush1.msra.mxu0 0.0
        %4031 = vmatprep.subr.mxu0 0.0
        %4032 = vmatpush1.msra.mxu0 0.0
        %4033 = vmatprep.subr.mxu0 0.0
        %4034 = vmatpush1.msra.mxu0 0.0
        %4035 = vmatprep.subr.mxu0 0.0
        %4036 = vmatpush1.msra.mxu0 0.0
        %4037 = vmatprep.subr.mxu0 0.0
        %4038 = vmatpush1.msra.mxu0 0.0
        %4039 = vmatprep.subr.mxu0 0.0
        %4040 = vmatpush1.msra.mxu0 0.0
        %4041 = vmatprep.subr.mxu0 0.0
        %4042 = vmatpush1.msra.mxu0 0.0
        %4043 = vmatprep.subr.mxu0 0.0
        %4044 = vmatpush1.msra.mxu0 0.0
        %4045 = vmatprep.subr.mxu0 0.0
        %4046 = vmatpush1.msra.mxu0 0.0
        %4047 = vmatprep.subr.mxu0 0.0
        %4048 = vmatpush1.msra.mxu0 0.0
        %4049 = vmatprep.subr.mxu0 0.0
        %4050 = vmatpush1.msra.mxu0 0.0
        %4051 = vmatprep.subr.mxu0 0.0
        %4052 = vmatpush1.msra.mxu0 0.0
        %4053 = vmatprep.subr.mxu0 0.0
        %4054 = vmatpush1.msra.mxu0 0.0
        %4055 = vmatprep.subr.mxu0 0.0
        %4056 = vmatpush1.msra.mxu0 0.0
        %4057 = vmatprep.subr.mxu0 0.0
        %4058 = vmatpush1.msra.mxu0 0.0
        %4059 = vmatprep.subr.mxu0 0.0
        %4060 = vmatpush1.msra.mxu0 0.0
        %4061 = vmatprep.mubr.f32.mxu0 0.0
        %4062 = vmatmul.mubr.f32.gmra.mrb[0].mxu0 %v266
        %v4063 = vpop.f32.mrb[0].mxu0
        %v4064 = vadd.f32 0.0, %v4063
        %v4065 = vpop.f32.mrb[0].mxu0
        %v4066 = vadd.f32 0.0, %v4065
        %4067 = vdwg.mxu0
        %v4068 = vpack.c.bf16 %v4064, %v4064
        %v4069 = vpack.c.bf16 %v4066, %v4066
        %s4070 = scalar_lea.vmem %s4, 480
        %v4071 = vld [vmem:[%s4070] sm:$0xf]
        %v4072 = vld [vmem:[%s4070 + $0x4] sm:$0xf]
        %v4073 = vld [vmem:[%s4070 + $0x8] sm:$0xf]
        %v4074 = vld [vmem:[%s4070 + $0xc] sm:$0xf]
        %v4075 = vld [vmem:[%s4070 + $0x10] sm:$0xf]
        %v4076 = vld [vmem:[%s4070 + $0x14] sm:$0xf]
        %v4077 = vld [vmem:[%s4070 + $0x18] sm:$0xf]
        %v4078 = vld [vmem:[%s4070 + $0x1c] sm:$0xf]
        %v4079 = vld [vmem:[%s4070 + $0x20] sm:$0xf]
        %v4080 = vld [vmem:[%s4070 + $0x24] sm:$0xf]
        %v4081 = vld [vmem:[%s4070 + $0x28] sm:$0xf]
        %v4082 = vld [vmem:[%s4070 + $0x2c] sm:$0xf]
        %v4083 = vld [vmem:[%s4070 + $0x30] sm:$0xf]
        %v4084 = vld [vmem:[%s4070 + $0x34] sm:$0xf]
        %v4085 = vld [vmem:[%s4070 + $0x38] sm:$0xf]
        %v4086 = vld [vmem:[%s4070 + $0x3c] sm:$0xf]
        %v4087 = vld [vmem:[%s4070 + $0x40] sm:$0xf]
        %v4088 = vld [vmem:[%s4070 + $0x44] sm:$0xf]
        %v4089 = vld [vmem:[%s4070 + $0x48] sm:$0xf]
        %v4090 = vld [vmem:[%s4070 + $0x4c] sm:$0xf]
        %v4091 = vld [vmem:[%s4070 + $0x50] sm:$0xf]
        %v4092 = vld [vmem:[%s4070 + $0x54] sm:$0xf]
        %v4093 = vld [vmem:[%s4070 + $0x58] sm:$0xf]
        %v4094 = vld [vmem:[%s4070 + $0x5c] sm:$0xf]
        %v4119 = vunpack.c.l.b16 %v4071
        %v4120 = vunpack.c.l.b16 %v4072
        %v4121 = vunpack.c.l.b16 %v4073
        %v4122 = vunpack.c.l.b16 %v4074
        %v4123 = vunpack.c.l.b16 %v4075
        %v4124 = vunpack.c.l.b16 %v4076
        %v4125 = vunpack.c.l.b16 %v4077
        %v4126 = vunpack.c.l.b16 %v4078
        %v4127 = vunpack.c.l.b16 %v4079
        %v4128 = vunpack.c.l.b16 %v4080
        %v4129 = vunpack.c.l.b16 %v4081
        %v4130 = vunpack.c.l.b16 %v4082
        %v4131 = vunpack.c.l.b16 %v4083
        %v4132 = vunpack.c.l.b16 %v4084
        %v4133 = vunpack.c.l.b16 %v4085
        %v4134 = vunpack.c.l.b16 %v4086
        %v4135 = vunpack.c.l.b16 %v4087
        %v4136 = vunpack.c.l.b16 %v4088
        %v4137 = vunpack.c.l.b16 %v4089
        %v4138 = vunpack.c.l.b16 %v4090
        %v4139 = vunpack.c.l.b16 %v4091
        %v4140 = vunpack.c.l.b16 %v4092
        %v4141 = vunpack.c.l.b16 %v4093
        %v4142 = vunpack.c.l.b16 %v4094
        %v4143 = vpack.c.b16 %v4120, %v4119
        %v4144 = vpack.c.b16 %v4122, %v4121
        %v4145 = vpack.c.b16 %v4124, %v4123
        %v4146 = vpack.c.b16 %v4126, %v4125
        %v4147 = vpack.c.b16 %v4128, %v4127
        %v4148 = vpack.c.b16 %v4130, %v4129
        %v4149 = vpack.c.b16 %v4132, %v4131
        %v4150 = vpack.c.b16 %v4134, %v4133
        %v4151 = vpack.c.b16 %v4136, %v4135
        %v4152 = vpack.c.b16 %v4138, %v4137
        %v4153 = vpack.c.b16 %v4140, %v4139
        %v4154 = vpack.c.b16 %v4142, %v4141
        %v4168 = vsel %vm1456, %v4069, 0
        %4170 = vmatprep.subr.bf16.mxu0 0
        %4171 = vmatpush1.bf16.msra.mxu0 %v4143
        %4172 = vmatprep.subr.bf16.mxu0 0
        %4173 = vmatpush1.bf16.msra.mxu0 %v4144
        %4174 = vmatprep.subr.bf16.mxu0 0
        %4175 = vmatpush1.bf16.msra.mxu0 %v4145
        %4176 = vmatprep.subr.bf16.mxu0 0
        %4177 = vmatpush1.bf16.msra.mxu0 %v4146
        %4178 = vmatprep.subr.bf16.mxu0 0
        %4179 = vmatpush1.bf16.msra.mxu0 %v4147
        %4180 = vmatprep.subr.bf16.mxu0 0
        %4181 = vmatpush1.bf16.msra.mxu0 %v4148
        %4182 = vmatprep.subr.bf16.mxu0 0
        %4183 = vmatpush1.bf16.msra.mxu0 %v4149
        %4184 = vmatprep.subr.bf16.mxu0 0
        %4185 = vmatpush1.bf16.msra.mxu0 %v4150
        %4186 = vmatprep.subr.bf16.mxu0 0
        %4187 = vmatpush1.bf16.msra.mxu0 %v4151
        %4188 = vmatprep.subr.bf16.mxu0 0
        %4189 = vmatpush1.bf16.msra.mxu0 %v4152
        %4190 = vmatprep.subr.bf16.mxu0 0
        %4191 = vmatpush1.bf16.msra.mxu0 %v4153
        %4192 = vmatprep.subr.bf16.mxu0 0
        %4193 = vmatpush1.bf16.msra.mxu0 %v4154
        %4194 = vmatprep.subr.bf16.mxu0 0
        %4195 = vmatpush1.bf16.msra.mxu0 0
        %4196 = vmatprep.subr.bf16.mxu0 0
        %4197 = vmatpush1.bf16.msra.mxu0 0
        %4198 = vmatprep.subr.bf16.mxu0 0
        %4199 = vmatpush1.bf16.msra.mxu0 0
        %4200 = vmatprep.subr.bf16.mxu0 0
        %4201 = vmatpush1.bf16.msra.mxu0 0
        %4202 = vmatprep.mubr.bf16.mxu0 %v4168
        %4203 = vmatmul.mubr.bf16.gmra.mrb[0].mxu0 %v4068
        %v4204 = vpop.f32.mrb[0].mxu0
        %v4205 = vadd.f32 0.0, %v4204
        %v4206 = vpop.f32.mrb[0].mxu0
        %v4207 = vpop.f32.mrb[0].mxu0
        %v4208 = vpop.f32.mrb[0].mxu0
        %4209 = vdwg.mxu0
        %v4210 = vadd.f32 %v3561, %v4205
        %v4211 = vmul.f32 %v4210, %v262
        %v4212 = vadd.f32 %v4211, %v263
        %v4213 = vmax.f32 %v4212, 0.0
        %v4214 = vmul.f32 %v4213, %v264
        %v4215 = vadd.f32 %v4214, %v265
        %4216 = vst [vmem:[%s247] sm:$0xff] %v4215
        %s4217 = sand.u32 %s159, 1
        %s4218 = scalar_lea.sflag [#allocation3], %s4217
        %s4219 = sand.u32 %s159, 1
        %s4220 = smul.addr %s4219, 8
        %s4221 = scalar_lea.vmem [#allocation2], %s4220
        // Predicated region
        $region45: #{mgn_inference.1} parent=43 // pred_check
          %p4222 = pneg %p169
        $region46: #{mgn_inference.1} parent=43 // pred_check_branch
          %4224 = sbr.rel (%p4222) target = $region48
        $region47: #{mgn_inference.1} parent=43 // pred_region
          %s4226 = ssub.s32 128, 128
          %4227 = vsyncadd %s4218, %s4226
          %s4228 = smul.addr %s20, 128
          %s4229 = scalar_lea.hbm %s6, %s4228
          %s4231 = sshll.u32 %s4221, 4
          %s4232 = int_to_ptr.vmem [resolvable:$true] %s4231
          %4234 = dma.vmem_to_hbm [thread:$0]  %s4232, 128, %s4229, %s4218
        $region48: #{mgn_inference.1} parent=43 // pred_fallthru
          _
      $region44: #{mgn_inference.1} parent=5 // pred_fallthru
        _
      %p4235 = scmp.le.s32.totalorder 2, %s15
      // Predicated region
      $region49: #{mgn_inference.1} parent=5 // pred_check
        %p4236 = pneg %p4235
      $region50: #{mgn_inference.1} parent=5 // pred_check_branch
        %4238 = sbr.rel (%p4236) target = $region52
      $region51: #{mgn_inference.1} parent=5 // pred_region
        %s4239 = ssub.s32 %s15, 2
        // Predicated region
        $region53: #{mgn_inference.1} parent=51 // pred_check
          %p4240 = pneg %p175
        $region54: #{mgn_inference.1} parent=51 // pred_check_branch
          %4242 = sbr.rel (%p4240) target = $region56
        $region55: #{mgn_inference.1} parent=51 // pred_region
          %s4243 = sand.u32 %s160, 1
          %s4244 = scalar_lea.sflag [#allocation3], %s4243
          %s4245 = sand.u32 %s160, 1
          %s4246 = smul.addr %s4245, 8
          %s4247 = scalar_lea.vmem [#allocation2], %s4246
          %4248 = dma.done %s4244, 128
        $region56: #{mgn_inference.1} parent=51 // pred_fallthru
          _
      $region52: #{mgn_inference.1} parent=5 // pred_fallthru
        _
    $region6: #{mgn_inference.1} parent=1 // loop_footer
      %s19 = sadd.s32 1, %s15
    $region7: #{mgn_inference.1} parent=1 // loop_footer_branch
      %14 = sbr.rel target = $region3
    $region8: #{mgn_inference.1} parent=1 // loop_exit
      _
    %4249 = vsyncpa [#allocation3], 1
    %s4250 = scalar_lea.sflag [#allocation3], 1
    %4251 = vsyncpa %s4250, 1

</llo_original>
